<compile_context>
chip_gen: v7x
topology: tpu7x:2x2x1
jax: 0.10.0
libtpu: 0.0.40
codegen_flags: <defaults>
</compile_context>

<pallas_src>
import math
import jax
import jax.numpy as jnp
from jax.experimental import pallas as pl
from jax.experimental.pallas import tpu as pltpu

_INV_SQRT2 = 1.0 / math.sqrt(2.0)


# ----------------------------------------------------------------------------- kernels

def _gelu_f32(h):
    # Exact (erf-based) GELU, matching PyTorch nn.GELU default, computed in f32.
    return 0.5 * h * (1.0 + jax.lax.erf(h * _INV_SQRT2))


def _ffn_fused_kernel(x_ref, w1_ref, b1_ref, w2_ref, b2_ref, o_ref):
    # Whole W1/W2 resident in VMEM; one grid axis over row tiles only.
    h = jnp.dot(x_ref[...], w1_ref[...], preferred_element_type=jnp.float32)
    h = _gelu_f32(h + b1_ref[...].astype(jnp.float32))
    out = jnp.dot(h.astype(w2_ref.dtype), w2_ref[...], preferred_element_type=jnp.float32)
    o_ref[...] = (out + b2_ref[...].astype(jnp.float32)).astype(o_ref.dtype)


def _ffn_stream_kernel_f32out(x_ref, w1_ref, b1_ref, w2_ref, b2_ref, o_ref):
    # Hidden streamed along grid axis 1; f32 output block is VMEM-resident across k, so we
    # accumulate directly into it (no scratch).  b2 is folded into the k==0 write.
    k = pl.program_id(1)

    h = jnp.dot(x_ref[...], w1_ref[...], preferred_element_type=jnp.float32)
    h = _gelu_f32(h + b1_ref[...].astype(jnp.float32))
    part = jnp.dot(h.astype(w2_ref.dtype), w2_ref[...], preferred_element_type=jnp.float32)

    @pl.when(k == 0)
    def _():
        o_ref[...] = part + b2_ref[...].astype(jnp.float32)

    @pl.when(k > 0)
    def _():
        o_ref[...] += part


def _ffn_stream_kernel_acc(x_ref, w1_ref, b1_ref, w2_ref, b2_ref, o_ref, acc_ref):
    # Same as above, but with an f32 scratch accumulator for non-f32 (e.g. bf16) outputs.
    k = pl.program_id(1)

    h = jnp.dot(x_ref[...], w1_ref[...], preferred_element_type=jnp.float32)
    h = _gelu_f32(h + b1_ref[...].astype(jnp.float32))
    part = jnp.dot(h.astype(w2_ref.dtype), w2_ref[...], preferred_element_type=jnp.float32)

    @pl.when(k == 0)
    def _():
        acc_ref[...] = part + b2_ref[...].astype(jnp.float32)

    @pl.when(k > 0)
    def _():
        acc_ref[...] += part

    @pl.when(k == pl.num_programs(1) - 1)
    def _():
        o_ref[...] = acc_ref[...].astype(o_ref.dtype)


# ----------------------------------------------------------------------------- helpers

def _round_up(a, b):
    return ((a + b - 1) // b) * b


def _largest_divisor_tile(total, cap, mult):
    # Largest t <= cap with t % mult == 0 and total % t == 0 (requires total % mult == 0).
    cap = max(mult, min(cap, total))
    t = (cap // mult) * mult
    while total % t != 0:
        t -= mult
    return t


def _vmem_budget_bytes():
    # Per-generation VMEM budget: ~75% of physical, capped at 112 MiB.
    # v5e/v6e (128 MiB) -> ~96 MiB; v7x (64 MiB) -> ~48 MiB.
    cap = None
    try:
        info = pltpu.get_tpu_info()
        for name in ("vmem_capacity_bytes", "vmem_size_bytes", "vmem_bytes"):
            v = getattr(info, name, None)
            if v:
                cap = int(v)
                break
    except Exception:
        cap = None
    if cap is None or cap <= 0:
        cap = 64 * 1024 * 1024  # conservative fallback (v7x physical)
    budget = min(int(cap * 0.75), 112 * 1024 * 1024)
    return max(budget, 32 * 1024 * 1024)


def _stream_vmem_bytes(tm, tk, dim, in_it, out_it, need_scratch):
    b = 2 * (tm * dim * in_it      # x row tile (double-buffered)
             + dim * tk * in_it    # W1 hidden slab
             + tk * in_it          # b1 slab
             + tk * dim * in_it    # W2 hidden slab
             + dim * in_it         # b2
             + tm * dim * out_it)  # output tile
    b += tm * tk * 4               # f32 GELU tile
    if need_scratch:
        b += tm * dim * 4
    return b


# ----------------------------------------------------------------------------- wrapper

def feedforward_pallas(x, w1, b1, w2, b2, *, tm=512, tk=1024, force_stream=False):
    """x: [B, N, dim]; w1: [dim, hidden]; b1: [hidden]; w2: [hidden, dim]; b2: [dim]."""
    B, N, dim = x.shape
    hidden = w1.shape[1]
    M = B * N
    out_dtype = x.dtype

    in_it = jnp.dtype(x.dtype).itemsize
    out_it = jnp.dtype(out_dtype).itemsize

    # TODO(synk): pad the feature dims upstream if they are not lane-dense.
    assert dim % 128 == 0 and hidden % 128 == 0, "dim/hidden must be multiples of 128"

    budget = _vmem_budget_bytes()

    # Row tile: sublane-aligned, never larger than the (padded) row count, and capped at ~rows/2
    # so the "parallel" row axis gives both v7x TensorCores work.
    row_mult = 16 if in_it < 4 else 8
    tm_eff = max(row_mult, (min(tm, _round_up(M, row_mult)) // row_mult) * row_mult)
    if M > row_mult:
        tm_eff = min(tm_eff, _round_up((M + 1) // 2, row_mult))

    weights_bytes = (dim * hidden + hidden * dim + hidden + dim) * in_it
    fused_bytes = (2 * (weights_bytes + tm_eff * dim * in_it + tm_eff * dim * out_it)
                   + tm_eff * hidden * 4)
    use_fused = (not force_stream) and fused_bytes <= int(0.7 * budget)

    tk_eff = None
    need_scratch = jnp.dtype(out_dtype) != jnp.dtype(jnp.float32)
    if not use_fused:
        tk_eff = _largest_divisor_tile(hidden, tk, 128)
        # Shrink hidden tile first, then row tile, until the streaming working set fits.
        while (_stream_vmem_bytes(tm_eff, tk_eff, dim, in_it, out_it, need_scratch)
               > int(0.7 * budget)):
            if tk_eff > 128:
                tk_eff = _largest_divisor_tile(hidden, tk_eff // 2, 128)
            elif tm_eff > row_mult:
                tm_eff = max(row_mult, ((tm_eff // 2) // row_mult) * row_mult)
            else:
                break

    x2d = x.reshape(M, dim)
    M_pad = _round_up(M, tm_eff)
    if M_pad != M:
        x2d = jnp.pad(x2d, ((0, M_pad - M), (0, 0)))
    n_row = M_pad // tm_eff

    b1_2d = b1.reshape(1, hidden)
    b2_2d = b2.reshape(1, dim)

    if use_fused:
        cost = pl.CostEstimate(
            flops=4 * M_pad * dim * hidden,
            transcendentals=M_pad * hidden,
            bytes_accessed=M_pad * dim * in_it + weights_bytes + M_pad * dim * out_it,
        )
        out = pl.pallas_call(
            _ffn_fused_kernel,
            out_shape=jax.ShapeDtypeStruct((M_pad, dim), out_dtype),
            grid_spec=pltpu.PrefetchScalarGridSpec(
                num_scalar_prefetch=0,
                grid=(n_row,),
                in_specs=[
                    pl.BlockSpec((tm_eff, dim), lambda i: (i, 0)),     # x row tile
                    pl.BlockSpec((dim, hidden), lambda i: (0, 0)),     # W1 (resident, DMA'd once)
                    pl.BlockSpec((1, hidden), lambda i: (0, 0)),       # b1
                    pl.BlockSpec((hidden, dim), lambda i: (0, 0)),     # W2 (resident, DMA'd once)
                    pl.BlockSpec((1, dim), lambda i: (0, 0)),          # b2
                ],
                out_specs=pl.BlockSpec((tm_eff, dim), lambda i: (i, 0)),
            ),
            compiler_params=pltpu.CompilerParams(
                dimension_semantics=("parallel",),
                vmem_limit_bytes=budget,
            ),
            cost_estimate=cost,
        )(x2d, w1, b1_2d, w2, b2_2d)
    else:
        n_k = hidden // tk_eff
        cost = pl.CostEstimate(
            flops=4 * M_pad * dim * hidden,
            transcendentals=M_pad * hidden,
            bytes_accessed=(M_pad * dim * in_it                                 # x once
                            + n_row * (2 * dim * hidden + hidden) * in_it       # W1/W2/b1 per row tile
                            + dim * in_it                                       # b2 once
                            + M_pad * dim * out_it),                            # out once
        )
        kernel = _ffn_stream_kernel_acc if need_scratch else _ffn_stream_kernel_f32out
        scratch = [pltpu.VMEM((tm_eff, dim), jnp.float32)] if need_scratch else []
        out = pl.pallas_call(
            kernel,
            out_shape=jax.ShapeDtypeStruct((M_pad, dim), out_dtype),
            grid_spec=pltpu.PrefetchScalarGridSpec(
                num_scalar_prefetch=0,
                grid=(n_row, n_k),
                in_specs=[
                    pl.BlockSpec((tm_eff, dim), lambda i, k: (i, 0)),  # x row tile (reused over k)
                    pl.BlockSpec((dim, tk_eff), lambda i, k: (0, k)),  # W1 hidden slab (streamed)
                    pl.BlockSpec((1, tk_eff), lambda i, k: (0, k)),    # b1 hidden slab
                    pl.BlockSpec((tk_eff, dim), lambda i, k: (k, 0)),  # W2 hidden slab (streamed)
                    pl.BlockSpec((1, dim), lambda i, k: (0, 0)),       # b2 (constant)
                ],
                out_specs=pl.BlockSpec((tm_eff, dim), lambda i, k: (i, 0)),  # resident across k
                scratch_shapes=scratch,
            ),
            compiler_params=pltpu.CompilerParams(
                dimension_semantics=("parallel", "arbitrary"),
                vmem_limit_bytes=budget,
            ),
            cost_estimate=cost,
        )(x2d, w1, b1_2d, w2, b2_2d)

    return out[:M].reshape(B, N, dim)


# ----------------------------------------------------------------------------- reference

def feedforward_ref(x, w1, b1, w2, b2):
    h = jnp.einsum("bnd,dh->bnh", x, w1) + b1
    h = 0.5 * h * (1.0 + jax.lax.erf(h / jnp.sqrt(2.0)))
    return jnp.einsum("bnh,hd->bnd", h, w2) + b2


if __name__ == "__main__":
    # Small but lane-dense demo: dim a multiple of 256 (full MXU occupancy on v6e/v7x),
    # 512 rows so the row grid has >= 2 tiles (both v7x TCs get work).
    B, N, dim, hidden = 2, 256, 256, 1024

    key = jax.random.PRNGKey(0)
    kx, k1, kb1, k2, kb2 = jax.random.split(key, 5)

    x = jax.random.normal(kx, (B, N, dim), dtype=jnp.float32)

    # nn.Linear-style uniform(-1/sqrt(fan_in), 1/sqrt(fan_in)) init.
    bound1 = 1.0 / math.sqrt(dim)
    w1 = jax.random.uniform(k1, (dim, hidden), jnp.float32, -bound1, bound1)
    b1 = jax.random.uniform(kb1, (hidden,), jnp.float32, -bound1, bound1)
    bound2 = 1.0 / math.sqrt(hidden)
    w2 = jax.random.uniform(k2, (hidden, dim), jnp.float32, -bound2, bound2)
    b2 = jax.random.uniform(kb2, (dim,), jnp.float32, -bound2, bound2)

    y_ref = feedforward_ref(x, w1, b1, w2, b2)

    # 1) f32, automatic path selection (weights fit in VMEM -> fused single-shot kernel).
    y_fused = jax.block_until_ready(feedforward_pallas(x, w1, b1, w2, b2))
    assert y_fused.shape == (B, N, dim)
    assert jnp.allclose(y_fused, y_ref, atol=5e-4, rtol=5e-4), "fused path mismatch vs reference"

    # 2) f32, forced hidden-streaming path (accumulates directly into the f32 output block).
    y_stream = jax.block_until_ready(
        feedforward_pallas(x, w1, b1, w2, b2, tk=512, force_stream=True))
    assert jnp.allclose(y_stream, y_ref, atol=5e-4, rtol=5e-4), \
        "streaming path mismatch vs reference"

    # 3) bf16 operands, forced streaming (exercises the f32-scratch accumulator for bf16 output).
    xb, w1b, b1b, w2b, b2b = (a.astype(jnp.bfloat16) for a in (x, w1, b1, w2, b2))
    y_bf16 = jax.block_until_ready(
        feedforward_pallas(xb, w1b, b1b, w2b, b2b, tk=512, force_stream=True))
    ref_bf16 = feedforward_ref(*(a.astype(jnp.float32) for a in (xb, w1b, b1b, w2b, b2b)))
    assert jnp.allclose(y_bf16.astype(jnp.float32), ref_bf16, atol=3e-2, rtol=3e-2), \
        "bf16 streaming path mismatch vs reference"

    print("KERNEL_OK")
</pallas_src>

<mosaic_0001>
module attributes {stable_mosaic.version = 11 : i64} {
  func.func @_ffn_fused_kernel(%arg0: i32, %arg1: memref<256x256xf32, #tpu.memory_space<vmem>>, %arg2: memref<256x1024xf32, #tpu.memory_space<vmem>>, %arg3: memref<1x1024xf32, #tpu.memory_space<vmem>>, %arg4: memref<1024x256xf32, #tpu.memory_space<vmem>>, %arg5: memref<1x256xf32, #tpu.memory_space<vmem>>, %arg6: memref<256x256xf32, #tpu.memory_space<vmem>>) attributes {dimension_semantics = [#tpu.dimension_semantics<parallel>], iteration_bounds = array<i64: 2>, scalar_prefetch = 0 : i64, scratch_operands = 0 : i64, tpu.core_type = #tpu.core_type<tc>, window_params = [{transform_indices = @transform_0, window_bounds = array<i64: 256, 256>}, {pipeline_mode = #tpu.pipeline_mode<synchronous>, transform_indices = @transform_1, window_bounds = array<i64: 256, 1024>}, {pipeline_mode = #tpu.pipeline_mode<synchronous>, transform_indices = @transform_2, window_bounds = array<i64: 1, 1024>}, {pipeline_mode = #tpu.pipeline_mode<synchronous>, transform_indices = @transform_3, window_bounds = array<i64: 1024, 256>}, {pipeline_mode = #tpu.pipeline_mode<synchronous>, transform_indices = @transform_4, window_bounds = array<i64: 1, 256>}, {transform_indices = @transform_5, window_bounds = array<i64: 256, 256>}]} {
    %c0 = arith.constant 0 : index
    %c0_0 = arith.constant 0 : index
    %0 = vector.load %arg1[%c0, %c0_0] : memref<256x256xf32, #tpu.memory_space<vmem>>, vector<256x256xf32>
    %c0_1 = arith.constant 0 : index
    %c0_2 = arith.constant 0 : index
    %1 = vector.load %arg2[%c0_1, %c0_2] : memref<256x1024xf32, #tpu.memory_space<vmem>>, vector<256x1024xf32>
    %cst = arith.constant dense<0.000000e+00> : vector<256x1024xf32>
    %2 = tpu.matmul %0, %1, %cst {dimension_numbers = #tpu.dot_dimension_numbers<[1], [0], [0], [1], [0, 0, 1, 1], [], []>} : vector<256x256xf32>, vector<256x1024xf32>, vector<256x1024xf32> -> vector<256x1024xf32>
    %c0_3 = arith.constant 0 : index
    %c0_4 = arith.constant 0 : index
    %3 = vector.load %arg3[%c0_3, %c0_4] : memref<1x1024xf32, #tpu.memory_space<vmem>>, vector<1x1024xf32>
    %4 = vector.broadcast %3 : vector<1x1024xf32> to vector<256x1024xf32>
    %5 = arith.addf %2, %4 : vector<256x1024xf32>
    %cst_5 = arith.constant 5.000000e-01 : f32
    %6 = vector.broadcast %cst_5 : f32 to vector<256x1024xf32>
    %7 = arith.mulf %6, %5 : vector<256x1024xf32>
    %cst_6 = arith.constant 0.707106769 : f32
    %8 = vector.broadcast %cst_6 : f32 to vector<256x1024xf32>
    %9 = arith.mulf %5, %8 : vector<256x1024xf32>
    %10 = math.erf %9 : vector<256x1024xf32>
    %cst_7 = arith.constant 1.000000e+00 : f32
    %11 = vector.broadcast %cst_7 : f32 to vector<256x1024xf32>
    %12 = arith.addf %11, %10 : vector<256x1024xf32>
    %13 = arith.mulf %7, %12 : vector<256x1024xf32>
    %c0_8 = arith.constant 0 : index
    %c0_9 = arith.constant 0 : index
    %14 = vector.load %arg4[%c0_8, %c0_9] : memref<1024x256xf32, #tpu.memory_space<vmem>>, vector<1024x256xf32>
    %cst_10 = arith.constant dense<0.000000e+00> : vector<256x256xf32>
    %15 = tpu.matmul %13, %14, %cst_10 {dimension_numbers = #tpu.dot_dimension_numbers<[1], [0], [0], [1], [0, 0, 1, 1], [], []>} : vector<256x1024xf32>, vector<1024x256xf32>, vector<256x256xf32> -> vector<256x256xf32>
    %c0_11 = arith.constant 0 : index
    %c0_12 = arith.constant 0 : index
    %16 = vector.load %arg5[%c0_11, %c0_12] : memref<1x256xf32, #tpu.memory_space<vmem>>, vector<1x256xf32>
    %17 = vector.broadcast %16 : vector<1x256xf32> to vector<256x256xf32>
    %18 = arith.addf %15, %17 : vector<256x256xf32>
    %c0_13 = arith.constant 0 : index
    %c0_14 = arith.constant 0 : index
    %19 = vector.load %arg6[%c0_13, %c0_14] : memref<256x256xf32, #tpu.memory_space<vmem>>, vector<256x256xf32>
    tpu.vector_store %arg6[%c0_13, %c0_14], %18 {strides = array<i32>} : memref<256x256xf32, #tpu.memory_space<vmem>>, vector<256x256xf32>,
    return
  }
  func.func @transform_0(%arg0: i32) -> (i32, i32) {
    %c0_i32 = arith.constant 0 : i32
    %c0_i32_0 = arith.constant 0 : i32
    return %arg0, %c0_i32 : i32, i32
  }
  func.func @transform_1(%arg0: i32) -> (i32, i32) {
    %c0_i32 = arith.constant 0 : i32
    %c0_i32_0 = arith.constant 0 : i32
    %c0_i32_1 = arith.constant 0 : i32
    return %c0_i32, %c0_i32_0 : i32, i32
  }
  func.func @transform_2(%arg0: i32) -> (i32, i32) {
    %c0_i32 = arith.constant 0 : i32
    %c0_i32_0 = arith.constant 0 : i32
    %c0_i32_1 = arith.constant 0 : i32
    return %c0_i32, %c0_i32_0 : i32, i32
  }
  func.func @transform_3(%arg0: i32) -> (i32, i32) {
    %c0_i32 = arith.constant 0 : i32
    %c0_i32_0 = arith.constant 0 : i32
    %c0_i32_1 = arith.constant 0 : i32
    return %c0_i32, %c0_i32_0 : i32, i32
  }
  func.func @transform_4(%arg0: i32) -> (i32, i32) {
    %c0_i32 = arith.constant 0 : i32
    %c0_i32_0 = arith.constant 0 : i32
    %c0_i32_1 = arith.constant 0 : i32
    return %c0_i32, %c0_i32_0 : i32, i32
  }
  func.func @transform_5(%arg0: i32) -> (i32, i32) {
    %c0_i32 = arith.constant 0 : i32
    %c0_i32_0 = arith.constant 0 : i32
    return %arg0, %c0_i32 : i32, i32
  }
}

</mosaic_0001>

<llo_original>
// kernel: tpu_custom_call.1
$region0: #{tpu_custom_call.1}
  #allocation0 [shape = 'u32[]', space=smem, size = 0x4, offset = 0x4, fixed_abs, tag = 'smem constant byte address 0x4 - core index']
  #allocation1 [shape = 'u32[144,128]{1,0:T(1,128)}', space=vmem, size = 0x12000, scoped, tag = 'internal scratch']
  %s0 = inlined_call_operand.hbm [shape: f32[512,256], index: 0, kind: input, shape index: {}]
  %s1 = inlined_call_operand.hbm [shape: f32[256,1024], index: 1, kind: input, shape index: {}]
  %s2 = inlined_call_operand.hbm [shape: f32[1,1024], index: 2, kind: input, shape index: {}]
  %s3 = inlined_call_operand.hbm [shape: f32[1024,256], index: 3, kind: input, shape index: {}]
  %s4 = inlined_call_operand.vmem [shape: f32[1,256], index: 4, kind: input, shape index: {}]
  %s5 = inlined_call_operand.hbm [shape: f32[512,256], index: 5, kind: output, shape index: {}]
  %s6 = sld [smem:[#allocation0]]
  $region69: #{tpu_custom_call.1} parent=0
    _
  %s8 = ssub.s32 1, %s6
  %s9 = scalar_select 0, %s8, %s6
  $region1: #{tpu_custom_call.1} parent=0
    #allocation2 [shape = 'u8[524288]{0}', space=vmem, size = 0x80000, scoped, tag = 'input window, operand 0']
    #allocation3 [shape = 's32[2]{0}', space=sflag, size = 0x8, scoped, tag = 'scoped memory for tpu_custom_call.1']
    #allocation4 [shape = 's32[2]{0}', space=sflag, size = 0x8, scoped, tag = 'scoped memory for tpu_custom_call.1']
    #allocation5 [shape = 'u8[1048576]{0}', space=vmem, size = 0x100000, scoped, tag = 'input window, operand 1, single buffered']
    #allocation6 [shape = 's32[1]{0}', space=sflag, size = 0x4, scoped, tag = 'scoped memory for tpu_custom_call.1']
    #allocation7 [shape = 'u8[4096]{0}', space=vmem, size = 0x1000, scoped, tag = 'input window, operand 2, single buffered']
    #allocation8 [shape = 'u8[1048576]{0}', space=vmem, size = 0x100000, scoped, tag = 'input window, operand 3, single buffered']
    #allocation9 [shape = 's32[1]{0}', space=sflag, size = 0x4, scoped, tag = 'scoped memory for tpu_custom_call.1']
    #allocation10 [shape = 'u8[524288]{0}', space=vmem, size = 0x80000, scoped, tag = 'output window, operand 0']
    %10 = vsyncpa [#allocation3], 0
    %s11 = scalar_lea.sflag [#allocation3], 1
    %12 = vsyncpa %s11, 0
    %13 = vsyncpa [#allocation6], 0
    %14 = vsyncpa [#allocation9], 0
    %15 = vsyncpa [#allocation4], 0
    %s16 = scalar_lea.sflag [#allocation4], 1
    %17 = vsyncpa %s16, 0
    loop: start=0, step=1, limit=4
    $region2: #{tpu_custom_call.1} parent=1 // loop_pre_header
      _
    $region3: #{tpu_custom_call.1} parent=1 // loop_header
      %s19 = sphi 0, %s23
      %p20 = scmp.ge.s32.totalorder %s19, 4
      %s29 = sphi 0, %s31
      %s32 = sphi 0, %s29
      %s33 = sphi 0, %s32
      %s49 = sphi 0, %s33
      %s53 = sphi 0, %s53
      %s55 = sphi 0, %s53
      %s56 = sphi 0, %s55
      %s70 = sphi 0, %s56
      %s74 = sphi 0, %s74
      %s76 = sphi 0, %s74
      %s77 = sphi 0, %s76
      %s91 = sphi 0, %s77
      %s95 = sphi 0, %s95
      %s97 = sphi 0, %s95
      %s98 = sphi 0, %s97
      %s112 = sphi 0, %s98
      %s116 = sphi 0, %s116
      %s118 = sphi 0, %s116
      %s119 = sphi 0, %s118
      %s133 = sphi 0, %s119
      %s139 = sphi 0, %s141
      %s142 = sphi 0, %s139
      %s143 = sphi 0, %s142
      %s159 = sphi 0, %s143
    $region4: #{tpu_custom_call.1} parent=1 // loop_header_branch
      %22 = sbr.rel (%p20) target = $region8
    $region5: #{tpu_custom_call.1} parent=1 // loop_body
      %s24 = ssub.s32 %s19, 1
      %s25 = ssub.s32 %s19, 2
      %s26 = sadd.s32 %s19, 1
      %s27 = ssub.s32 %s19, %s26
      %p28 = scmp.eq.s32.totalorder %s27, 0
      %s30 = sadd.s32 %s29, 1
      %s31 = scalar_select %p28, %s29, %s30
      %p34 = pneg %p28
      %p35 = scmp.eq.s32.totalorder %s19, 1
      %p36 = por %p34, %p35
      %p37 = scmp.ne.s32.totalorder %s29, %s32
      %p38 = scmp.eq.s32.totalorder %s19, 0
      %p39 = por %p37, %p38
      %p40 = scmp.ne.s32.totalorder %s29, %s32
      %p41 = scmp.eq.s32.totalorder %s24, 1
      %p42 = por %p40, %p41
      %p43 = scmp.ne.s32.totalorder %s32, %s33
      %p44 = scmp.eq.s32.totalorder %s24, 0
      %p45 = por %p43, %p44
      %p46 = scmp.ne.s32.totalorder %s32, %s33
      %p47 = scmp.eq.s32.totalorder %s25, 1
      %p48 = por %p46, %p47
      %p50 = scmp.ne.s32.totalorder %s33, %s49
      %p51 = scmp.eq.s32.totalorder %s25, 0
      %p52 = por %p50, %p51
      %s54 = sadd.s32 %s53, 1
      %p57 = scmp.eq.s32.totalorder %s19, 1
      %p58 = scmp.ne.s32.totalorder %s53, %s55
      %p59 = scmp.eq.s32.totalorder %s19, 0
      %p60 = por %p58, %p59
      %p61 = scmp.ne.s32.totalorder %s53, %s55
      %p62 = scmp.eq.s32.totalorder %s24, 1
      %p63 = por %p61, %p62
      %p64 = scmp.ne.s32.totalorder %s55, %s56
      %p65 = scmp.eq.s32.totalorder %s24, 0
      %p66 = por %p64, %p65
      %p67 = scmp.ne.s32.totalorder %s55, %s56
      %p68 = scmp.eq.s32.totalorder %s25, 1
      %p69 = por %p67, %p68
      %p71 = scmp.ne.s32.totalorder %s56, %s70
      %p72 = scmp.eq.s32.totalorder %s25, 0
      %p73 = por %p71, %p72
      %s75 = sadd.s32 %s74, 1
      %p78 = scmp.eq.s32.totalorder %s19, 1
      %p79 = scmp.ne.s32.totalorder %s74, %s76
      %p80 = scmp.eq.s32.totalorder %s19, 0
      %p81 = por %p79, %p80
      %p82 = scmp.ne.s32.totalorder %s74, %s76
      %p83 = scmp.eq.s32.totalorder %s24, 1
      %p84 = por %p82, %p83
      %p85 = scmp.ne.s32.totalorder %s76, %s77
      %p86 = scmp.eq.s32.totalorder %s24, 0
      %p87 = por %p85, %p86
      %p88 = scmp.ne.s32.totalorder %s76, %s77
      %p89 = scmp.eq.s32.totalorder %s25, 1
      %p90 = por %p88, %p89
      %p92 = scmp.ne.s32.totalorder %s77, %s91
      %p93 = scmp.eq.s32.totalorder %s25, 0
      %p94 = por %p92, %p93
      %s96 = sadd.s32 %s95, 1
      %p99 = scmp.eq.s32.totalorder %s19, 1
      %p100 = scmp.ne.s32.totalorder %s95, %s97
      %p101 = scmp.eq.s32.totalorder %s19, 0
      %p102 = por %p100, %p101
      %p103 = scmp.ne.s32.totalorder %s95, %s97
      %p104 = scmp.eq.s32.totalorder %s24, 1
      %p105 = por %p103, %p104
      %p106 = scmp.ne.s32.totalorder %s97, %s98
      %p107 = scmp.eq.s32.totalorder %s24, 0
      %p108 = por %p106, %p107
      %p109 = scmp.ne.s32.totalorder %s97, %s98
      %p110 = scmp.eq.s32.totalorder %s25, 1
      %p111 = por %p109, %p110
      %p113 = scmp.ne.s32.totalorder %s98, %s112
      %p114 = scmp.eq.s32.totalorder %s25, 0
      %p115 = por %p113, %p114
      %s117 = sadd.s32 %s116, 1
      %p120 = scmp.eq.s32.totalorder %s19, 1
      %p121 = scmp.ne.s32.totalorder %s116, %s118
      %p122 = scmp.eq.s32.totalorder %s19, 0
      %p123 = por %p121, %p122
      %p124 = scmp.ne.s32.totalorder %s116, %s118
      %p125 = scmp.eq.s32.totalorder %s24, 1
      %p126 = por %p124, %p125
      %p127 = scmp.ne.s32.totalorder %s118, %s119
      %p128 = scmp.eq.s32.totalorder %s24, 0
      %p129 = por %p127, %p128
      %p130 = scmp.ne.s32.totalorder %s118, %s119
      %p131 = scmp.eq.s32.totalorder %s25, 1
      %p132 = por %p130, %p131
      %p134 = scmp.ne.s32.totalorder %s119, %s133
      %p135 = scmp.eq.s32.totalorder %s25, 0
      %p136 = por %p134, %p135
      %s137 = ssub.s32 %s19, %s26
      %p138 = scmp.eq.s32.totalorder %s137, 0
      %s140 = sadd.s32 %s139, 1
      %s141 = scalar_select %p138, %s139, %s140
      %p144 = pneg %p138
      %p145 = scmp.eq.s32.totalorder %s19, 1
      %p146 = por %p144, %p145
      %p147 = scmp.ne.s32.totalorder %s139, %s142
      %p148 = scmp.eq.s32.totalorder %s19, 0
      %p149 = por %p147, %p148
      %p150 = scmp.ne.s32.totalorder %s139, %s142
      %p151 = scmp.eq.s32.totalorder %s24, 1
      %p152 = por %p150, %p151
      %p153 = scmp.ne.s32.totalorder %s142, %s143
      %p154 = scmp.eq.s32.totalorder %s24, 0
      %p155 = por %p153, %p154
      %p156 = scmp.ne.s32.totalorder %s142, %s143
      %p157 = scmp.eq.s32.totalorder %s25, 1
      %p158 = por %p156, %p157
      %p160 = scmp.ne.s32.totalorder %s143, %s159
      %p161 = scmp.eq.s32.totalorder %s25, 0
      %p162 = por %p160, %p161
      %p163 = scmp.le.s32.totalorder 1, %s19
      %p164 = scmp.lt.s32.totalorder %s19, 3
      %p165 = pnand %p163, %p164
      %p166 = pneg %p165
      // Predicated region
      $region9: #{tpu_custom_call.1} parent=5 // pred_check
        _
      $region10: #{tpu_custom_call.1} parent=5 // pred_check_branch
        %168 = sbr.rel (%p165) target = $region12
      $region11: #{tpu_custom_call.1} parent=5 // pred_region
        %s169 = ssub.s32 %s19, 1
        // Predicated region
        $region13: #{tpu_custom_call.1} parent=11 // pred_check
          %p170 = pneg %p66
        $region14: #{tpu_custom_call.1} parent=11 // pred_check_branch
          %172 = sbr.rel (%p170) target = $region16
        $region15: #{tpu_custom_call.1} parent=11 // pred_region
          %s174 = ssub.s32 32768, 32768
          %175 = vsyncadd [#allocation6], %s174
          %s176 = sshll.u32 [#allocation5], 4
          %s177 = int_to_ptr.vmem [resolvable:$true] %s176
          %182 = dma.hbm_to_vmem [thread:$0]  %s1, 32768, %s177, [#allocation6], 1024, 1024, 64
        $region16: #{tpu_custom_call.1} parent=11 // pred_fallthru
          _
        // Predicated region
        $region17: #{tpu_custom_call.1} parent=11 // pred_check
          %p183 = pneg %p87
        $region18: #{tpu_custom_call.1} parent=11 // pred_check_branch
          %185 = sbr.rel (%p183) target = $region20
        $region19: #{tpu_custom_call.1} parent=11 // pred_region
          %s187 = ssub.s32 128, 128
          %188 = vsyncadd [#allocation6], %s187
          %s190 = sshll.u32 [#allocation7], 4
          %s191 = int_to_ptr.vmem [resolvable:$true] %s190
          %193 = dma.hbm_to_vmem [thread:$0]  %s2, 128, %s191, [#allocation6]
        $region20: #{tpu_custom_call.1} parent=11 // pred_fallthru
          _
        // Predicated region
        $region21: #{tpu_custom_call.1} parent=11 // pred_check
          %p194 = pneg %p108
        $region22: #{tpu_custom_call.1} parent=11 // pred_check_branch
          %196 = sbr.rel (%p194) target = $region24
        $region23: #{tpu_custom_call.1} parent=11 // pred_region
          %s198 = ssub.s32 32768, 32768
          %199 = vsyncadd [#allocation9], %s198
          %s200 = sshll.u32 [#allocation8], 4
          %s201 = int_to_ptr.vmem [resolvable:$true] %s200
          %206 = dma.hbm_to_vmem [thread:$0]  %s3, 32768, %s201, [#allocation9], 256, 256, 16
        $region24: #{tpu_custom_call.1} parent=11 // pred_fallthru
          _
        // Predicated region
        $region25: #{tpu_custom_call.1} parent=11 // pred_check
          %p207 = pneg %p129
        $region26: #{tpu_custom_call.1} parent=11 // pred_check_branch
          %209 = sbr.rel (%p207) target = $region28
        $region27: #{tpu_custom_call.1} parent=11 // pred_region
          _
        $region28: #{tpu_custom_call.1} parent=11 // pred_fallthru
          _
      $region12: #{tpu_custom_call.1} parent=5 // pred_fallthru
        _
      %p210 = scmp.lt.s32.totalorder %s19, 2
      // Predicated region
      $region29: #{tpu_custom_call.1} parent=5 // pred_check
        %p211 = pneg %p210
      $region30: #{tpu_custom_call.1} parent=5 // pred_check_branch
        %213 = sbr.rel (%p211) target = $region32
      $region31: #{tpu_custom_call.1} parent=5 // pred_region
        // Predicated region
        $region33: #{tpu_custom_call.1} parent=31 // pred_check
          %p214 = pneg %p39
        $region34: #{tpu_custom_call.1} parent=31 // pred_check_branch
          %216 = sbr.rel (%p214) target = $region36
        $region35: #{tpu_custom_call.1} parent=31 // pred_region
          %s217 = sand.u32 %s29, 1
          %s218 = scalar_lea.sflag [#allocation3], %s217
          %s219 = sand.u32 %s29, 1
          %s220 = smul.addr %s219, 512
          %s221 = scalar_lea.vmem [#allocation2], %s220
          %s222 = smul.u32 32, %s19
          %s224 = ssub.s32 8192, 8192
          %225 = vsyncadd %s218, %s224
          %s226 = smul.addr %s222, 2
          %s227 = smul.addr %s226, 128
          %s228 = scalar_lea.hbm %s0, %s227
          %s229 = sshll.u32 %s221, 4
          %s230 = int_to_ptr.vmem [resolvable:$true] %s229
          %235 = dma.hbm_to_vmem [thread:$0]  %s228, 8192, %s230, %s218, 256, 256, 16
        $region36: #{tpu_custom_call.1} parent=31 // pred_fallthru
          _
      $region32: #{tpu_custom_call.1} parent=5 // pred_fallthru
        _
      %p236 = scmp.le.s32.totalorder 1, %s19
      %p237 = scmp.lt.s32.totalorder %s19, 3
      %p238 = pnand %p236, %p237
      %p239 = pneg %p238
      // Predicated region
      $region37: #{tpu_custom_call.1} parent=5 // pred_check
        _
      $region38: #{tpu_custom_call.1} parent=5 // pred_check_branch
        %241 = sbr.rel (%p238) target = $region40
      $region39: #{tpu_custom_call.1} parent=5 // pred_region
        %s242 = ssub.s32 %s19, 1
        %s243 = sand.u32 %s32, 1
        %s244 = scalar_lea.sflag [#allocation3], %s243
        %s245 = sand.u32 %s32, 1
        %s246 = smul.addr %s245, 512
        %s247 = scalar_lea.vmem [#allocation2], %s246
        // Predicated region
        $region41: #{tpu_custom_call.1} parent=39 // pred_check
          %p248 = pneg %p45
        $region42: #{tpu_custom_call.1} parent=39 // pred_check_branch
          %250 = sbr.rel (%p248) target = $region44
        $region43: #{tpu_custom_call.1} parent=39 // pred_region
          %251 = dma.done %s244, 8192
        $region44: #{tpu_custom_call.1} parent=39 // pred_fallthru
          _
        // Predicated region
        $region45: #{tpu_custom_call.1} parent=39 // pred_check
          %p252 = pneg %p66
        $region46: #{tpu_custom_call.1} parent=39 // pred_check_branch
          %254 = sbr.rel (%p252) target = $region48
        $region47: #{tpu_custom_call.1} parent=39 // pred_region
          %255 = dma.done [#allocation6], 32768
        $region48: #{tpu_custom_call.1} parent=39 // pred_fallthru
          _
        // Predicated region
        $region49: #{tpu_custom_call.1} parent=39 // pred_check
          %p256 = pneg %p87
        $region50: #{tpu_custom_call.1} parent=39 // pred_check_branch
          %258 = sbr.rel (%p256) target = $region52
        $region51: #{tpu_custom_call.1} parent=39 // pred_region
          %259 = dma.done [#allocation6], 128
        $region52: #{tpu_custom_call.1} parent=39 // pred_fallthru
          _
        // Predicated region
        $region53: #{tpu_custom_call.1} parent=39 // pred_check
          %p260 = pneg %p108
        $region54: #{tpu_custom_call.1} parent=39 // pred_check_branch
          %262 = sbr.rel (%p260) target = $region56
        $region55: #{tpu_custom_call.1} parent=39 // pred_region
          %263 = dma.done [#allocation9], 32768
        $region56: #{tpu_custom_call.1} parent=39 // pred_fallthru
          _
        %s264 = sand.u32 %s32, 1
        %s265 = scalar_lea.sflag [#allocation3], %s264
        %s266 = sand.u32 %s32, 1
        %s267 = smul.addr %s266, 512
        %s268 = scalar_lea.vmem [#allocation2], %s267
        %p269 = pneg %p45
        %p270 = pneg %p42
        %p271 = pneg %p66
        %p272 = pneg %p63
        %p273 = pneg %p87
        %p274 = pneg %p84
        %p275 = pneg %p108
        %p276 = pneg %p105
        %p277 = pneg %p129
        %p278 = pneg %p126
        %p279 = pneg %p155
        %p280 = pneg %p152
        %s281 = sand.u32 %s142, 1
        %s282 = scalar_lea.sflag [#allocation4], %s281
        %s283 = sand.u32 %s142, 1
        %s284 = smul.addr %s283, 512
        %s285 = scalar_lea.vmem [#allocation10], %s284
        %s286 = smul.u32 32, %s24
        %s287 = smul.u32 32, %s24
        %v288 = vld [vmem:[%s247] sm:$0xff]
        %v289 = vld [vmem:[%s247 + $0x8] sm:$0xff]
        %v290 = vld [vmem:[%s247 + $0x10] sm:$0xff]
        %v291 = vld [vmem:[%s247 + $0x18] sm:$0xff]
        %v292 = vld [vmem:[%s247 + $0x20] sm:$0xff]
        %v293 = vld [vmem:[%s247 + $0x28] sm:$0xff]
        %v294 = vld [vmem:[%s247 + $0x30] sm:$0xff]
        %v295 = vld [vmem:[%s247 + $0x38] sm:$0xff]
        %v296 = vld [vmem:[%s247 + $0x40] sm:$0xff]
        %v297 = vld [vmem:[%s247 + $0x48] sm:$0xff]
        %v298 = vld [vmem:[%s247 + $0x50] sm:$0xff]
        %v299 = vld [vmem:[%s247 + $0x58] sm:$0xff]
        %v300 = vld [vmem:[%s247 + $0x60] sm:$0xff]
        %v301 = vld [vmem:[%s247 + $0x68] sm:$0xff]
        %v302 = vld [vmem:[%s247 + $0x70] sm:$0xff]
        %v303 = vld [vmem:[%s247 + $0x78] sm:$0xff]
        %v304 = vld [vmem:[%s247 + $0x80] sm:$0xff]
        %v305 = vld [vmem:[%s247 + $0x88] sm:$0xff]
        %v306 = vld [vmem:[%s247 + $0x90] sm:$0xff]
        %v307 = vld [vmem:[%s247 + $0x98] sm:$0xff]
        %v308 = vld [vmem:[%s247 + $0xa0] sm:$0xff]
        %v309 = vld [vmem:[%s247 + $0xa8] sm:$0xff]
        %v310 = vld [vmem:[%s247 + $0xb0] sm:$0xff]
        %v311 = vld [vmem:[%s247 + $0xb8] sm:$0xff]
        %v312 = vld [vmem:[%s247 + $0xc0] sm:$0xff]
        %v313 = vld [vmem:[%s247 + $0xc8] sm:$0xff]
        %v314 = vld [vmem:[%s247 + $0xd0] sm:$0xff]
        %v315 = vld [vmem:[%s247 + $0xd8] sm:$0xff]
        %v316 = vld [vmem:[%s247 + $0xe0] sm:$0xff]
        %v317 = vld [vmem:[%s247 + $0xe8] sm:$0xff]
        %v318 = vld [vmem:[%s247 + $0xf0] sm:$0xff]
        %v319 = vld [vmem:[%s247 + $0xf8] sm:$0xff]
        %v320 = vld [vmem:[%s247 + $0x100] sm:$0xff]
        %v321 = vld [vmem:[%s247 + $0x108] sm:$0xff]
        %v322 = vld [vmem:[%s247 + $0x110] sm:$0xff]
        %v323 = vld [vmem:[%s247 + $0x118] sm:$0xff]
        %v324 = vld [vmem:[%s247 + $0x120] sm:$0xff]
        %v325 = vld [vmem:[%s247 + $0x128] sm:$0xff]
        %v326 = vld [vmem:[%s247 + $0x130] sm:$0xff]
        %v327 = vld [vmem:[%s247 + $0x138] sm:$0xff]
        %v328 = vld [vmem:[%s247 + $0x140] sm:$0xff]
        %v329 = vld [vmem:[%s247 + $0x148] sm:$0xff]
        %v330 = vld [vmem:[%s247 + $0x150] sm:$0xff]
        %v331 = vld [vmem:[%s247 + $0x158] sm:$0xff]
        %v332 = vld [vmem:[%s247 + $0x160] sm:$0xff]
        %v333 = vld [vmem:[%s247 + $0x168] sm:$0xff]
        %v334 = vld [vmem:[%s247 + $0x170] sm:$0xff]
        %v335 = vld [vmem:[%s247 + $0x178] sm:$0xff]
        %v336 = vld [vmem:[%s247 + $0x180] sm:$0xff]
        %v337 = vld [vmem:[%s247 + $0x188] sm:$0xff]
        %v338 = vld [vmem:[%s247 + $0x190] sm:$0xff]
        %v339 = vld [vmem:[%s247 + $0x198] sm:$0xff]
        %v340 = vld [vmem:[%s247 + $0x1a0] sm:$0xff]
        %v341 = vld [vmem:[%s247 + $0x1a8] sm:$0xff]
        %v342 = vld [vmem:[%s247 + $0x1b0] sm:$0xff]
        %v343 = vld [vmem:[%s247 + $0x1b8] sm:$0xff]
        %v344 = vld [vmem:[%s247 + $0x1c0] sm:$0xff]
        %v345 = vld [vmem:[%s247 + $0x1c8] sm:$0xff]
        %v346 = vld [vmem:[%s247 + $0x1d0] sm:$0xff]
        %v347 = vld [vmem:[%s247 + $0x1d8] sm:$0xff]
        %v348 = vld [vmem:[%s247 + $0x1e0] sm:$0xff]
        %v349 = vld [vmem:[%s247 + $0x1e8] sm:$0xff]
        %v350 = vld [vmem:[%s247 + $0x1f0] sm:$0xff]
        %v351 = vld [vmem:[%s247 + $0x1f8] sm:$0xff]
        %v352 = vld [vmem:[#allocation5] sm:$0xff]
        %v353 = vld [vmem:[#allocation5 + $0x8] sm:$0xff]
        %v354 = vld [vmem:[#allocation5 + $0x10] sm:$0xff]
        %v355 = vld [vmem:[#allocation5 + $0x18] sm:$0xff]
        %v356 = vld [vmem:[#allocation5 + $0x20] sm:$0xff]
        %v357 = vld [vmem:[#allocation5 + $0x28] sm:$0xff]
        %v358 = vld [vmem:[#allocation5 + $0x30] sm:$0xff]
        %v359 = vld [vmem:[#allocation5 + $0x38] sm:$0xff]
        %v360 = vld [vmem:[#allocation5 + $0x40] sm:$0xff]
        %v361 = vld [vmem:[#allocation5 + $0x48] sm:$0xff]
        %v362 = vld [vmem:[#allocation5 + $0x50] sm:$0xff]
        %v363 = vld [vmem:[#allocation5 + $0x58] sm:$0xff]
        %v364 = vld [vmem:[#allocation5 + $0x60] sm:$0xff]
        %v365 = vld [vmem:[#allocation5 + $0x68] sm:$0xff]
        %v366 = vld [vmem:[#allocation5 + $0x70] sm:$0xff]
        %v367 = vld [vmem:[#allocation5 + $0x78] sm:$0xff]
        %v368 = vld [vmem:[#allocation5 + $0x80] sm:$0xff]
        %v369 = vld [vmem:[#allocation5 + $0x88] sm:$0xff]
        %v370 = vld [vmem:[#allocation5 + $0x90] sm:$0xff]
        %v371 = vld [vmem:[#allocation5 + $0x98] sm:$0xff]
        %v372 = vld [vmem:[#allocation5 + $0xa0] sm:$0xff]
        %v373 = vld [vmem:[#allocation5 + $0xa8] sm:$0xff]
        %v374 = vld [vmem:[#allocation5 + $0xb0] sm:$0xff]
        %v375 = vld [vmem:[#allocation5 + $0xb8] sm:$0xff]
        %v376 = vld [vmem:[#allocation5 + $0xc0] sm:$0xff]
        %v377 = vld [vmem:[#allocation5 + $0xc8] sm:$0xff]
        %v378 = vld [vmem:[#allocation5 + $0xd0] sm:$0xff]
        %v379 = vld [vmem:[#allocation5 + $0xd8] sm:$0xff]
        %v380 = vld [vmem:[#allocation5 + $0xe0] sm:$0xff]
        %v381 = vld [vmem:[#allocation5 + $0xe8] sm:$0xff]
        %v382 = vld [vmem:[#allocation5 + $0xf0] sm:$0xff]
        %v383 = vld [vmem:[#allocation5 + $0xf8] sm:$0xff]
        %v384 = vld [vmem:[#allocation5 + $0x100] sm:$0xff]
        %v385 = vld [vmem:[#allocation5 + $0x108] sm:$0xff]
        %v386 = vld [vmem:[#allocation5 + $0x110] sm:$0xff]
        %v387 = vld [vmem:[#allocation5 + $0x118] sm:$0xff]
        %v388 = vld [vmem:[#allocation5 + $0x120] sm:$0xff]
        %v389 = vld [vmem:[#allocation5 + $0x128] sm:$0xff]
        %v390 = vld [vmem:[#allocation5 + $0x130] sm:$0xff]
        %v391 = vld [vmem:[#allocation5 + $0x138] sm:$0xff]
        %v392 = vld [vmem:[#allocation5 + $0x140] sm:$0xff]
        %v393 = vld [vmem:[#allocation5 + $0x148] sm:$0xff]
        %v394 = vld [vmem:[#allocation5 + $0x150] sm:$0xff]
        %v395 = vld [vmem:[#allocation5 + $0x158] sm:$0xff]
        %v396 = vld [vmem:[#allocation5 + $0x160] sm:$0xff]
        %v397 = vld [vmem:[#allocation5 + $0x168] sm:$0xff]
        %v398 = vld [vmem:[#allocation5 + $0x170] sm:$0xff]
        %v399 = vld [vmem:[#allocation5 + $0x178] sm:$0xff]
        %v400 = vld [vmem:[#allocation5 + $0x180] sm:$0xff]
        %v401 = vld [vmem:[#allocation5 + $0x188] sm:$0xff]
        %v402 = vld [vmem:[#allocation5 + $0x190] sm:$0xff]
        %v403 = vld [vmem:[#allocation5 + $0x198] sm:$0xff]
        %v404 = vld [vmem:[#allocation5 + $0x1a0] sm:$0xff]
        %v405 = vld [vmem:[#allocation5 + $0x1a8] sm:$0xff]
        %v406 = vld [vmem:[#allocation5 + $0x1b0] sm:$0xff]
        %v407 = vld [vmem:[#allocation5 + $0x1b8] sm:$0xff]
        %v408 = vld [vmem:[#allocation5 + $0x1c0] sm:$0xff]
        %v409 = vld [vmem:[#allocation5 + $0x1c8] sm:$0xff]
        %v410 = vld [vmem:[#allocation5 + $0x1d0] sm:$0xff]
        %v411 = vld [vmem:[#allocation5 + $0x1d8] sm:$0xff]
        %v412 = vld [vmem:[#allocation5 + $0x1e0] sm:$0xff]
        %v413 = vld [vmem:[#allocation5 + $0x1e8] sm:$0xff]
        %v414 = vld [vmem:[#allocation5 + $0x1f0] sm:$0xff]
        %v415 = vld [vmem:[#allocation5 + $0x1f8] sm:$0xff]
        %v416 = vld [vmem:[#allocation5 + $0x200] sm:$0xff]
        %v417 = vld [vmem:[#allocation5 + $0x208] sm:$0xff]
        %v418 = vld [vmem:[#allocation5 + $0x210] sm:$0xff]
        %v419 = vld [vmem:[#allocation5 + $0x218] sm:$0xff]
        %v420 = vld [vmem:[#allocation5 + $0x220] sm:$0xff]
        %v421 = vld [vmem:[#allocation5 + $0x228] sm:$0xff]
        %v422 = vld [vmem:[#allocation5 + $0x230] sm:$0xff]
        %v423 = vld [vmem:[#allocation5 + $0x238] sm:$0xff]
        %v424 = vld [vmem:[#allocation5 + $0x240] sm:$0xff]
        %v425 = vld [vmem:[#allocation5 + $0x248] sm:$0xff]
        %v426 = vld [vmem:[#allocation5 + $0x250] sm:$0xff]
        %v427 = vld [vmem:[#allocation5 + $0x258] sm:$0xff]
        %v428 = vld [vmem:[#allocation5 + $0x260] sm:$0xff]
        %v429 = vld [vmem:[#allocation5 + $0x268] sm:$0xff]
        %v430 = vld [vmem:[#allocation5 + $0x270] sm:$0xff]
        %v431 = vld [vmem:[#allocation5 + $0x278] sm:$0xff]
        %v432 = vld [vmem:[#allocation5 + $0x280] sm:$0xff]
        %v433 = vld [vmem:[#allocation5 + $0x288] sm:$0xff]
        %v434 = vld [vmem:[#allocation5 + $0x290] sm:$0xff]
        %v435 = vld [vmem:[#allocation5 + $0x298] sm:$0xff]
        %v436 = vld [vmem:[#allocation5 + $0x2a0] sm:$0xff]
        %v437 = vld [vmem:[#allocation5 + $0x2a8] sm:$0xff]
        %v438 = vld [vmem:[#allocation5 + $0x2b0] sm:$0xff]
        %v439 = vld [vmem:[#allocation5 + $0x2b8] sm:$0xff]
        %v440 = vld [vmem:[#allocation5 + $0x2c0] sm:$0xff]
        %v441 = vld [vmem:[#allocation5 + $0x2c8] sm:$0xff]
        %v442 = vld [vmem:[#allocation5 + $0x2d0] sm:$0xff]
        %v443 = vld [vmem:[#allocation5 + $0x2d8] sm:$0xff]
        %v444 = vld [vmem:[#allocation5 + $0x2e0] sm:$0xff]
        %v445 = vld [vmem:[#allocation5 + $0x2e8] sm:$0xff]
        %v446 = vld [vmem:[#allocation5 + $0x2f0] sm:$0xff]
        %v447 = vld [vmem:[#allocation5 + $0x2f8] sm:$0xff]
        %v448 = vld [vmem:[#allocation5 + $0x300] sm:$0xff]
        %v449 = vld [vmem:[#allocation5 + $0x308] sm:$0xff]
        %v450 = vld [vmem:[#allocation5 + $0x310] sm:$0xff]
        %v451 = vld [vmem:[#allocation5 + $0x318] sm:$0xff]
        %v452 = vld [vmem:[#allocation5 + $0x320] sm:$0xff]
        %v453 = vld [vmem:[#allocation5 + $0x328] sm:$0xff]
        %v454 = vld [vmem:[#allocation5 + $0x330] sm:$0xff]
        %v455 = vld [vmem:[#allocation5 + $0x338] sm:$0xff]
        %v456 = vld [vmem:[#allocation5 + $0x340] sm:$0xff]
        %v457 = vld [vmem:[#allocation5 + $0x348] sm:$0xff]
        %v458 = vld [vmem:[#allocation5 + $0x350] sm:$0xff]
        %v459 = vld [vmem:[#allocation5 + $0x358] sm:$0xff]
        %v460 = vld [vmem:[#allocation5 + $0x360] sm:$0xff]
        %v461 = vld [vmem:[#allocation5 + $0x368] sm:$0xff]
        %v462 = vld [vmem:[#allocation5 + $0x370] sm:$0xff]
        %v463 = vld [vmem:[#allocation5 + $0x378] sm:$0xff]
        %v464 = vld [vmem:[#allocation5 + $0x380] sm:$0xff]
        %v465 = vld [vmem:[#allocation5 + $0x388] sm:$0xff]
        %v466 = vld [vmem:[#allocation5 + $0x390] sm:$0xff]
        %v467 = vld [vmem:[#allocation5 + $0x398] sm:$0xff]
        %v468 = vld [vmem:[#allocation5 + $0x3a0] sm:$0xff]
        %v469 = vld [vmem:[#allocation5 + $0x3a8] sm:$0xff]
        %v470 = vld [vmem:[#allocation5 + $0x3b0] sm:$0xff]
        %v471 = vld [vmem:[#allocation5 + $0x3b8] sm:$0xff]
        %v472 = vld [vmem:[#allocation5 + $0x3c0] sm:$0xff]
        %v473 = vld [vmem:[#allocation5 + $0x3c8] sm:$0xff]
        %v474 = vld [vmem:[#allocation5 + $0x3d0] sm:$0xff]
        %v475 = vld [vmem:[#allocation5 + $0x3d8] sm:$0xff]
        %v476 = vld [vmem:[#allocation5 + $0x3e0] sm:$0xff]
        %v477 = vld [vmem:[#allocation5 + $0x3e8] sm:$0xff]
        %v478 = vld [vmem:[#allocation5 + $0x3f0] sm:$0xff]
        %v479 = vld [vmem:[#allocation5 + $0x3f8] sm:$0xff]
        %v480 = vld [vmem:[#allocation5 + $0x400] sm:$0xff]
        %v481 = vld [vmem:[#allocation5 + $0x408] sm:$0xff]
        %v482 = vld [vmem:[#allocation5 + $0x410] sm:$0xff]
        %v483 = vld [vmem:[#allocation5 + $0x418] sm:$0xff]
        %v484 = vld [vmem:[#allocation5 + $0x420] sm:$0xff]
        %v485 = vld [vmem:[#allocation5 + $0x428] sm:$0xff]
        %v486 = vld [vmem:[#allocation5 + $0x430] sm:$0xff]
        %v487 = vld [vmem:[#allocation5 + $0x438] sm:$0xff]
        %v488 = vld [vmem:[#allocation5 + $0x440] sm:$0xff]
        %v489 = vld [vmem:[#allocation5 + $0x448] sm:$0xff]
        %v490 = vld [vmem:[#allocation5 + $0x450] sm:$0xff]
        %v491 = vld [vmem:[#allocation5 + $0x458] sm:$0xff]
        %v492 = vld [vmem:[#allocation5 + $0x460] sm:$0xff]
        %v493 = vld [vmem:[#allocation5 + $0x468] sm:$0xff]
        %v494 = vld [vmem:[#allocation5 + $0x470] sm:$0xff]
        %v495 = vld [vmem:[#allocation5 + $0x478] sm:$0xff]
        %v496 = vld [vmem:[#allocation5 + $0x480] sm:$0xff]
        %v497 = vld [vmem:[#allocation5 + $0x488] sm:$0xff]
        %v498 = vld [vmem:[#allocation5 + $0x490] sm:$0xff]
        %v499 = vld [vmem:[#allocation5 + $0x498] sm:$0xff]
        %v500 = vld [vmem:[#allocation5 + $0x4a0] sm:$0xff]
        %v501 = vld [vmem:[#allocation5 + $0x4a8] sm:$0xff]
        %v502 = vld [vmem:[#allocation5 + $0x4b0] sm:$0xff]
        %v503 = vld [vmem:[#allocation5 + $0x4b8] sm:$0xff]
        %v504 = vld [vmem:[#allocation5 + $0x4c0] sm:$0xff]
        %v505 = vld [vmem:[#allocation5 + $0x4c8] sm:$0xff]
        %v506 = vld [vmem:[#allocation5 + $0x4d0] sm:$0xff]
        %v507 = vld [vmem:[#allocation5 + $0x4d8] sm:$0xff]
        %v508 = vld [vmem:[#allocation5 + $0x4e0] sm:$0xff]
        %v509 = vld [vmem:[#allocation5 + $0x4e8] sm:$0xff]
        %v510 = vld [vmem:[#allocation5 + $0x4f0] sm:$0xff]
        %v511 = vld [vmem:[#allocation5 + $0x4f8] sm:$0xff]
        %v512 = vld [vmem:[#allocation5 + $0x500] sm:$0xff]
        %v513 = vld [vmem:[#allocation5 + $0x508] sm:$0xff]
        %v514 = vld [vmem:[#allocation5 + $0x510] sm:$0xff]
        %v515 = vld [vmem:[#allocation5 + $0x518] sm:$0xff]
        %v516 = vld [vmem:[#allocation5 + $0x520] sm:$0xff]
        %v517 = vld [vmem:[#allocation5 + $0x528] sm:$0xff]
        %v518 = vld [vmem:[#allocation5 + $0x530] sm:$0xff]
        %v519 = vld [vmem:[#allocation5 + $0x538] sm:$0xff]
        %v520 = vld [vmem:[#allocation5 + $0x540] sm:$0xff]
        %v521 = vld [vmem:[#allocation5 + $0x548] sm:$0xff]
        %v522 = vld [vmem:[#allocation5 + $0x550] sm:$0xff]
        %v523 = vld [vmem:[#allocation5 + $0x558] sm:$0xff]
        %v524 = vld [vmem:[#allocation5 + $0x560] sm:$0xff]
        %v525 = vld [vmem:[#allocation5 + $0x568] sm:$0xff]
        %v526 = vld [vmem:[#allocation5 + $0x570] sm:$0xff]
        %v527 = vld [vmem:[#allocation5 + $0x578] sm:$0xff]
        %v528 = vld [vmem:[#allocation5 + $0x580] sm:$0xff]
        %v529 = vld [vmem:[#allocation5 + $0x588] sm:$0xff]
        %v530 = vld [vmem:[#allocation5 + $0x590] sm:$0xff]
        %v531 = vld [vmem:[#allocation5 + $0x598] sm:$0xff]
        %v532 = vld [vmem:[#allocation5 + $0x5a0] sm:$0xff]
        %v533 = vld [vmem:[#allocation5 + $0x5a8] sm:$0xff]
        %v534 = vld [vmem:[#allocation5 + $0x5b0] sm:$0xff]
        %v535 = vld [vmem:[#allocation5 + $0x5b8] sm:$0xff]
        %v536 = vld [vmem:[#allocation5 + $0x5c0] sm:$0xff]
        %v537 = vld [vmem:[#allocation5 + $0x5c8] sm:$0xff]
        %v538 = vld [vmem:[#allocation5 + $0x5d0] sm:$0xff]
        %v539 = vld [vmem:[#allocation5 + $0x5d8] sm:$0xff]
        %v540 = vld [vmem:[#allocation5 + $0x5e0] sm:$0xff]
        %v541 = vld [vmem:[#allocation5 + $0x5e8] sm:$0xff]
        %v542 = vld [vmem:[#allocation5 + $0x5f0] sm:$0xff]
        %v543 = vld [vmem:[#allocation5 + $0x5f8] sm:$0xff]
        %v544 = vld [vmem:[#allocation5 + $0x600] sm:$0xff]
        %v545 = vld [vmem:[#allocation5 + $0x608] sm:$0xff]
        %v546 = vld [vmem:[#allocation5 + $0x610] sm:$0xff]
        %v547 = vld [vmem:[#allocation5 + $0x618] sm:$0xff]
        %v548 = vld [vmem:[#allocation5 + $0x620] sm:$0xff]
        %v549 = vld [vmem:[#allocation5 + $0x628] sm:$0xff]
        %v550 = vld [vmem:[#allocation5 + $0x630] sm:$0xff]
        %v551 = vld [vmem:[#allocation5 + $0x638] sm:$0xff]
        %v552 = vld [vmem:[#allocation5 + $0x640] sm:$0xff]
        %v553 = vld [vmem:[#allocation5 + $0x648] sm:$0xff]
        %v554 = vld [vmem:[#allocation5 + $0x650] sm:$0xff]
        %v555 = vld [vmem:[#allocation5 + $0x658] sm:$0xff]
        %v556 = vld [vmem:[#allocation5 + $0x660] sm:$0xff]
        %v557 = vld [vmem:[#allocation5 + $0x668] sm:$0xff]
        %v558 = vld [vmem:[#allocation5 + $0x670] sm:$0xff]
        %v559 = vld [vmem:[#allocation5 + $0x678] sm:$0xff]
        %v560 = vld [vmem:[#allocation5 + $0x680] sm:$0xff]
        %v561 = vld [vmem:[#allocation5 + $0x688] sm:$0xff]
        %v562 = vld [vmem:[#allocation5 + $0x690] sm:$0xff]
        %v563 = vld [vmem:[#allocation5 + $0x698] sm:$0xff]
        %v564 = vld [vmem:[#allocation5 + $0x6a0] sm:$0xff]
        %v565 = vld [vmem:[#allocation5 + $0x6a8] sm:$0xff]
        %v566 = vld [vmem:[#allocation5 + $0x6b0] sm:$0xff]
        %v567 = vld [vmem:[#allocation5 + $0x6b8] sm:$0xff]
        %v568 = vld [vmem:[#allocation5 + $0x6c0] sm:$0xff]
        %v569 = vld [vmem:[#allocation5 + $0x6c8] sm:$0xff]
        %v570 = vld [vmem:[#allocation5 + $0x6d0] sm:$0xff]
        %v571 = vld [vmem:[#allocation5 + $0x6d8] sm:$0xff]
        %v572 = vld [vmem:[#allocation5 + $0x6e0] sm:$0xff]
        %v573 = vld [vmem:[#allocation5 + $0x6e8] sm:$0xff]
        %v574 = vld [vmem:[#allocation5 + $0x6f0] sm:$0xff]
        %v575 = vld [vmem:[#allocation5 + $0x6f8] sm:$0xff]
        %v576 = vld [vmem:[#allocation5 + $0x700] sm:$0xff]
        %v577 = vld [vmem:[#allocation5 + $0x708] sm:$0xff]
        %v578 = vld [vmem:[#allocation5 + $0x710] sm:$0xff]
        %v579 = vld [vmem:[#allocation5 + $0x718] sm:$0xff]
        %v580 = vld [vmem:[#allocation5 + $0x720] sm:$0xff]
        %v581 = vld [vmem:[#allocation5 + $0x728] sm:$0xff]
        %v582 = vld [vmem:[#allocation5 + $0x730] sm:$0xff]
        %v583 = vld [vmem:[#allocation5 + $0x738] sm:$0xff]
        %v584 = vld [vmem:[#allocation5 + $0x740] sm:$0xff]
        %v585 = vld [vmem:[#allocation5 + $0x748] sm:$0xff]
        %v586 = vld [vmem:[#allocation5 + $0x750] sm:$0xff]
        %v587 = vld [vmem:[#allocation5 + $0x758] sm:$0xff]
        %v588 = vld [vmem:[#allocation5 + $0x760] sm:$0xff]
        %v589 = vld [vmem:[#allocation5 + $0x768] sm:$0xff]
        %v590 = vld [vmem:[#allocation5 + $0x770] sm:$0xff]
        %v591 = vld [vmem:[#allocation5 + $0x778] sm:$0xff]
        %v592 = vld [vmem:[#allocation5 + $0x780] sm:$0xff]
        %v593 = vld [vmem:[#allocation5 + $0x788] sm:$0xff]
        %v594 = vld [vmem:[#allocation5 + $0x790] sm:$0xff]
        %v595 = vld [vmem:[#allocation5 + $0x798] sm:$0xff]
        %v596 = vld [vmem:[#allocation5 + $0x7a0] sm:$0xff]
        %v597 = vld [vmem:[#allocation5 + $0x7a8] sm:$0xff]
        %v598 = vld [vmem:[#allocation5 + $0x7b0] sm:$0xff]
        %v599 = vld [vmem:[#allocation5 + $0x7b8] sm:$0xff]
        %v600 = vld [vmem:[#allocation5 + $0x7c0] sm:$0xff]
        %v601 = vld [vmem:[#allocation5 + $0x7c8] sm:$0xff]
        %v602 = vld [vmem:[#allocation5 + $0x7d0] sm:$0xff]
        %v603 = vld [vmem:[#allocation5 + $0x7d8] sm:$0xff]
        %v604 = vld [vmem:[#allocation5 + $0x7e0] sm:$0xff]
        %v605 = vld [vmem:[#allocation5 + $0x7e8] sm:$0xff]
        %v606 = vld [vmem:[#allocation5 + $0x7f0] sm:$0xff]
        %v607 = vld [vmem:[#allocation5 + $0x7f8] sm:$0xff]
        %v608 = vld [vmem:[#allocation7] sm:$0xff]
        %v610 = vlaneseq
        %v611 = vshrl.u32 %v610, 7
        %v612 = vsub.s32 0, %v611
        %v613 = vrot.slane %v608, %v612
        %v614 = vlaneseq
        %v615 = vshrl.u32 %v614, 7
        %v616 = vsub.s32 1, %v615
        %v617 = vrot.slane %v608, %v616
        %v618 = vlaneseq
        %v619 = vshrl.u32 %v618, 7
        %v620 = vsub.s32 2, %v619
        %v621 = vrot.slane %v608, %v620
        %v622 = vlaneseq
        %v623 = vshrl.u32 %v622, 7
        %v624 = vsub.s32 3, %v623
        %v625 = vrot.slane %v608, %v624
        %v626 = vlaneseq
        %v627 = vshrl.u32 %v626, 7
        %v628 = vsub.s32 4, %v627
        %v629 = vrot.slane %v608, %v628
        %v630 = vlaneseq
        %v631 = vshrl.u32 %v630, 7
        %v632 = vsub.s32 5, %v631
        %v633 = vrot.slane %v608, %v632
        %v634 = vlaneseq
        %v635 = vshrl.u32 %v634, 7
        %v636 = vsub.s32 6, %v635
        %v637 = vrot.slane %v608, %v636
        %v638 = vlaneseq
        %v639 = vshrl.u32 %v638, 7
        %v640 = vsub.s32 7, %v639
        %v641 = vrot.slane %v608, %v640
        %650 = vmatprep.subr.mxu0 %v353
        %651 = vmatpush1.msra.mxu0 %v352
        %652 = vmatprep.subr.mxu0 %v361
        %653 = vmatpush1.msra.mxu0 %v360
        %654 = vmatprep.subr.mxu0 %v369
        %655 = vmatpush1.msra.mxu0 %v368
        %656 = vmatprep.subr.mxu0 %v377
        %657 = vmatpush1.msra.mxu0 %v376
        %658 = vmatprep.subr.mxu0 %v385
        %659 = vmatpush1.msra.mxu0 %v384
        %660 = vmatprep.subr.mxu0 %v393
        %661 = vmatpush1.msra.mxu0 %v392
        %662 = vmatprep.subr.mxu0 %v401
        %663 = vmatpush1.msra.mxu0 %v400
        %664 = vmatprep.subr.mxu0 %v409
        %665 = vmatpush1.msra.mxu0 %v408
        %666 = vmatprep.subr.mxu0 %v417
        %667 = vmatpush1.msra.mxu0 %v416
        %668 = vmatprep.subr.mxu0 %v425
        %669 = vmatpush1.msra.mxu0 %v424
        %670 = vmatprep.subr.mxu0 %v433
        %671 = vmatpush1.msra.mxu0 %v432
        %672 = vmatprep.subr.mxu0 %v441
        %673 = vmatpush1.msra.mxu0 %v440
        %674 = vmatprep.subr.mxu0 %v449
        %675 = vmatpush1.msra.mxu0 %v448
        %676 = vmatprep.subr.mxu0 %v457
        %677 = vmatpush1.msra.mxu0 %v456
        %678 = vmatprep.subr.mxu0 %v465
        %679 = vmatpush1.msra.mxu0 %v464
        %680 = vmatprep.subr.mxu0 %v473
        %681 = vmatpush1.msra.mxu0 %v472
        %682 = vmatprep.subr.mxu0 %v481
        %683 = vmatpush1.msra.mxu0 %v480
        %684 = vmatprep.subr.mxu0 %v489
        %685 = vmatpush1.msra.mxu0 %v488
        %686 = vmatprep.subr.mxu0 %v497
        %687 = vmatpush1.msra.mxu0 %v496
        %688 = vmatprep.subr.mxu0 %v505
        %689 = vmatpush1.msra.mxu0 %v504
        %690 = vmatprep.subr.mxu0 %v513
        %691 = vmatpush1.msra.mxu0 %v512
        %692 = vmatprep.subr.mxu0 %v521
        %693 = vmatpush1.msra.mxu0 %v520
        %694 = vmatprep.subr.mxu0 %v529
        %695 = vmatpush1.msra.mxu0 %v528
        %696 = vmatprep.subr.mxu0 %v537
        %697 = vmatpush1.msra.mxu0 %v536
        %698 = vmatprep.subr.mxu0 %v545
        %699 = vmatpush1.msra.mxu0 %v544
        %700 = vmatprep.subr.mxu0 %v553
        %701 = vmatpush1.msra.mxu0 %v552
        %702 = vmatprep.subr.mxu0 %v561
        %703 = vmatpush1.msra.mxu0 %v560
        %704 = vmatprep.subr.mxu0 %v569
        %705 = vmatpush1.msra.mxu0 %v568
        %706 = vmatprep.subr.mxu0 %v577
        %707 = vmatpush1.msra.mxu0 %v576
        %708 = vmatprep.subr.mxu0 %v585
        %709 = vmatpush1.msra.mxu0 %v584
        %710 = vmatprep.subr.mxu0 %v593
        %711 = vmatpush1.msra.mxu0 %v592
        %712 = vmatprep.subr.mxu0 %v601
        %713 = vmatpush1.msra.mxu0 %v600
        %714 = vmatprep.mubr.f32.mxu0 %v289
        %715 = vmatmul.mubr.f32.gmra.mrb[0].mxu0 %v288
        %v716 = vpop.f32.mrb[0].mxu0
        %v717 = vadd.f32 %v613, %v716
        %v718 = vpop.f32.mrb[0].mxu0
        %v719 = vadd.f32 %v617, %v718
        %720 = vmatprep.mubr.f32.mxu0 %v291
        %721 = vmatmul.mubr.f32.gmra.mrb[0].mxu0 %v290
        %v722 = vpop.f32.mrb[0].mxu0
        %v723 = vadd.f32 %v613, %v722
        %v724 = vpop.f32.mrb[0].mxu0
        %v725 = vadd.f32 %v617, %v724
        %726 = vmatprep.mubr.f32.mxu0 %v293
        %727 = vmatmul.mubr.f32.gmra.mrb[0].mxu0 %v292
        %v728 = vpop.f32.mrb[0].mxu0
        %v729 = vadd.f32 %v613, %v728
        %v730 = vpop.f32.mrb[0].mxu0
        %v731 = vadd.f32 %v617, %v730
        %732 = vmatprep.mubr.f32.mxu0 %v295
        %733 = vmatmul.mubr.f32.gmra.mrb[0].mxu0 %v294
        %v734 = vpop.f32.mrb[0].mxu0
        %v735 = vadd.f32 %v613, %v734
        %v736 = vpop.f32.mrb[0].mxu0
        %v737 = vadd.f32 %v617, %v736
        %738 = vmatprep.mubr.f32.mxu0 %v297
        %739 = vmatmul.mubr.f32.gmra.mrb[0].mxu0 %v296
        %v740 = vpop.f32.mrb[0].mxu0
        %v741 = vadd.f32 %v613, %v740
        %v742 = vpop.f32.mrb[0].mxu0
        %v743 = vadd.f32 %v617, %v742
        %744 = vmatprep.mubr.f32.mxu0 %v299
        %745 = vmatmul.mubr.f32.gmra.mrb[0].mxu0 %v298
        %v746 = vpop.f32.mrb[0].mxu0
        %v747 = vadd.f32 %v613, %v746
        %v748 = vpop.f32.mrb[0].mxu0
        %v749 = vadd.f32 %v617, %v748
        %750 = vmatprep.mubr.f32.mxu0 %v301
        %751 = vmatmul.mubr.f32.gmra.mrb[0].mxu0 %v300
        %v752 = vpop.f32.mrb[0].mxu0
        %v753 = vadd.f32 %v613, %v752
        %v754 = vpop.f32.mrb[0].mxu0
        %v755 = vadd.f32 %v617, %v754
        %756 = vmatprep.mubr.f32.mxu0 %v303
        %757 = vmatmul.mubr.f32.gmra.mrb[0].mxu0 %v302
        %v758 = vpop.f32.mrb[0].mxu0
        %v759 = vadd.f32 %v613, %v758
        %v760 = vpop.f32.mrb[0].mxu0
        %v761 = vadd.f32 %v617, %v760
        %762 = vmatprep.mubr.f32.mxu0 %v305
        %763 = vmatmul.mubr.f32.gmra.mrb[0].mxu0 %v304
        %v764 = vpop.f32.mrb[0].mxu0
        %v765 = vadd.f32 %v613, %v764
        %v766 = vpop.f32.mrb[0].mxu0
        %v767 = vadd.f32 %v617, %v766
        %768 = vmatprep.mubr.f32.mxu0 %v307
        %769 = vmatmul.mubr.f32.gmra.mrb[0].mxu0 %v306
        %v770 = vpop.f32.mrb[0].mxu0
        %v771 = vadd.f32 %v613, %v770
        %v772 = vpop.f32.mrb[0].mxu0
        %v773 = vadd.f32 %v617, %v772
        %774 = vmatprep.mubr.f32.mxu0 %v309
        %775 = vmatmul.mubr.f32.gmra.mrb[0].mxu0 %v308
        %v776 = vpop.f32.mrb[0].mxu0
        %v777 = vadd.f32 %v613, %v776
        %v778 = vpop.f32.mrb[0].mxu0
        %v779 = vadd.f32 %v617, %v778
        %780 = vmatprep.mubr.f32.mxu0 %v311
        %781 = vmatmul.mubr.f32.gmra.mrb[0].mxu0 %v310
        %v782 = vpop.f32.mrb[0].mxu0
        %v783 = vadd.f32 %v613, %v782
        %v784 = vpop.f32.mrb[0].mxu0
        %v785 = vadd.f32 %v617, %v784
        %786 = vmatprep.mubr.f32.mxu0 %v313
        %787 = vmatmul.mubr.f32.gmra.mrb[0].mxu0 %v312
        %v788 = vpop.f32.mrb[0].mxu0
        %v789 = vadd.f32 %v613, %v788
        %v790 = vpop.f32.mrb[0].mxu0
        %v791 = vadd.f32 %v617, %v790
        %792 = vmatprep.mubr.f32.mxu0 %v315
        %793 = vmatmul.mubr.f32.gmra.mrb[0].mxu0 %v314
        %v794 = vpop.f32.mrb[0].mxu0
        %v795 = vadd.f32 %v613, %v794
        %v796 = vpop.f32.mrb[0].mxu0
        %v797 = vadd.f32 %v617, %v796
        %798 = vmatprep.mubr.f32.mxu0 %v317
        %799 = vmatmul.mubr.f32.gmra.mrb[0].mxu0 %v316
        %v800 = vpop.f32.mrb[0].mxu0
        %v801 = vadd.f32 %v613, %v800
        %v802 = vpop.f32.mrb[0].mxu0
        %v803 = vadd.f32 %v617, %v802
        %804 = vmatprep.mubr.f32.mxu0 %v319
        %805 = vmatmul.mubr.f32.gmra.mrb[0].mxu0 %v318
        %v806 = vpop.f32.mrb[0].mxu0
        %v807 = vadd.f32 %v613, %v806
        %v808 = vpop.f32.mrb[0].mxu0
        %v809 = vadd.f32 %v617, %v808
        %810 = vmatprep.mubr.f32.mxu0 %v321
        %811 = vmatmul.mubr.f32.gmra.mrb[0].mxu0 %v320
        %v812 = vpop.f32.mrb[0].mxu0
        %v813 = vadd.f32 %v613, %v812
        %v814 = vpop.f32.mrb[0].mxu0
        %v815 = vadd.f32 %v617, %v814
        %816 = vmatprep.mubr.f32.mxu0 %v323
        %817 = vmatmul.mubr.f32.gmra.mrb[0].mxu0 %v322
        %v818 = vpop.f32.mrb[0].mxu0
        %v819 = vadd.f32 %v613, %v818
        %v820 = vpop.f32.mrb[0].mxu0
        %v821 = vadd.f32 %v617, %v820
        %822 = vmatprep.mubr.f32.mxu0 %v325
        %823 = vmatmul.mubr.f32.gmra.mrb[0].mxu0 %v324
        %v824 = vpop.f32.mrb[0].mxu0
        %v825 = vadd.f32 %v613, %v824
        %v826 = vpop.f32.mrb[0].mxu0
        %v827 = vadd.f32 %v617, %v826
        %828 = vmatprep.mubr.f32.mxu0 %v327
        %829 = vmatmul.mubr.f32.gmra.mrb[0].mxu0 %v326
        %v830 = vpop.f32.mrb[0].mxu0
        %v831 = vadd.f32 %v613, %v830
        %v832 = vpop.f32.mrb[0].mxu0
        %v833 = vadd.f32 %v617, %v832
        %834 = vmatprep.mubr.f32.mxu0 %v329
        %835 = vmatmul.mubr.f32.gmra.mrb[0].mxu0 %v328
        %v836 = vpop.f32.mrb[0].mxu0
        %v837 = vadd.f32 %v613, %v836
        %v838 = vpop.f32.mrb[0].mxu0
        %v839 = vadd.f32 %v617, %v838
        %840 = vmatprep.mubr.f32.mxu0 %v331
        %841 = vmatmul.mubr.f32.gmra.mrb[0].mxu0 %v330
        %v842 = vpop.f32.mrb[0].mxu0
        %v843 = vadd.f32 %v613, %v842
        %v844 = vpop.f32.mrb[0].mxu0
        %v845 = vadd.f32 %v617, %v844
        %846 = vmatprep.mubr.f32.mxu0 %v333
        %847 = vmatmul.mubr.f32.gmra.mrb[0].mxu0 %v332
        %v848 = vpop.f32.mrb[0].mxu0
        %v849 = vadd.f32 %v613, %v848
        %v850 = vpop.f32.mrb[0].mxu0
        %v851 = vadd.f32 %v617, %v850
        %852 = vmatprep.mubr.f32.mxu0 %v335
        %853 = vmatmul.mubr.f32.gmra.mrb[0].mxu0 %v334
        %v854 = vpop.f32.mrb[0].mxu0
        %v855 = vadd.f32 %v613, %v854
        %v856 = vpop.f32.mrb[0].mxu0
        %v857 = vadd.f32 %v617, %v856
        %858 = vmatprep.mubr.f32.mxu0 %v337
        %859 = vmatmul.mubr.f32.gmra.mrb[0].mxu0 %v336
        %v860 = vpop.f32.mrb[0].mxu0
        %v861 = vadd.f32 %v613, %v860
        %v862 = vpop.f32.mrb[0].mxu0
        %v863 = vadd.f32 %v617, %v862
        %864 = vmatprep.mubr.f32.mxu0 %v339
        %865 = vmatmul.mubr.f32.gmra.mrb[0].mxu0 %v338
        %v866 = vpop.f32.mrb[0].mxu0
        %v867 = vadd.f32 %v613, %v866
        %v868 = vpop.f32.mrb[0].mxu0
        %v869 = vadd.f32 %v617, %v868
        %870 = vmatprep.mubr.f32.mxu0 %v341
        %871 = vmatmul.mubr.f32.gmra.mrb[0].mxu0 %v340
        %v872 = vpop.f32.mrb[0].mxu0
        %v873 = vadd.f32 %v613, %v872
        %v874 = vpop.f32.mrb[0].mxu0
        %v875 = vadd.f32 %v617, %v874
        %876 = vmatprep.mubr.f32.mxu0 %v343
        %877 = vmatmul.mubr.f32.gmra.mrb[0].mxu0 %v342
        %v878 = vpop.f32.mrb[0].mxu0
        %v879 = vadd.f32 %v613, %v878
        %v880 = vpop.f32.mrb[0].mxu0
        %v881 = vadd.f32 %v617, %v880
        %882 = vmatprep.mubr.f32.mxu0 %v345
        %883 = vmatmul.mubr.f32.gmra.mrb[0].mxu0 %v344
        %v884 = vpop.f32.mrb[0].mxu0
        %v885 = vadd.f32 %v613, %v884
        %v886 = vpop.f32.mrb[0].mxu0
        %v887 = vadd.f32 %v617, %v886
        %888 = vmatprep.mubr.f32.mxu0 %v347
        %889 = vmatmul.mubr.f32.gmra.mrb[0].mxu0 %v346
        %v890 = vpop.f32.mrb[0].mxu0
        %v891 = vadd.f32 %v613, %v890
        %v892 = vpop.f32.mrb[0].mxu0
        %v893 = vadd.f32 %v617, %v892
        %894 = vmatprep.mubr.f32.mxu0 %v349
        %895 = vmatmul.mubr.f32.gmra.mrb[0].mxu0 %v348
        %v896 = vpop.f32.mrb[0].mxu0
        %v897 = vadd.f32 %v613, %v896
        %v898 = vpop.f32.mrb[0].mxu0
        %v899 = vadd.f32 %v617, %v898
        %900 = vmatprep.mubr.f32.mxu0 %v351
        %901 = vmatmul.mubr.f32.gmra.mrb[0].mxu0 %v350
        %v902 = vpop.f32.mrb[0].mxu0
        %v903 = vadd.f32 %v613, %v902
        %v904 = vpop.f32.mrb[0].mxu0
        %v905 = vadd.f32 %v617, %v904
        %906 = vdwg.mxu0
        %907 = vmatprep.subr.mxu0 %v355
        %908 = vmatpush1.msra.mxu0 %v354
        %909 = vmatprep.subr.mxu0 %v363
        %910 = vmatpush1.msra.mxu0 %v362
        %911 = vmatprep.subr.mxu0 %v371
        %912 = vmatpush1.msra.mxu0 %v370
        %913 = vmatprep.subr.mxu0 %v379
        %914 = vmatpush1.msra.mxu0 %v378
        %915 = vmatprep.subr.mxu0 %v387
        %916 = vmatpush1.msra.mxu0 %v386
        %917 = vmatprep.subr.mxu0 %v395
        %918 = vmatpush1.msra.mxu0 %v394
        %919 = vmatprep.subr.mxu0 %v403
        %920 = vmatpush1.msra.mxu0 %v402
        %921 = vmatprep.subr.mxu0 %v411
        %922 = vmatpush1.msra.mxu0 %v410
        %923 = vmatprep.subr.mxu0 %v419
        %924 = vmatpush1.msra.mxu0 %v418
        %925 = vmatprep.subr.mxu0 %v427
        %926 = vmatpush1.msra.mxu0 %v426
        %927 = vmatprep.subr.mxu0 %v435
        %928 = vmatpush1.msra.mxu0 %v434
        %929 = vmatprep.subr.mxu0 %v443
        %930 = vmatpush1.msra.mxu0 %v442
        %931 = vmatprep.subr.mxu0 %v451
        %932 = vmatpush1.msra.mxu0 %v450
        %933 = vmatprep.subr.mxu0 %v459
        %934 = vmatpush1.msra.mxu0 %v458
        %935 = vmatprep.subr.mxu0 %v467
        %936 = vmatpush1.msra.mxu0 %v466
        %937 = vmatprep.subr.mxu0 %v475
        %938 = vmatpush1.msra.mxu0 %v474
        %939 = vmatprep.subr.mxu0 %v483
        %940 = vmatpush1.msra.mxu0 %v482
        %941 = vmatprep.subr.mxu0 %v491
        %942 = vmatpush1.msra.mxu0 %v490
        %943 = vmatprep.subr.mxu0 %v499
        %944 = vmatpush1.msra.mxu0 %v498
        %945 = vmatprep.subr.mxu0 %v507
        %946 = vmatpush1.msra.mxu0 %v506
        %947 = vmatprep.subr.mxu0 %v515
        %948 = vmatpush1.msra.mxu0 %v514
        %949 = vmatprep.subr.mxu0 %v523
        %950 = vmatpush1.msra.mxu0 %v522
        %951 = vmatprep.subr.mxu0 %v531
        %952 = vmatpush1.msra.mxu0 %v530
        %953 = vmatprep.subr.mxu0 %v539
        %954 = vmatpush1.msra.mxu0 %v538
        %955 = vmatprep.subr.mxu0 %v547
        %956 = vmatpush1.msra.mxu0 %v546
        %957 = vmatprep.subr.mxu0 %v555
        %958 = vmatpush1.msra.mxu0 %v554
        %959 = vmatprep.subr.mxu0 %v563
        %960 = vmatpush1.msra.mxu0 %v562
        %961 = vmatprep.subr.mxu0 %v571
        %962 = vmatpush1.msra.mxu0 %v570
        %963 = vmatprep.subr.mxu0 %v579
        %964 = vmatpush1.msra.mxu0 %v578
        %965 = vmatprep.subr.mxu0 %v587
        %966 = vmatpush1.msra.mxu0 %v586
        %967 = vmatprep.subr.mxu0 %v595
        %968 = vmatpush1.msra.mxu0 %v594
        %969 = vmatprep.subr.mxu0 %v603
        %970 = vmatpush1.msra.mxu0 %v602
        %971 = vmatprep.mubr.f32.mxu0 %v289
        %972 = vmatmul.mubr.f32.gmra.mrb[0].mxu0 %v288
        %v973 = vpop.f32.mrb[0].mxu0
        %v974 = vadd.f32 %v621, %v973
        %v975 = vpop.f32.mrb[0].mxu0
        %v976 = vadd.f32 %v625, %v975
        %977 = vmatprep.mubr.f32.mxu0 %v291
        %978 = vmatmul.mubr.f32.gmra.mrb[0].mxu0 %v290
        %v979 = vpop.f32.mrb[0].mxu0
        %v980 = vadd.f32 %v621, %v979
        %v981 = vpop.f32.mrb[0].mxu0
        %v982 = vadd.f32 %v625, %v981
        %983 = vmatprep.mubr.f32.mxu0 %v293
        %984 = vmatmul.mubr.f32.gmra.mrb[0].mxu0 %v292
        %v985 = vpop.f32.mrb[0].mxu0
        %v986 = vadd.f32 %v621, %v985
        %v987 = vpop.f32.mrb[0].mxu0
        %v988 = vadd.f32 %v625, %v987
        %989 = vmatprep.mubr.f32.mxu0 %v295
        %990 = vmatmul.mubr.f32.gmra.mrb[0].mxu0 %v294
        %v991 = vpop.f32.mrb[0].mxu0
        %v992 = vadd.f32 %v621, %v991
        %v993 = vpop.f32.mrb[0].mxu0
        %v994 = vadd.f32 %v625, %v993
        %995 = vmatprep.mubr.f32.mxu0 %v297
        %996 = vmatmul.mubr.f32.gmra.mrb[0].mxu0 %v296
        %v997 = vpop.f32.mrb[0].mxu0
        %v998 = vadd.f32 %v621, %v997
        %v999 = vpop.f32.mrb[0].mxu0
        %v1000 = vadd.f32 %v625, %v999
        %1001 = vmatprep.mubr.f32.mxu0 %v299
        %1002 = vmatmul.mubr.f32.gmra.mrb[0].mxu0 %v298
        %v1003 = vpop.f32.mrb[0].mxu0
        %v1004 = vadd.f32 %v621, %v1003
        %v1005 = vpop.f32.mrb[0].mxu0
        %v1006 = vadd.f32 %v625, %v1005
        %1007 = vmatprep.mubr.f32.mxu0 %v301
        %1008 = vmatmul.mubr.f32.gmra.mrb[0].mxu0 %v300
        %v1009 = vpop.f32.mrb[0].mxu0
        %v1010 = vadd.f32 %v621, %v1009
        %v1011 = vpop.f32.mrb[0].mxu0
        %v1012 = vadd.f32 %v625, %v1011
        %1013 = vmatprep.mubr.f32.mxu0 %v303
        %1014 = vmatmul.mubr.f32.gmra.mrb[0].mxu0 %v302
        %v1015 = vpop.f32.mrb[0].mxu0
        %v1016 = vadd.f32 %v621, %v1015
        %v1017 = vpop.f32.mrb[0].mxu0
        %v1018 = vadd.f32 %v625, %v1017
        %1019 = vmatprep.mubr.f32.mxu0 %v305
        %1020 = vmatmul.mubr.f32.gmra.mrb[0].mxu0 %v304
        %v1021 = vpop.f32.mrb[0].mxu0
        %v1022 = vadd.f32 %v621, %v1021
        %v1023 = vpop.f32.mrb[0].mxu0
        %v1024 = vadd.f32 %v625, %v1023
        %1025 = vmatprep.mubr.f32.mxu0 %v307
        %1026 = vmatmul.mubr.f32.gmra.mrb[0].mxu0 %v306
        %v1027 = vpop.f32.mrb[0].mxu0
        %v1028 = vadd.f32 %v621, %v1027
        %v1029 = vpop.f32.mrb[0].mxu0
        %v1030 = vadd.f32 %v625, %v1029
        %1031 = vmatprep.mubr.f32.mxu0 %v309
        %1032 = vmatmul.mubr.f32.gmra.mrb[0].mxu0 %v308
        %v1033 = vpop.f32.mrb[0].mxu0
        %v1034 = vadd.f32 %v621, %v1033
        %v1035 = vpop.f32.mrb[0].mxu0
        %v1036 = vadd.f32 %v625, %v1035
        %1037 = vmatprep.mubr.f32.mxu0 %v311
        %1038 = vmatmul.mubr.f32.gmra.mrb[0].mxu0 %v310
        %v1039 = vpop.f32.mrb[0].mxu0
        %v1040 = vadd.f32 %v621, %v1039
        %v1041 = vpop.f32.mrb[0].mxu0
        %v1042 = vadd.f32 %v625, %v1041
        %1043 = vmatprep.mubr.f32.mxu0 %v313
        %1044 = vmatmul.mubr.f32.gmra.mrb[0].mxu0 %v312
        %v1045 = vpop.f32.mrb[0].mxu0
        %v1046 = vadd.f32 %v621, %v1045
        %v1047 = vpop.f32.mrb[0].mxu0
        %v1048 = vadd.f32 %v625, %v1047
        %1049 = vmatprep.mubr.f32.mxu0 %v315
        %1050 = vmatmul.mubr.f32.gmra.mrb[0].mxu0 %v314
        %v1051 = vpop.f32.mrb[0].mxu0
        %v1052 = vadd.f32 %v621, %v1051
        %v1053 = vpop.f32.mrb[0].mxu0
        %v1054 = vadd.f32 %v625, %v1053
        %1055 = vmatprep.mubr.f32.mxu0 %v317
        %1056 = vmatmul.mubr.f32.gmra.mrb[0].mxu0 %v316
        %v1057 = vpop.f32.mrb[0].mxu0
        %v1058 = vadd.f32 %v621, %v1057
        %v1059 = vpop.f32.mrb[0].mxu0
        %v1060 = vadd.f32 %v625, %v1059
        %1061 = vmatprep.mubr.f32.mxu0 %v319
        %1062 = vmatmul.mubr.f32.gmra.mrb[0].mxu0 %v318
        %v1063 = vpop.f32.mrb[0].mxu0
        %v1064 = vadd.f32 %v621, %v1063
        %v1065 = vpop.f32.mrb[0].mxu0
        %v1066 = vadd.f32 %v625, %v1065
        %1067 = vmatprep.mubr.f32.mxu0 %v321
        %1068 = vmatmul.mubr.f32.gmra.mrb[0].mxu0 %v320
        %v1069 = vpop.f32.mrb[0].mxu0
        %v1070 = vadd.f32 %v621, %v1069
        %v1071 = vpop.f32.mrb[0].mxu0
        %v1072 = vadd.f32 %v625, %v1071
        %1073 = vmatprep.mubr.f32.mxu0 %v323
        %1074 = vmatmul.mubr.f32.gmra.mrb[0].mxu0 %v322
        %v1075 = vpop.f32.mrb[0].mxu0
        %v1076 = vadd.f32 %v621, %v1075
        %v1077 = vpop.f32.mrb[0].mxu0
        %v1078 = vadd.f32 %v625, %v1077
        %1079 = vmatprep.mubr.f32.mxu0 %v325
        %1080 = vmatmul.mubr.f32.gmra.mrb[0].mxu0 %v324
        %v1081 = vpop.f32.mrb[0].mxu0
        %v1082 = vadd.f32 %v621, %v1081
        %v1083 = vpop.f32.mrb[0].mxu0
        %v1084 = vadd.f32 %v625, %v1083
        %1085 = vmatprep.mubr.f32.mxu0 %v327
        %1086 = vmatmul.mubr.f32.gmra.mrb[0].mxu0 %v326
        %v1087 = vpop.f32.mrb[0].mxu0
        %v1088 = vadd.f32 %v621, %v1087
        %v1089 = vpop.f32.mrb[0].mxu0
        %v1090 = vadd.f32 %v625, %v1089
        %1091 = vmatprep.mubr.f32.mxu0 %v329
        %1092 = vmatmul.mubr.f32.gmra.mrb[0].mxu0 %v328
        %v1093 = vpop.f32.mrb[0].mxu0
        %v1094 = vadd.f32 %v621, %v1093
        %v1095 = vpop.f32.mrb[0].mxu0
        %v1096 = vadd.f32 %v625, %v1095
        %1097 = vmatprep.mubr.f32.mxu0 %v331
        %1098 = vmatmul.mubr.f32.gmra.mrb[0].mxu0 %v330
        %v1099 = vpop.f32.mrb[0].mxu0
        %v1100 = vadd.f32 %v621, %v1099
        %v1101 = vpop.f32.mrb[0].mxu0
        %v1102 = vadd.f32 %v625, %v1101
        %1103 = vmatprep.mubr.f32.mxu0 %v333
        %1104 = vmatmul.mubr.f32.gmra.mrb[0].mxu0 %v332
        %v1105 = vpop.f32.mrb[0].mxu0
        %v1106 = vadd.f32 %v621, %v1105
        %v1107 = vpop.f32.mrb[0].mxu0
        %v1108 = vadd.f32 %v625, %v1107
        %1109 = vmatprep.mubr.f32.mxu0 %v335
        %1110 = vmatmul.mubr.f32.gmra.mrb[0].mxu0 %v334
        %v1111 = vpop.f32.mrb[0].mxu0
        %v1112 = vadd.f32 %v621, %v1111
        %v1113 = vpop.f32.mrb[0].mxu0
        %v1114 = vadd.f32 %v625, %v1113
        %1115 = vmatprep.mubr.f32.mxu0 %v337
        %1116 = vmatmul.mubr.f32.gmra.mrb[0].mxu0 %v336
        %v1117 = vpop.f32.mrb[0].mxu0
        %v1118 = vadd.f32 %v621, %v1117
        %v1119 = vpop.f32.mrb[0].mxu0
        %v1120 = vadd.f32 %v625, %v1119
        %1121 = vmatprep.mubr.f32.mxu0 %v339
        %1122 = vmatmul.mubr.f32.gmra.mrb[0].mxu0 %v338
        %v1123 = vpop.f32.mrb[0].mxu0
        %v1124 = vadd.f32 %v621, %v1123
        %v1125 = vpop.f32.mrb[0].mxu0
        %v1126 = vadd.f32 %v625, %v1125
        %1127 = vmatprep.mubr.f32.mxu0 %v341
        %1128 = vmatmul.mubr.f32.gmra.mrb[0].mxu0 %v340
        %v1129 = vpop.f32.mrb[0].mxu0
        %v1130 = vadd.f32 %v621, %v1129
        %v1131 = vpop.f32.mrb[0].mxu0
        %v1132 = vadd.f32 %v625, %v1131
        %1133 = vmatprep.mubr.f32.mxu0 %v343
        %1134 = vmatmul.mubr.f32.gmra.mrb[0].mxu0 %v342
        %v1135 = vpop.f32.mrb[0].mxu0
        %v1136 = vadd.f32 %v621, %v1135
        %v1137 = vpop.f32.mrb[0].mxu0
        %v1138 = vadd.f32 %v625, %v1137
        %1139 = vmatprep.mubr.f32.mxu0 %v345
        %1140 = vmatmul.mubr.f32.gmra.mrb[0].mxu0 %v344
        %v1141 = vpop.f32.mrb[0].mxu0
        %v1142 = vadd.f32 %v621, %v1141
        %v1143 = vpop.f32.mrb[0].mxu0
        %v1144 = vadd.f32 %v625, %v1143
        %1145 = vmatprep.mubr.f32.mxu0 %v347
        %1146 = vmatmul.mubr.f32.gmra.mrb[0].mxu0 %v346
        %v1147 = vpop.f32.mrb[0].mxu0
        %v1148 = vadd.f32 %v621, %v1147
        %v1149 = vpop.f32.mrb[0].mxu0
        %v1150 = vadd.f32 %v625, %v1149
        %1151 = vmatprep.mubr.f32.mxu0 %v349
        %1152 = vmatmul.mubr.f32.gmra.mrb[0].mxu0 %v348
        %v1153 = vpop.f32.mrb[0].mxu0
        %v1154 = vadd.f32 %v621, %v1153
        %v1155 = vpop.f32.mrb[0].mxu0
        %v1156 = vadd.f32 %v625, %v1155
        %1157 = vmatprep.mubr.f32.mxu0 %v351
        %1158 = vmatmul.mubr.f32.gmra.mrb[0].mxu0 %v350
        %v1159 = vpop.f32.mrb[0].mxu0
        %v1160 = vadd.f32 %v621, %v1159
        %v1161 = vpop.f32.mrb[0].mxu0
        %v1162 = vadd.f32 %v625, %v1161
        %1163 = vdwg.mxu0
        %1164 = vmatprep.subr.mxu0 %v357
        %1165 = vmatpush1.msra.mxu0 %v356
        %1166 = vmatprep.subr.mxu0 %v365
        %1167 = vmatpush1.msra.mxu0 %v364
        %1168 = vmatprep.subr.mxu0 %v373
        %1169 = vmatpush1.msra.mxu0 %v372
        %1170 = vmatprep.subr.mxu0 %v381
        %1171 = vmatpush1.msra.mxu0 %v380
        %1172 = vmatprep.subr.mxu0 %v389
        %1173 = vmatpush1.msra.mxu0 %v388
        %1174 = vmatprep.subr.mxu0 %v397
        %1175 = vmatpush1.msra.mxu0 %v396
        %1176 = vmatprep.subr.mxu0 %v405
        %1177 = vmatpush1.msra.mxu0 %v404
        %1178 = vmatprep.subr.mxu0 %v413
        %1179 = vmatpush1.msra.mxu0 %v412
        %1180 = vmatprep.subr.mxu0 %v421
        %1181 = vmatpush1.msra.mxu0 %v420
        %1182 = vmatprep.subr.mxu0 %v429
        %1183 = vmatpush1.msra.mxu0 %v428
        %1184 = vmatprep.subr.mxu0 %v437
        %1185 = vmatpush1.msra.mxu0 %v436
        %1186 = vmatprep.subr.mxu0 %v445
        %1187 = vmatpush1.msra.mxu0 %v444
        %1188 = vmatprep.subr.mxu0 %v453
        %1189 = vmatpush1.msra.mxu0 %v452
        %1190 = vmatprep.subr.mxu0 %v461
        %1191 = vmatpush1.msra.mxu0 %v460
        %1192 = vmatprep.subr.mxu0 %v469
        %1193 = vmatpush1.msra.mxu0 %v468
        %1194 = vmatprep.subr.mxu0 %v477
        %1195 = vmatpush1.msra.mxu0 %v476
        %1196 = vmatprep.subr.mxu0 %v485
        %1197 = vmatpush1.msra.mxu0 %v484
        %1198 = vmatprep.subr.mxu0 %v493
        %1199 = vmatpush1.msra.mxu0 %v492
        %1200 = vmatprep.subr.mxu0 %v501
        %1201 = vmatpush1.msra.mxu0 %v500
        %1202 = vmatprep.subr.mxu0 %v509
        %1203 = vmatpush1.msra.mxu0 %v508
        %1204 = vmatprep.subr.mxu0 %v517
        %1205 = vmatpush1.msra.mxu0 %v516
        %1206 = vmatprep.subr.mxu0 %v525
        %1207 = vmatpush1.msra.mxu0 %v524
        %1208 = vmatprep.subr.mxu0 %v533
        %1209 = vmatpush1.msra.mxu0 %v532
        %1210 = vmatprep.subr.mxu0 %v541
        %1211 = vmatpush1.msra.mxu0 %v540
        %1212 = vmatprep.subr.mxu0 %v549
        %1213 = vmatpush1.msra.mxu0 %v548
        %1214 = vmatprep.subr.mxu0 %v557
        %1215 = vmatpush1.msra.mxu0 %v556
        %1216 = vmatprep.subr.mxu0 %v565
        %1217 = vmatpush1.msra.mxu0 %v564
        %1218 = vmatprep.subr.mxu0 %v573
        %1219 = vmatpush1.msra.mxu0 %v572
        %1220 = vmatprep.subr.mxu0 %v581
        %1221 = vmatpush1.msra.mxu0 %v580
        %1222 = vmatprep.subr.mxu0 %v589
        %1223 = vmatpush1.msra.mxu0 %v588
        %1224 = vmatprep.subr.mxu0 %v597
        %1225 = vmatpush1.msra.mxu0 %v596
        %1226 = vmatprep.subr.mxu0 %v605
        %1227 = vmatpush1.msra.mxu0 %v604
        %1228 = vmatprep.mubr.f32.mxu0 %v289
        %1229 = vmatmul.mubr.f32.gmra.mrb[0].mxu0 %v288
        %v1230 = vpop.f32.mrb[0].mxu0
        %v1231 = vadd.f32 %v629, %v1230
        %v1232 = vpop.f32.mrb[0].mxu0
        %v1233 = vadd.f32 %v633, %v1232
        %1234 = vmatprep.mubr.f32.mxu0 %v291
        %1235 = vmatmul.mubr.f32.gmra.mrb[0].mxu0 %v290
        %v1236 = vpop.f32.mrb[0].mxu0
        %v1237 = vadd.f32 %v629, %v1236
        %v1238 = vpop.f32.mrb[0].mxu0
        %v1239 = vadd.f32 %v633, %v1238
        %1240 = vmatprep.mubr.f32.mxu0 %v293
        %1241 = vmatmul.mubr.f32.gmra.mrb[0].mxu0 %v292
        %v1242 = vpop.f32.mrb[0].mxu0
        %v1243 = vadd.f32 %v629, %v1242
        %v1244 = vpop.f32.mrb[0].mxu0
        %v1245 = vadd.f32 %v633, %v1244
        %1246 = vmatprep.mubr.f32.mxu0 %v295
        %1247 = vmatmul.mubr.f32.gmra.mrb[0].mxu0 %v294
        %v1248 = vpop.f32.mrb[0].mxu0
        %v1249 = vadd.f32 %v629, %v1248
        %v1250 = vpop.f32.mrb[0].mxu0
        %v1251 = vadd.f32 %v633, %v1250
        %1252 = vmatprep.mubr.f32.mxu0 %v297
        %1253 = vmatmul.mubr.f32.gmra.mrb[0].mxu0 %v296
        %v1254 = vpop.f32.mrb[0].mxu0
        %v1255 = vadd.f32 %v629, %v1254
        %v1256 = vpop.f32.mrb[0].mxu0
        %v1257 = vadd.f32 %v633, %v1256
        %1258 = vmatprep.mubr.f32.mxu0 %v299
        %1259 = vmatmul.mubr.f32.gmra.mrb[0].mxu0 %v298
        %v1260 = vpop.f32.mrb[0].mxu0
        %v1261 = vadd.f32 %v629, %v1260
        %v1262 = vpop.f32.mrb[0].mxu0
        %v1263 = vadd.f32 %v633, %v1262
        %1264 = vmatprep.mubr.f32.mxu0 %v301
        %1265 = vmatmul.mubr.f32.gmra.mrb[0].mxu0 %v300
        %v1266 = vpop.f32.mrb[0].mxu0
        %v1267 = vadd.f32 %v629, %v1266
        %v1268 = vpop.f32.mrb[0].mxu0
        %v1269 = vadd.f32 %v633, %v1268
        %1270 = vmatprep.mubr.f32.mxu0 %v303
        %1271 = vmatmul.mubr.f32.gmra.mrb[0].mxu0 %v302
        %v1272 = vpop.f32.mrb[0].mxu0
        %v1273 = vadd.f32 %v629, %v1272
        %v1274 = vpop.f32.mrb[0].mxu0
        %v1275 = vadd.f32 %v633, %v1274
        %1276 = vmatprep.mubr.f32.mxu0 %v305
        %1277 = vmatmul.mubr.f32.gmra.mrb[0].mxu0 %v304
        %v1278 = vpop.f32.mrb[0].mxu0
        %v1279 = vadd.f32 %v629, %v1278
        %v1280 = vpop.f32.mrb[0].mxu0
        %v1281 = vadd.f32 %v633, %v1280
        %1282 = vmatprep.mubr.f32.mxu0 %v307
        %1283 = vmatmul.mubr.f32.gmra.mrb[0].mxu0 %v306
        %v1284 = vpop.f32.mrb[0].mxu0
        %v1285 = vadd.f32 %v629, %v1284
        %v1286 = vpop.f32.mrb[0].mxu0
        %v1287 = vadd.f32 %v633, %v1286
        %1288 = vmatprep.mubr.f32.mxu0 %v309
        %1289 = vmatmul.mubr.f32.gmra.mrb[0].mxu0 %v308
        %v1290 = vpop.f32.mrb[0].mxu0
        %v1291 = vadd.f32 %v629, %v1290
        %v1292 = vpop.f32.mrb[0].mxu0
        %v1293 = vadd.f32 %v633, %v1292
        %1294 = vmatprep.mubr.f32.mxu0 %v311
        %1295 = vmatmul.mubr.f32.gmra.mrb[0].mxu0 %v310
        %v1296 = vpop.f32.mrb[0].mxu0
        %v1297 = vadd.f32 %v629, %v1296
        %v1298 = vpop.f32.mrb[0].mxu0
        %v1299 = vadd.f32 %v633, %v1298
        %1300 = vmatprep.mubr.f32.mxu0 %v313
        %1301 = vmatmul.mubr.f32.gmra.mrb[0].mxu0 %v312
        %v1302 = vpop.f32.mrb[0].mxu0
        %v1303 = vadd.f32 %v629, %v1302
        %v1304 = vpop.f32.mrb[0].mxu0
        %v1305 = vadd.f32 %v633, %v1304
        %1306 = vmatprep.mubr.f32.mxu0 %v315
        %1307 = vmatmul.mubr.f32.gmra.mrb[0].mxu0 %v314
        %v1308 = vpop.f32.mrb[0].mxu0
        %v1309 = vadd.f32 %v629, %v1308
        %v1310 = vpop.f32.mrb[0].mxu0
        %v1311 = vadd.f32 %v633, %v1310
        %1312 = vmatprep.mubr.f32.mxu0 %v317
        %1313 = vmatmul.mubr.f32.gmra.mrb[0].mxu0 %v316
        %v1314 = vpop.f32.mrb[0].mxu0
        %v1315 = vadd.f32 %v629, %v1314
        %v1316 = vpop.f32.mrb[0].mxu0
        %v1317 = vadd.f32 %v633, %v1316
        %1318 = vmatprep.mubr.f32.mxu0 %v319
        %1319 = vmatmul.mubr.f32.gmra.mrb[0].mxu0 %v318
        %v1320 = vpop.f32.mrb[0].mxu0
        %v1321 = vadd.f32 %v629, %v1320
        %v1322 = vpop.f32.mrb[0].mxu0
        %v1323 = vadd.f32 %v633, %v1322
        %1324 = vmatprep.mubr.f32.mxu0 %v321
        %1325 = vmatmul.mubr.f32.gmra.mrb[0].mxu0 %v320
        %v1326 = vpop.f32.mrb[0].mxu0
        %v1327 = vadd.f32 %v629, %v1326
        %v1328 = vpop.f32.mrb[0].mxu0
        %v1329 = vadd.f32 %v633, %v1328
        %1330 = vmatprep.mubr.f32.mxu0 %v323
        %1331 = vmatmul.mubr.f32.gmra.mrb[0].mxu0 %v322
        %v1332 = vpop.f32.mrb[0].mxu0
        %v1333 = vadd.f32 %v629, %v1332
        %v1334 = vpop.f32.mrb[0].mxu0
        %v1335 = vadd.f32 %v633, %v1334
        %1336 = vmatprep.mubr.f32.mxu0 %v325
        %1337 = vmatmul.mubr.f32.gmra.mrb[0].mxu0 %v324
        %v1338 = vpop.f32.mrb[0].mxu0
        %v1339 = vadd.f32 %v629, %v1338
        %v1340 = vpop.f32.mrb[0].mxu0
        %v1341 = vadd.f32 %v633, %v1340
        %1342 = vmatprep.mubr.f32.mxu0 %v327
        %1343 = vmatmul.mubr.f32.gmra.mrb[0].mxu0 %v326
        %v1344 = vpop.f32.mrb[0].mxu0
        %v1345 = vadd.f32 %v629, %v1344
        %v1346 = vpop.f32.mrb[0].mxu0
        %v1347 = vadd.f32 %v633, %v1346
        %1348 = vmatprep.mubr.f32.mxu0 %v329
        %1349 = vmatmul.mubr.f32.gmra.mrb[0].mxu0 %v328
        %v1350 = vpop.f32.mrb[0].mxu0
        %v1351 = vadd.f32 %v629, %v1350
        %v1352 = vpop.f32.mrb[0].mxu0
        %v1353 = vadd.f32 %v633, %v1352
        %1354 = vmatprep.mubr.f32.mxu0 %v331
        %1355 = vmatmul.mubr.f32.gmra.mrb[0].mxu0 %v330
        %v1356 = vpop.f32.mrb[0].mxu0
        %v1357 = vadd.f32 %v629, %v1356
        %v1358 = vpop.f32.mrb[0].mxu0
        %v1359 = vadd.f32 %v633, %v1358
        %1360 = vmatprep.mubr.f32.mxu0 %v333
        %1361 = vmatmul.mubr.f32.gmra.mrb[0].mxu0 %v332
        %v1362 = vpop.f32.mrb[0].mxu0
        %v1363 = vadd.f32 %v629, %v1362
        %v1364 = vpop.f32.mrb[0].mxu0
        %v1365 = vadd.f32 %v633, %v1364
        %1366 = vmatprep.mubr.f32.mxu0 %v335
        %1367 = vmatmul.mubr.f32.gmra.mrb[0].mxu0 %v334
        %v1368 = vpop.f32.mrb[0].mxu0
        %v1369 = vadd.f32 %v629, %v1368
        %v1370 = vpop.f32.mrb[0].mxu0
        %v1371 = vadd.f32 %v633, %v1370
        %1372 = vmatprep.mubr.f32.mxu0 %v337
        %1373 = vmatmul.mubr.f32.gmra.mrb[0].mxu0 %v336
        %v1374 = vpop.f32.mrb[0].mxu0
        %v1375 = vadd.f32 %v629, %v1374
        %v1376 = vpop.f32.mrb[0].mxu0
        %v1377 = vadd.f32 %v633, %v1376
        %1378 = vmatprep.mubr.f32.mxu0 %v339
        %1379 = vmatmul.mubr.f32.gmra.mrb[0].mxu0 %v338
        %v1380 = vpop.f32.mrb[0].mxu0
        %v1381 = vadd.f32 %v629, %v1380
        %v1382 = vpop.f32.mrb[0].mxu0
        %v1383 = vadd.f32 %v633, %v1382
        %1384 = vmatprep.mubr.f32.mxu0 %v341
        %1385 = vmatmul.mubr.f32.gmra.mrb[0].mxu0 %v340
        %v1386 = vpop.f32.mrb[0].mxu0
        %v1387 = vadd.f32 %v629, %v1386
        %v1388 = vpop.f32.mrb[0].mxu0
        %v1389 = vadd.f32 %v633, %v1388
        %1390 = vmatprep.mubr.f32.mxu0 %v343
        %1391 = vmatmul.mubr.f32.gmra.mrb[0].mxu0 %v342
        %v1392 = vpop.f32.mrb[0].mxu0
        %v1393 = vadd.f32 %v629, %v1392
        %v1394 = vpop.f32.mrb[0].mxu0
        %v1395 = vadd.f32 %v633, %v1394
        %1396 = vmatprep.mubr.f32.mxu0 %v345
        %1397 = vmatmul.mubr.f32.gmra.mrb[0].mxu0 %v344
        %v1398 = vpop.f32.mrb[0].mxu0
        %v1399 = vadd.f32 %v629, %v1398
        %v1400 = vpop.f32.mrb[0].mxu0
        %v1401 = vadd.f32 %v633, %v1400
        %1402 = vmatprep.mubr.f32.mxu0 %v347
        %1403 = vmatmul.mubr.f32.gmra.mrb[0].mxu0 %v346
        %v1404 = vpop.f32.mrb[0].mxu0
        %v1405 = vadd.f32 %v629, %v1404
        %v1406 = vpop.f32.mrb[0].mxu0
        %v1407 = vadd.f32 %v633, %v1406
        %1408 = vmatprep.mubr.f32.mxu0 %v349
        %1409 = vmatmul.mubr.f32.gmra.mrb[0].mxu0 %v348
        %v1410 = vpop.f32.mrb[0].mxu0
        %v1411 = vadd.f32 %v629, %v1410
        %v1412 = vpop.f32.mrb[0].mxu0
        %v1413 = vadd.f32 %v633, %v1412
        %1414 = vmatprep.mubr.f32.mxu0 %v351
        %1415 = vmatmul.mubr.f32.gmra.mrb[0].mxu0 %v350
        %v1416 = vpop.f32.mrb[0].mxu0
        %v1417 = vadd.f32 %v629, %v1416
        %v1418 = vpop.f32.mrb[0].mxu0
        %v1419 = vadd.f32 %v633, %v1418
        %1420 = vdwg.mxu0
        %1421 = vmatprep.subr.mxu0 %v359
        %1422 = vmatpush1.msra.mxu0 %v358
        %1423 = vmatprep.subr.mxu0 %v367
        %1424 = vmatpush1.msra.mxu0 %v366
        %1425 = vmatprep.subr.mxu0 %v375
        %1426 = vmatpush1.msra.mxu0 %v374
        %1427 = vmatprep.subr.mxu0 %v383
        %1428 = vmatpush1.msra.mxu0 %v382
        %1429 = vmatprep.subr.mxu0 %v391
        %1430 = vmatpush1.msra.mxu0 %v390
        %1431 = vmatprep.subr.mxu0 %v399
        %1432 = vmatpush1.msra.mxu0 %v398
        %1433 = vmatprep.subr.mxu0 %v407
        %1434 = vmatpush1.msra.mxu0 %v406
        %1435 = vmatprep.subr.mxu0 %v415
        %1436 = vmatpush1.msra.mxu0 %v414
        %1437 = vmatprep.subr.mxu0 %v423
        %1438 = vmatpush1.msra.mxu0 %v422
        %1439 = vmatprep.subr.mxu0 %v431
        %1440 = vmatpush1.msra.mxu0 %v430
        %1441 = vmatprep.subr.mxu0 %v439
        %1442 = vmatpush1.msra.mxu0 %v438
        %1443 = vmatprep.subr.mxu0 %v447
        %1444 = vmatpush1.msra.mxu0 %v446
        %1445 = vmatprep.subr.mxu0 %v455
        %1446 = vmatpush1.msra.mxu0 %v454
        %1447 = vmatprep.subr.mxu0 %v463
        %1448 = vmatpush1.msra.mxu0 %v462
        %1449 = vmatprep.subr.mxu0 %v471
        %1450 = vmatpush1.msra.mxu0 %v470
        %1451 = vmatprep.subr.mxu0 %v479
        %1452 = vmatpush1.msra.mxu0 %v478
        %1453 = vmatprep.subr.mxu0 %v487
        %1454 = vmatpush1.msra.mxu0 %v486
        %1455 = vmatprep.subr.mxu0 %v495
        %1456 = vmatpush1.msra.mxu0 %v494
        %1457 = vmatprep.subr.mxu0 %v503
        %1458 = vmatpush1.msra.mxu0 %v502
        %1459 = vmatprep.subr.mxu0 %v511
        %1460 = vmatpush1.msra.mxu0 %v510
        %1461 = vmatprep.subr.mxu0 %v519
        %1462 = vmatpush1.msra.mxu0 %v518
        %1463 = vmatprep.subr.mxu0 %v527
        %1464 = vmatpush1.msra.mxu0 %v526
        %1465 = vmatprep.subr.mxu0 %v535
        %1466 = vmatpush1.msra.mxu0 %v534
        %1467 = vmatprep.subr.mxu0 %v543
        %1468 = vmatpush1.msra.mxu0 %v542
        %1469 = vmatprep.subr.mxu0 %v551
        %1470 = vmatpush1.msra.mxu0 %v550
        %1471 = vmatprep.subr.mxu0 %v559
        %1472 = vmatpush1.msra.mxu0 %v558
        %1473 = vmatprep.subr.mxu0 %v567
        %1474 = vmatpush1.msra.mxu0 %v566
        %1475 = vmatprep.subr.mxu0 %v575
        %1476 = vmatpush1.msra.mxu0 %v574
        %1477 = vmatprep.subr.mxu0 %v583
        %1478 = vmatpush1.msra.mxu0 %v582
        %1479 = vmatprep.subr.mxu0 %v591
        %1480 = vmatpush1.msra.mxu0 %v590
        %1481 = vmatprep.subr.mxu0 %v599
        %1482 = vmatpush1.msra.mxu0 %v598
        %1483 = vmatprep.subr.mxu0 %v607
        %1484 = vmatpush1.msra.mxu0 %v606
        %1485 = vmatprep.mubr.f32.mxu0 %v289
        %1486 = vmatmul.mubr.f32.gmra.mrb[0].mxu0 %v288
        %v1487 = vpop.f32.mrb[0].mxu0
        %v1488 = vadd.f32 %v637, %v1487
        %v1489 = vpop.f32.mrb[0].mxu0
        %v1490 = vadd.f32 %v641, %v1489
        %1491 = vmatprep.mubr.f32.mxu0 %v291
        %1492 = vmatmul.mubr.f32.gmra.mrb[0].mxu0 %v290
        %v1493 = vpop.f32.mrb[0].mxu0
        %v1494 = vadd.f32 %v637, %v1493
        %v1495 = vpop.f32.mrb[0].mxu0
        %v1496 = vadd.f32 %v641, %v1495
        %1497 = vmatprep.mubr.f32.mxu0 %v293
        %1498 = vmatmul.mubr.f32.gmra.mrb[0].mxu0 %v292
        %v1499 = vpop.f32.mrb[0].mxu0
        %v1500 = vadd.f32 %v637, %v1499
        %v1501 = vpop.f32.mrb[0].mxu0
        %v1502 = vadd.f32 %v641, %v1501
        %1503 = vmatprep.mubr.f32.mxu0 %v295
        %1504 = vmatmul.mubr.f32.gmra.mrb[0].mxu0 %v294
        %v1505 = vpop.f32.mrb[0].mxu0
        %v1506 = vadd.f32 %v637, %v1505
        %v1507 = vpop.f32.mrb[0].mxu0
        %v1508 = vadd.f32 %v641, %v1507
        %1509 = vmatprep.mubr.f32.mxu0 %v297
        %1510 = vmatmul.mubr.f32.gmra.mrb[0].mxu0 %v296
        %v1511 = vpop.f32.mrb[0].mxu0
        %v1512 = vadd.f32 %v637, %v1511
        %v1513 = vpop.f32.mrb[0].mxu0
        %v1514 = vadd.f32 %v641, %v1513
        %1515 = vmatprep.mubr.f32.mxu0 %v299
        %1516 = vmatmul.mubr.f32.gmra.mrb[0].mxu0 %v298
        %v1517 = vpop.f32.mrb[0].mxu0
        %v1518 = vadd.f32 %v637, %v1517
        %v1519 = vpop.f32.mrb[0].mxu0
        %v1520 = vadd.f32 %v641, %v1519
        %1521 = vmatprep.mubr.f32.mxu0 %v301
        %1522 = vmatmul.mubr.f32.gmra.mrb[0].mxu0 %v300
        %v1523 = vpop.f32.mrb[0].mxu0
        %v1524 = vadd.f32 %v637, %v1523
        %v1525 = vpop.f32.mrb[0].mxu0
        %v1526 = vadd.f32 %v641, %v1525
        %1527 = vmatprep.mubr.f32.mxu0 %v303
        %1528 = vmatmul.mubr.f32.gmra.mrb[0].mxu0 %v302
        %v1529 = vpop.f32.mrb[0].mxu0
        %v1530 = vadd.f32 %v637, %v1529
        %v1531 = vpop.f32.mrb[0].mxu0
        %v1532 = vadd.f32 %v641, %v1531
        %1533 = vmatprep.mubr.f32.mxu0 %v305
        %1534 = vmatmul.mubr.f32.gmra.mrb[0].mxu0 %v304
        %v1535 = vpop.f32.mrb[0].mxu0
        %v1536 = vadd.f32 %v637, %v1535
        %v1537 = vpop.f32.mrb[0].mxu0
        %v1538 = vadd.f32 %v641, %v1537
        %1539 = vmatprep.mubr.f32.mxu0 %v307
        %1540 = vmatmul.mubr.f32.gmra.mrb[0].mxu0 %v306
        %v1541 = vpop.f32.mrb[0].mxu0
        %v1542 = vadd.f32 %v637, %v1541
        %v1543 = vpop.f32.mrb[0].mxu0
        %v1544 = vadd.f32 %v641, %v1543
        %1545 = vmatprep.mubr.f32.mxu0 %v309
        %1546 = vmatmul.mubr.f32.gmra.mrb[0].mxu0 %v308
        %v1547 = vpop.f32.mrb[0].mxu0
        %v1548 = vadd.f32 %v637, %v1547
        %v1549 = vpop.f32.mrb[0].mxu0
        %v1550 = vadd.f32 %v641, %v1549
        %1551 = vmatprep.mubr.f32.mxu0 %v311
        %1552 = vmatmul.mubr.f32.gmra.mrb[0].mxu0 %v310
        %v1553 = vpop.f32.mrb[0].mxu0
        %v1554 = vadd.f32 %v637, %v1553
        %v1555 = vpop.f32.mrb[0].mxu0
        %v1556 = vadd.f32 %v641, %v1555
        %1557 = vmatprep.mubr.f32.mxu0 %v313
        %1558 = vmatmul.mubr.f32.gmra.mrb[0].mxu0 %v312
        %v1559 = vpop.f32.mrb[0].mxu0
        %v1560 = vadd.f32 %v637, %v1559
        %v1561 = vpop.f32.mrb[0].mxu0
        %v1562 = vadd.f32 %v641, %v1561
        %1563 = vmatprep.mubr.f32.mxu0 %v315
        %1564 = vmatmul.mubr.f32.gmra.mrb[0].mxu0 %v314
        %v1565 = vpop.f32.mrb[0].mxu0
        %v1566 = vadd.f32 %v637, %v1565
        %v1567 = vpop.f32.mrb[0].mxu0
        %v1568 = vadd.f32 %v641, %v1567
        %1569 = vmatprep.mubr.f32.mxu0 %v317
        %1570 = vmatmul.mubr.f32.gmra.mrb[0].mxu0 %v316
        %v1571 = vpop.f32.mrb[0].mxu0
        %v1572 = vadd.f32 %v637, %v1571
        %v1573 = vpop.f32.mrb[0].mxu0
        %v1574 = vadd.f32 %v641, %v1573
        %1575 = vmatprep.mubr.f32.mxu0 %v319
        %1576 = vmatmul.mubr.f32.gmra.mrb[0].mxu0 %v318
        %v1577 = vpop.f32.mrb[0].mxu0
        %v1578 = vadd.f32 %v637, %v1577
        %v1579 = vpop.f32.mrb[0].mxu0
        %v1580 = vadd.f32 %v641, %v1579
        %1581 = vmatprep.mubr.f32.mxu0 %v321
        %1582 = vmatmul.mubr.f32.gmra.mrb[0].mxu0 %v320
        %v1583 = vpop.f32.mrb[0].mxu0
        %v1584 = vadd.f32 %v637, %v1583
        %v1585 = vpop.f32.mrb[0].mxu0
        %v1586 = vadd.f32 %v641, %v1585
        %1587 = vmatprep.mubr.f32.mxu0 %v323
        %1588 = vmatmul.mubr.f32.gmra.mrb[0].mxu0 %v322
        %v1589 = vpop.f32.mrb[0].mxu0
        %v1590 = vadd.f32 %v637, %v1589
        %v1591 = vpop.f32.mrb[0].mxu0
        %v1592 = vadd.f32 %v641, %v1591
        %1593 = vmatprep.mubr.f32.mxu0 %v325
        %1594 = vmatmul.mubr.f32.gmra.mrb[0].mxu0 %v324
        %v1595 = vpop.f32.mrb[0].mxu0
        %v1596 = vadd.f32 %v637, %v1595
        %v1597 = vpop.f32.mrb[0].mxu0
        %v1598 = vadd.f32 %v641, %v1597
        %1599 = vmatprep.mubr.f32.mxu0 %v327
        %1600 = vmatmul.mubr.f32.gmra.mrb[0].mxu0 %v326
        %v1601 = vpop.f32.mrb[0].mxu0
        %v1602 = vadd.f32 %v637, %v1601
        %v1603 = vpop.f32.mrb[0].mxu0
        %v1604 = vadd.f32 %v641, %v1603
        %1605 = vmatprep.mubr.f32.mxu0 %v329
        %1606 = vmatmul.mubr.f32.gmra.mrb[0].mxu0 %v328
        %v1607 = vpop.f32.mrb[0].mxu0
        %v1608 = vadd.f32 %v637, %v1607
        %v1609 = vpop.f32.mrb[0].mxu0
        %v1610 = vadd.f32 %v641, %v1609
        %1611 = vmatprep.mubr.f32.mxu0 %v331
        %1612 = vmatmul.mubr.f32.gmra.mrb[0].mxu0 %v330
        %v1613 = vpop.f32.mrb[0].mxu0
        %v1614 = vadd.f32 %v637, %v1613
        %v1615 = vpop.f32.mrb[0].mxu0
        %v1616 = vadd.f32 %v641, %v1615
        %1617 = vmatprep.mubr.f32.mxu0 %v333
        %1618 = vmatmul.mubr.f32.gmra.mrb[0].mxu0 %v332
        %v1619 = vpop.f32.mrb[0].mxu0
        %v1620 = vadd.f32 %v637, %v1619
        %v1621 = vpop.f32.mrb[0].mxu0
        %v1622 = vadd.f32 %v641, %v1621
        %1623 = vmatprep.mubr.f32.mxu0 %v335
        %1624 = vmatmul.mubr.f32.gmra.mrb[0].mxu0 %v334
        %v1625 = vpop.f32.mrb[0].mxu0
        %v1626 = vadd.f32 %v637, %v1625
        %v1627 = vpop.f32.mrb[0].mxu0
        %v1628 = vadd.f32 %v641, %v1627
        %1629 = vmatprep.mubr.f32.mxu0 %v337
        %1630 = vmatmul.mubr.f32.gmra.mrb[0].mxu0 %v336
        %v1631 = vpop.f32.mrb[0].mxu0
        %v1632 = vadd.f32 %v637, %v1631
        %v1633 = vpop.f32.mrb[0].mxu0
        %v1634 = vadd.f32 %v641, %v1633
        %1635 = vmatprep.mubr.f32.mxu0 %v339
        %1636 = vmatmul.mubr.f32.gmra.mrb[0].mxu0 %v338
        %v1637 = vpop.f32.mrb[0].mxu0
        %v1638 = vadd.f32 %v637, %v1637
        %v1639 = vpop.f32.mrb[0].mxu0
        %v1640 = vadd.f32 %v641, %v1639
        %1641 = vmatprep.mubr.f32.mxu0 %v341
        %1642 = vmatmul.mubr.f32.gmra.mrb[0].mxu0 %v340
        %v1643 = vpop.f32.mrb[0].mxu0
        %v1644 = vadd.f32 %v637, %v1643
        %v1645 = vpop.f32.mrb[0].mxu0
        %v1646 = vadd.f32 %v641, %v1645
        %1647 = vmatprep.mubr.f32.mxu0 %v343
        %1648 = vmatmul.mubr.f32.gmra.mrb[0].mxu0 %v342
        %v1649 = vpop.f32.mrb[0].mxu0
        %v1650 = vadd.f32 %v637, %v1649
        %v1651 = vpop.f32.mrb[0].mxu0
        %v1652 = vadd.f32 %v641, %v1651
        %1653 = vmatprep.mubr.f32.mxu0 %v345
        %1654 = vmatmul.mubr.f32.gmra.mrb[0].mxu0 %v344
        %v1655 = vpop.f32.mrb[0].mxu0
        %v1656 = vadd.f32 %v637, %v1655
        %v1657 = vpop.f32.mrb[0].mxu0
        %v1658 = vadd.f32 %v641, %v1657
        %1659 = vmatprep.mubr.f32.mxu0 %v347
        %1660 = vmatmul.mubr.f32.gmra.mrb[0].mxu0 %v346
        %v1661 = vpop.f32.mrb[0].mxu0
        %v1662 = vadd.f32 %v637, %v1661
        %v1663 = vpop.f32.mrb[0].mxu0
        %v1664 = vadd.f32 %v641, %v1663
        %1665 = vmatprep.mubr.f32.mxu0 %v349
        %1666 = vmatmul.mubr.f32.gmra.mrb[0].mxu0 %v348
        %v1667 = vpop.f32.mrb[0].mxu0
        %v1668 = vadd.f32 %v637, %v1667
        %v1669 = vpop.f32.mrb[0].mxu0
        %v1670 = vadd.f32 %v641, %v1669
        %1671 = vmatprep.mubr.f32.mxu0 %v351
        %1672 = vmatmul.mubr.f32.gmra.mrb[0].mxu0 %v350
        %v1673 = vpop.f32.mrb[0].mxu0
        %v1674 = vadd.f32 %v637, %v1673
        %v1675 = vpop.f32.mrb[0].mxu0
        %v1676 = vadd.f32 %v641, %v1675
        %1677 = vdwg.mxu0
        %v1678 = vmul.f32 %v717, 0.5
        %v1679 = vmul.f32 %v719, 0.5
        %v1680 = vmul.f32 %v974, 0.5
        %v1681 = vmul.f32 %v976, 0.5
        %v1682 = vmul.f32 %v1231, 0.5
        %v1683 = vmul.f32 %v1233, 0.5
        %v1684 = vmul.f32 %v1488, 0.5
        %v1685 = vmul.f32 %v1490, 0.5
        %v1686 = vmul.f32 %v723, 0.5
        %v1687 = vmul.f32 %v725, 0.5
        %v1688 = vmul.f32 %v980, 0.5
        %v1689 = vmul.f32 %v982, 0.5
        %v1690 = vmul.f32 %v1237, 0.5
        %v1691 = vmul.f32 %v1239, 0.5
        %v1692 = vmul.f32 %v1494, 0.5
        %v1693 = vmul.f32 %v1496, 0.5
        %v1694 = vmul.f32 %v729, 0.5
        %v1695 = vmul.f32 %v731, 0.5
        %v1696 = vmul.f32 %v986, 0.5
        %v1697 = vmul.f32 %v988, 0.5
        %v1698 = vmul.f32 %v1243, 0.5
        %v1699 = vmul.f32 %v1245, 0.5
        %v1700 = vmul.f32 %v1500, 0.5
        %v1701 = vmul.f32 %v1502, 0.5
        %v1702 = vmul.f32 %v735, 0.5
        %v1703 = vmul.f32 %v737, 0.5
        %v1704 = vmul.f32 %v992, 0.5
        %v1705 = vmul.f32 %v994, 0.5
        %v1706 = vmul.f32 %v1249, 0.5
        %v1707 = vmul.f32 %v1251, 0.5
        %v1708 = vmul.f32 %v1506, 0.5
        %v1709 = vmul.f32 %v1508, 0.5
        %v1710 = vmul.f32 %v741, 0.5
        %v1711 = vmul.f32 %v743, 0.5
        %v1712 = vmul.f32 %v998, 0.5
        %v1713 = vmul.f32 %v1000, 0.5
        %v1714 = vmul.f32 %v1255, 0.5
        %v1715 = vmul.f32 %v1257, 0.5
        %v1716 = vmul.f32 %v1512, 0.5
        %v1717 = vmul.f32 %v1514, 0.5
        %v1718 = vmul.f32 %v747, 0.5
        %v1719 = vmul.f32 %v749, 0.5
        %v1720 = vmul.f32 %v1004, 0.5
        %v1721 = vmul.f32 %v1006, 0.5
        %v1722 = vmul.f32 %v1261, 0.5
        %v1723 = vmul.f32 %v1263, 0.5
        %v1724 = vmul.f32 %v1518, 0.5
        %v1725 = vmul.f32 %v1520, 0.5
        %v1726 = vmul.f32 %v753, 0.5
        %v1727 = vmul.f32 %v755, 0.5
        %v1728 = vmul.f32 %v1010, 0.5
        %v1729 = vmul.f32 %v1012, 0.5
        %v1730 = vmul.f32 %v1267, 0.5
        %v1731 = vmul.f32 %v1269, 0.5
        %v1732 = vmul.f32 %v1524, 0.5
        %v1733 = vmul.f32 %v1526, 0.5
        %v1734 = vmul.f32 %v759, 0.5
        %v1735 = vmul.f32 %v761, 0.5
        %v1736 = vmul.f32 %v1016, 0.5
        %v1737 = vmul.f32 %v1018, 0.5
        %v1738 = vmul.f32 %v1273, 0.5
        %v1739 = vmul.f32 %v1275, 0.5
        %v1740 = vmul.f32 %v1530, 0.5
        %v1741 = vmul.f32 %v1532, 0.5
        %v1742 = vmul.f32 %v765, 0.5
        %v1743 = vmul.f32 %v767, 0.5
        %v1744 = vmul.f32 %v1022, 0.5
        %v1745 = vmul.f32 %v1024, 0.5
        %v1746 = vmul.f32 %v1279, 0.5
        %v1747 = vmul.f32 %v1281, 0.5
        %v1748 = vmul.f32 %v1536, 0.5
        %v1749 = vmul.f32 %v1538, 0.5
        %v1750 = vmul.f32 %v771, 0.5
        %v1751 = vmul.f32 %v773, 0.5
        %v1752 = vmul.f32 %v1028, 0.5
        %v1753 = vmul.f32 %v1030, 0.5
        %v1754 = vmul.f32 %v1285, 0.5
        %v1755 = vmul.f32 %v1287, 0.5
        %v1756 = vmul.f32 %v1542, 0.5
        %v1757 = vmul.f32 %v1544, 0.5
        %v1758 = vmul.f32 %v777, 0.5
        %v1759 = vmul.f32 %v779, 0.5
        %v1760 = vmul.f32 %v1034, 0.5
        %v1761 = vmul.f32 %v1036, 0.5
        %v1762 = vmul.f32 %v1291, 0.5
        %v1763 = vmul.f32 %v1293, 0.5
        %v1764 = vmul.f32 %v1548, 0.5
        %v1765 = vmul.f32 %v1550, 0.5
        %v1766 = vmul.f32 %v783, 0.5
        %v1767 = vmul.f32 %v785, 0.5
        %v1768 = vmul.f32 %v1040, 0.5
        %v1769 = vmul.f32 %v1042, 0.5
        %v1770 = vmul.f32 %v1297, 0.5
        %v1771 = vmul.f32 %v1299, 0.5
        %v1772 = vmul.f32 %v1554, 0.5
        %v1773 = vmul.f32 %v1556, 0.5
        %v1774 = vmul.f32 %v789, 0.5
        %v1775 = vmul.f32 %v791, 0.5
        %v1776 = vmul.f32 %v1046, 0.5
        %v1777 = vmul.f32 %v1048, 0.5
        %v1778 = vmul.f32 %v1303, 0.5
        %v1779 = vmul.f32 %v1305, 0.5
        %v1780 = vmul.f32 %v1560, 0.5
        %v1781 = vmul.f32 %v1562, 0.5
        %v1782 = vmul.f32 %v795, 0.5
        %v1783 = vmul.f32 %v797, 0.5
        %v1784 = vmul.f32 %v1052, 0.5
        %v1785 = vmul.f32 %v1054, 0.5
        %v1786 = vmul.f32 %v1309, 0.5
        %v1787 = vmul.f32 %v1311, 0.5
        %v1788 = vmul.f32 %v1566, 0.5
        %v1789 = vmul.f32 %v1568, 0.5
        %v1790 = vmul.f32 %v801, 0.5
        %v1791 = vmul.f32 %v803, 0.5
        %v1792 = vmul.f32 %v1058, 0.5
        %v1793 = vmul.f32 %v1060, 0.5
        %v1794 = vmul.f32 %v1315, 0.5
        %v1795 = vmul.f32 %v1317, 0.5
        %v1796 = vmul.f32 %v1572, 0.5
        %v1797 = vmul.f32 %v1574, 0.5
        %v1798 = vmul.f32 %v807, 0.5
        %v1799 = vmul.f32 %v809, 0.5
        %v1800 = vmul.f32 %v1064, 0.5
        %v1801 = vmul.f32 %v1066, 0.5
        %v1802 = vmul.f32 %v1321, 0.5
        %v1803 = vmul.f32 %v1323, 0.5
        %v1804 = vmul.f32 %v1578, 0.5
        %v1805 = vmul.f32 %v1580, 0.5
        %v1806 = vmul.f32 %v813, 0.5
        %v1807 = vmul.f32 %v815, 0.5
        %v1808 = vmul.f32 %v1070, 0.5
        %v1809 = vmul.f32 %v1072, 0.5
        %v1810 = vmul.f32 %v1327, 0.5
        %v1811 = vmul.f32 %v1329, 0.5
        %v1812 = vmul.f32 %v1584, 0.5
        %v1813 = vmul.f32 %v1586, 0.5
        %v1814 = vmul.f32 %v819, 0.5
        %v1815 = vmul.f32 %v821, 0.5
        %v1816 = vmul.f32 %v1076, 0.5
        %v1817 = vmul.f32 %v1078, 0.5
        %v1818 = vmul.f32 %v1333, 0.5
        %v1819 = vmul.f32 %v1335, 0.5
        %v1820 = vmul.f32 %v1590, 0.5
        %v1821 = vmul.f32 %v1592, 0.5
        %v1822 = vmul.f32 %v825, 0.5
        %v1823 = vmul.f32 %v827, 0.5
        %v1824 = vmul.f32 %v1082, 0.5
        %v1825 = vmul.f32 %v1084, 0.5
        %v1826 = vmul.f32 %v1339, 0.5
        %v1827 = vmul.f32 %v1341, 0.5
        %v1828 = vmul.f32 %v1596, 0.5
        %v1829 = vmul.f32 %v1598, 0.5
        %v1830 = vmul.f32 %v831, 0.5
        %v1831 = vmul.f32 %v833, 0.5
        %v1832 = vmul.f32 %v1088, 0.5
        %v1833 = vmul.f32 %v1090, 0.5
        %v1834 = vmul.f32 %v1345, 0.5
        %v1835 = vmul.f32 %v1347, 0.5
        %v1836 = vmul.f32 %v1602, 0.5
        %v1837 = vmul.f32 %v1604, 0.5
        %v1838 = vmul.f32 %v837, 0.5
        %v1839 = vmul.f32 %v839, 0.5
        %v1840 = vmul.f32 %v1094, 0.5
        %v1841 = vmul.f32 %v1096, 0.5
        %v1842 = vmul.f32 %v1351, 0.5
        %v1843 = vmul.f32 %v1353, 0.5
        %v1844 = vmul.f32 %v1608, 0.5
        %v1845 = vmul.f32 %v1610, 0.5
        %v1846 = vmul.f32 %v843, 0.5
        %v1847 = vmul.f32 %v845, 0.5
        %v1848 = vmul.f32 %v1100, 0.5
        %v1849 = vmul.f32 %v1102, 0.5
        %v1850 = vmul.f32 %v1357, 0.5
        %v1851 = vmul.f32 %v1359, 0.5
        %v1852 = vmul.f32 %v1614, 0.5
        %v1853 = vmul.f32 %v1616, 0.5
        %v1854 = vmul.f32 %v849, 0.5
        %v1855 = vmul.f32 %v851, 0.5
        %v1856 = vmul.f32 %v1106, 0.5
        %v1857 = vmul.f32 %v1108, 0.5
        %v1858 = vmul.f32 %v1363, 0.5
        %v1859 = vmul.f32 %v1365, 0.5
        %v1860 = vmul.f32 %v1620, 0.5
        %v1861 = vmul.f32 %v1622, 0.5
        %v1862 = vmul.f32 %v855, 0.5
        %v1863 = vmul.f32 %v857, 0.5
        %v1864 = vmul.f32 %v1112, 0.5
        %v1865 = vmul.f32 %v1114, 0.5
        %v1866 = vmul.f32 %v1369, 0.5
        %v1867 = vmul.f32 %v1371, 0.5
        %v1868 = vmul.f32 %v1626, 0.5
        %v1869 = vmul.f32 %v1628, 0.5
        %v1870 = vmul.f32 %v861, 0.5
        %v1871 = vmul.f32 %v863, 0.5
        %v1872 = vmul.f32 %v1118, 0.5
        %v1873 = vmul.f32 %v1120, 0.5
        %v1874 = vmul.f32 %v1375, 0.5
        %v1875 = vmul.f32 %v1377, 0.5
        %v1876 = vmul.f32 %v1632, 0.5
        %v1877 = vmul.f32 %v1634, 0.5
        %v1878 = vmul.f32 %v867, 0.5
        %v1879 = vmul.f32 %v869, 0.5
        %v1880 = vmul.f32 %v1124, 0.5
        %v1881 = vmul.f32 %v1126, 0.5
        %v1882 = vmul.f32 %v1381, 0.5
        %v1883 = vmul.f32 %v1383, 0.5
        %v1884 = vmul.f32 %v1638, 0.5
        %v1885 = vmul.f32 %v1640, 0.5
        %v1886 = vmul.f32 %v873, 0.5
        %v1887 = vmul.f32 %v875, 0.5
        %v1888 = vmul.f32 %v1130, 0.5
        %v1889 = vmul.f32 %v1132, 0.5
        %v1890 = vmul.f32 %v1387, 0.5
        %v1891 = vmul.f32 %v1389, 0.5
        %v1892 = vmul.f32 %v1644, 0.5
        %v1893 = vmul.f32 %v1646, 0.5
        %v1894 = vmul.f32 %v879, 0.5
        %v1895 = vmul.f32 %v881, 0.5
        %v1896 = vmul.f32 %v1136, 0.5
        %v1897 = vmul.f32 %v1138, 0.5
        %v1898 = vmul.f32 %v1393, 0.5
        %v1899 = vmul.f32 %v1395, 0.5
        %v1900 = vmul.f32 %v1650, 0.5
        %v1901 = vmul.f32 %v1652, 0.5
        %v1902 = vmul.f32 %v885, 0.5
        %v1903 = vmul.f32 %v887, 0.5
        %v1904 = vmul.f32 %v1142, 0.5
        %v1905 = vmul.f32 %v1144, 0.5
        %v1906 = vmul.f32 %v1399, 0.5
        %v1907 = vmul.f32 %v1401, 0.5
        %v1908 = vmul.f32 %v1656, 0.5
        %v1909 = vmul.f32 %v1658, 0.5
        %v1910 = vmul.f32 %v891, 0.5
        %v1911 = vmul.f32 %v893, 0.5
        %v1912 = vmul.f32 %v1148, 0.5
        %v1913 = vmul.f32 %v1150, 0.5
        %v1914 = vmul.f32 %v1405, 0.5
        %v1915 = vmul.f32 %v1407, 0.5
        %v1916 = vmul.f32 %v1662, 0.5
        %v1917 = vmul.f32 %v1664, 0.5
        %v1918 = vmul.f32 %v897, 0.5
        %v1919 = vmul.f32 %v899, 0.5
        %v1920 = vmul.f32 %v1154, 0.5
        %v1921 = vmul.f32 %v1156, 0.5
        %v1922 = vmul.f32 %v1411, 0.5
        %v1923 = vmul.f32 %v1413, 0.5
        %v1924 = vmul.f32 %v1668, 0.5
        %v1925 = vmul.f32 %v1670, 0.5
        %v1926 = vmul.f32 %v903, 0.5
        %v1927 = vmul.f32 %v905, 0.5
        %v1928 = vmul.f32 %v1160, 0.5
        %v1929 = vmul.f32 %v1162, 0.5
        %v1930 = vmul.f32 %v1417, 0.5
        %v1931 = vmul.f32 %v1419, 0.5
        %v1932 = vmul.f32 %v1674, 0.5
        %v1933 = vmul.f32 %v1676, 0.5
        %v1934 = vmul.f32 %v717, 0.70710677
        %v1935 = vmul.f32 %v719, 0.70710677
        %v1936 = vmul.f32 %v974, 0.70710677
        %v1937 = vmul.f32 %v976, 0.70710677
        %v1938 = vmul.f32 %v1231, 0.70710677
        %v1939 = vmul.f32 %v1233, 0.70710677
        %v1940 = vmul.f32 %v1488, 0.70710677
        %v1941 = vmul.f32 %v1490, 0.70710677
        %v1942 = vmul.f32 %v723, 0.70710677
        %v1943 = vmul.f32 %v725, 0.70710677
        %v1944 = vmul.f32 %v980, 0.70710677
        %v1945 = vmul.f32 %v982, 0.70710677
        %v1946 = vmul.f32 %v1237, 0.70710677
        %v1947 = vmul.f32 %v1239, 0.70710677
        %v1948 = vmul.f32 %v1494, 0.70710677
        %v1949 = vmul.f32 %v1496, 0.70710677
        %v1950 = vmul.f32 %v729, 0.70710677
        %v1951 = vmul.f32 %v731, 0.70710677
        %v1952 = vmul.f32 %v986, 0.70710677
        %v1953 = vmul.f32 %v988, 0.70710677
        %v1954 = vmul.f32 %v1243, 0.70710677
        %v1955 = vmul.f32 %v1245, 0.70710677
        %v1956 = vmul.f32 %v1500, 0.70710677
        %v1957 = vmul.f32 %v1502, 0.70710677
        %v1958 = vmul.f32 %v735, 0.70710677
        %v1959 = vmul.f32 %v737, 0.70710677
        %v1960 = vmul.f32 %v992, 0.70710677
        %v1961 = vmul.f32 %v994, 0.70710677
        %v1962 = vmul.f32 %v1249, 0.70710677
        %v1963 = vmul.f32 %v1251, 0.70710677
        %v1964 = vmul.f32 %v1506, 0.70710677
        %v1965 = vmul.f32 %v1508, 0.70710677
        %v1966 = vmul.f32 %v741, 0.70710677
        %v1967 = vmul.f32 %v743, 0.70710677
        %v1968 = vmul.f32 %v998, 0.70710677
        %v1969 = vmul.f32 %v1000, 0.70710677
        %v1970 = vmul.f32 %v1255, 0.70710677
        %v1971 = vmul.f32 %v1257, 0.70710677
        %v1972 = vmul.f32 %v1512, 0.70710677
        %v1973 = vmul.f32 %v1514, 0.70710677
        %v1974 = vmul.f32 %v747, 0.70710677
        %v1975 = vmul.f32 %v749, 0.70710677
        %v1976 = vmul.f32 %v1004, 0.70710677
        %v1977 = vmul.f32 %v1006, 0.70710677
        %v1978 = vmul.f32 %v1261, 0.70710677
        %v1979 = vmul.f32 %v1263, 0.70710677
        %v1980 = vmul.f32 %v1518, 0.70710677
        %v1981 = vmul.f32 %v1520, 0.70710677
        %v1982 = vmul.f32 %v753, 0.70710677
        %v1983 = vmul.f32 %v755, 0.70710677
        %v1984 = vmul.f32 %v1010, 0.70710677
        %v1985 = vmul.f32 %v1012, 0.70710677
        %v1986 = vmul.f32 %v1267, 0.70710677
        %v1987 = vmul.f32 %v1269, 0.70710677
        %v1988 = vmul.f32 %v1524, 0.70710677
        %v1989 = vmul.f32 %v1526, 0.70710677
        %v1990 = vmul.f32 %v759, 0.70710677
        %v1991 = vmul.f32 %v761, 0.70710677
        %v1992 = vmul.f32 %v1016, 0.70710677
        %v1993 = vmul.f32 %v1018, 0.70710677
        %v1994 = vmul.f32 %v1273, 0.70710677
        %v1995 = vmul.f32 %v1275, 0.70710677
        %v1996 = vmul.f32 %v1530, 0.70710677
        %v1997 = vmul.f32 %v1532, 0.70710677
        %v1998 = vmul.f32 %v765, 0.70710677
        %v1999 = vmul.f32 %v767, 0.70710677
        %v2000 = vmul.f32 %v1022, 0.70710677
        %v2001 = vmul.f32 %v1024, 0.70710677
        %v2002 = vmul.f32 %v1279, 0.70710677
        %v2003 = vmul.f32 %v1281, 0.70710677
        %v2004 = vmul.f32 %v1536, 0.70710677
        %v2005 = vmul.f32 %v1538, 0.70710677
        %v2006 = vmul.f32 %v771, 0.70710677
        %v2007 = vmul.f32 %v773, 0.70710677
        %v2008 = vmul.f32 %v1028, 0.70710677
        %v2009 = vmul.f32 %v1030, 0.70710677
        %v2010 = vmul.f32 %v1285, 0.70710677
        %v2011 = vmul.f32 %v1287, 0.70710677
        %v2012 = vmul.f32 %v1542, 0.70710677
        %v2013 = vmul.f32 %v1544, 0.70710677
        %v2014 = vmul.f32 %v777, 0.70710677
        %v2015 = vmul.f32 %v779, 0.70710677
        %v2016 = vmul.f32 %v1034, 0.70710677
        %v2017 = vmul.f32 %v1036, 0.70710677
        %v2018 = vmul.f32 %v1291, 0.70710677
        %v2019 = vmul.f32 %v1293, 0.70710677
        %v2020 = vmul.f32 %v1548, 0.70710677
        %v2021 = vmul.f32 %v1550, 0.70710677
        %v2022 = vmul.f32 %v783, 0.70710677
        %v2023 = vmul.f32 %v785, 0.70710677
        %v2024 = vmul.f32 %v1040, 0.70710677
        %v2025 = vmul.f32 %v1042, 0.70710677
        %v2026 = vmul.f32 %v1297, 0.70710677
        %v2027 = vmul.f32 %v1299, 0.70710677
        %v2028 = vmul.f32 %v1554, 0.70710677
        %v2029 = vmul.f32 %v1556, 0.70710677
        %v2030 = vmul.f32 %v789, 0.70710677
        %v2031 = vmul.f32 %v791, 0.70710677
        %v2032 = vmul.f32 %v1046, 0.70710677
        %v2033 = vmul.f32 %v1048, 0.70710677
        %v2034 = vmul.f32 %v1303, 0.70710677
        %v2035 = vmul.f32 %v1305, 0.70710677
        %v2036 = vmul.f32 %v1560, 0.70710677
        %v2037 = vmul.f32 %v1562, 0.70710677
        %v2038 = vmul.f32 %v795, 0.70710677
        %v2039 = vmul.f32 %v797, 0.70710677
        %v2040 = vmul.f32 %v1052, 0.70710677
        %v2041 = vmul.f32 %v1054, 0.70710677
        %v2042 = vmul.f32 %v1309, 0.70710677
        %v2043 = vmul.f32 %v1311, 0.70710677
        %v2044 = vmul.f32 %v1566, 0.70710677
        %v2045 = vmul.f32 %v1568, 0.70710677
        %v2046 = vmul.f32 %v801, 0.70710677
        %v2047 = vmul.f32 %v803, 0.70710677
        %v2048 = vmul.f32 %v1058, 0.70710677
        %v2049 = vmul.f32 %v1060, 0.70710677
        %v2050 = vmul.f32 %v1315, 0.70710677
        %v2051 = vmul.f32 %v1317, 0.70710677
        %v2052 = vmul.f32 %v1572, 0.70710677
        %v2053 = vmul.f32 %v1574, 0.70710677
        %v2054 = vmul.f32 %v807, 0.70710677
        %v2055 = vmul.f32 %v809, 0.70710677
        %v2056 = vmul.f32 %v1064, 0.70710677
        %v2057 = vmul.f32 %v1066, 0.70710677
        %v2058 = vmul.f32 %v1321, 0.70710677
        %v2059 = vmul.f32 %v1323, 0.70710677
        %v2060 = vmul.f32 %v1578, 0.70710677
        %v2061 = vmul.f32 %v1580, 0.70710677
        %v2062 = vmul.f32 %v813, 0.70710677
        %v2063 = vmul.f32 %v815, 0.70710677
        %v2064 = vmul.f32 %v1070, 0.70710677
        %v2065 = vmul.f32 %v1072, 0.70710677
        %v2066 = vmul.f32 %v1327, 0.70710677
        %v2067 = vmul.f32 %v1329, 0.70710677
        %v2068 = vmul.f32 %v1584, 0.70710677
        %v2069 = vmul.f32 %v1586, 0.70710677
        %v2070 = vmul.f32 %v819, 0.70710677
        %v2071 = vmul.f32 %v821, 0.70710677
        %v2072 = vmul.f32 %v1076, 0.70710677
        %v2073 = vmul.f32 %v1078, 0.70710677
        %v2074 = vmul.f32 %v1333, 0.70710677
        %v2075 = vmul.f32 %v1335, 0.70710677
        %v2076 = vmul.f32 %v1590, 0.70710677
        %v2077 = vmul.f32 %v1592, 0.70710677
        %v2078 = vmul.f32 %v825, 0.70710677
        %v2079 = vmul.f32 %v827, 0.70710677
        %v2080 = vmul.f32 %v1082, 0.70710677
        %v2081 = vmul.f32 %v1084, 0.70710677
        %v2082 = vmul.f32 %v1339, 0.70710677
        %v2083 = vmul.f32 %v1341, 0.70710677
        %v2084 = vmul.f32 %v1596, 0.70710677
        %v2085 = vmul.f32 %v1598, 0.70710677
        %v2086 = vmul.f32 %v831, 0.70710677
        %v2087 = vmul.f32 %v833, 0.70710677
        %v2088 = vmul.f32 %v1088, 0.70710677
        %v2089 = vmul.f32 %v1090, 0.70710677
        %v2090 = vmul.f32 %v1345, 0.70710677
        %v2091 = vmul.f32 %v1347, 0.70710677
        %v2092 = vmul.f32 %v1602, 0.70710677
        %v2093 = vmul.f32 %v1604, 0.70710677
        %v2094 = vmul.f32 %v837, 0.70710677
        %v2095 = vmul.f32 %v839, 0.70710677
        %v2096 = vmul.f32 %v1094, 0.70710677
        %v2097 = vmul.f32 %v1096, 0.70710677
        %v2098 = vmul.f32 %v1351, 0.70710677
        %v2099 = vmul.f32 %v1353, 0.70710677
        %v2100 = vmul.f32 %v1608, 0.70710677
        %v2101 = vmul.f32 %v1610, 0.70710677
        %v2102 = vmul.f32 %v843, 0.70710677
        %v2103 = vmul.f32 %v845, 0.70710677
        %v2104 = vmul.f32 %v1100, 0.70710677
        %v2105 = vmul.f32 %v1102, 0.70710677
        %v2106 = vmul.f32 %v1357, 0.70710677
        %v2107 = vmul.f32 %v1359, 0.70710677
        %v2108 = vmul.f32 %v1614, 0.70710677
        %v2109 = vmul.f32 %v1616, 0.70710677
        %v2110 = vmul.f32 %v849, 0.70710677
        %v2111 = vmul.f32 %v851, 0.70710677
        %v2112 = vmul.f32 %v1106, 0.70710677
        %v2113 = vmul.f32 %v1108, 0.70710677
        %v2114 = vmul.f32 %v1363, 0.70710677
        %v2115 = vmul.f32 %v1365, 0.70710677
        %v2116 = vmul.f32 %v1620, 0.70710677
        %v2117 = vmul.f32 %v1622, 0.70710677
        %v2118 = vmul.f32 %v855, 0.70710677
        %v2119 = vmul.f32 %v857, 0.70710677
        %v2120 = vmul.f32 %v1112, 0.70710677
        %v2121 = vmul.f32 %v1114, 0.70710677
        %v2122 = vmul.f32 %v1369, 0.70710677
        %v2123 = vmul.f32 %v1371, 0.70710677
        %v2124 = vmul.f32 %v1626, 0.70710677
        %v2125 = vmul.f32 %v1628, 0.70710677
        %v2126 = vmul.f32 %v861, 0.70710677
        %v2127 = vmul.f32 %v863, 0.70710677
        %v2128 = vmul.f32 %v1118, 0.70710677
        %v2129 = vmul.f32 %v1120, 0.70710677
        %v2130 = vmul.f32 %v1375, 0.70710677
        %v2131 = vmul.f32 %v1377, 0.70710677
        %v2132 = vmul.f32 %v1632, 0.70710677
        %v2133 = vmul.f32 %v1634, 0.70710677
        %v2134 = vmul.f32 %v867, 0.70710677
        %v2135 = vmul.f32 %v869, 0.70710677
        %v2136 = vmul.f32 %v1124, 0.70710677
        %v2137 = vmul.f32 %v1126, 0.70710677
        %v2138 = vmul.f32 %v1381, 0.70710677
        %v2139 = vmul.f32 %v1383, 0.70710677
        %v2140 = vmul.f32 %v1638, 0.70710677
        %v2141 = vmul.f32 %v1640, 0.70710677
        %v2142 = vmul.f32 %v873, 0.70710677
        %v2143 = vmul.f32 %v875, 0.70710677
        %v2144 = vmul.f32 %v1130, 0.70710677
        %v2145 = vmul.f32 %v1132, 0.70710677
        %v2146 = vmul.f32 %v1387, 0.70710677
        %v2147 = vmul.f32 %v1389, 0.70710677
        %v2148 = vmul.f32 %v1644, 0.70710677
        %v2149 = vmul.f32 %v1646, 0.70710677
        %v2150 = vmul.f32 %v879, 0.70710677
        %v2151 = vmul.f32 %v881, 0.70710677
        %v2152 = vmul.f32 %v1136, 0.70710677
        %v2153 = vmul.f32 %v1138, 0.70710677
        %v2154 = vmul.f32 %v1393, 0.70710677
        %v2155 = vmul.f32 %v1395, 0.70710677
        %v2156 = vmul.f32 %v1650, 0.70710677
        %v2157 = vmul.f32 %v1652, 0.70710677
        %v2158 = vmul.f32 %v885, 0.70710677
        %v2159 = vmul.f32 %v887, 0.70710677
        %v2160 = vmul.f32 %v1142, 0.70710677
        %v2161 = vmul.f32 %v1144, 0.70710677
        %v2162 = vmul.f32 %v1399, 0.70710677
        %v2163 = vmul.f32 %v1401, 0.70710677
        %v2164 = vmul.f32 %v1656, 0.70710677
        %v2165 = vmul.f32 %v1658, 0.70710677
        %v2166 = vmul.f32 %v891, 0.70710677
        %v2167 = vmul.f32 %v893, 0.70710677
        %v2168 = vmul.f32 %v1148, 0.70710677
        %v2169 = vmul.f32 %v1150, 0.70710677
        %v2170 = vmul.f32 %v1405, 0.70710677
        %v2171 = vmul.f32 %v1407, 0.70710677
        %v2172 = vmul.f32 %v1662, 0.70710677
        %v2173 = vmul.f32 %v1664, 0.70710677
        %v2174 = vmul.f32 %v897, 0.70710677
        %v2175 = vmul.f32 %v899, 0.70710677
        %v2176 = vmul.f32 %v1154, 0.70710677
        %v2177 = vmul.f32 %v1156, 0.70710677
        %v2178 = vmul.f32 %v1411, 0.70710677
        %v2179 = vmul.f32 %v1413, 0.70710677
        %v2180 = vmul.f32 %v1668, 0.70710677
        %v2181 = vmul.f32 %v1670, 0.70710677
        %v2182 = vmul.f32 %v903, 0.70710677
        %v2183 = vmul.f32 %v905, 0.70710677
        %v2184 = vmul.f32 %v1160, 0.70710677
        %v2185 = vmul.f32 %v1162, 0.70710677
        %v2186 = vmul.f32 %v1417, 0.70710677
        %v2187 = vmul.f32 %v1419, 0.70710677
        %v2188 = vmul.f32 %v1674, 0.70710677
        %v2189 = vmul.f32 %v1676, 0.70710677
        %v2190 = verf.f32.pop %v1934
        %v2191 = verf.f32.pop %v1935
        %v2192 = verf.f32.pop %v1936
        %v2193 = verf.f32.pop %v1937
        %v2194 = verf.f32.pop %v1938
        %v2195 = verf.f32.pop %v1939
        %v2196 = verf.f32.pop %v1940
        %v2197 = verf.f32.pop %v1941
        %v2198 = verf.f32.pop %v1942
        %v2199 = verf.f32.pop %v1943
        %v2200 = verf.f32.pop %v1944
        %v2201 = verf.f32.pop %v1945
        %v2202 = verf.f32.pop %v1946
        %v2203 = verf.f32.pop %v1947
        %v2204 = verf.f32.pop %v1948
        %v2205 = verf.f32.pop %v1949
        %v2206 = verf.f32.pop %v1950
        %v2207 = verf.f32.pop %v1951
        %v2208 = verf.f32.pop %v1952
        %v2209 = verf.f32.pop %v1953
        %v2210 = verf.f32.pop %v1954
        %v2211 = verf.f32.pop %v1955
        %v2212 = verf.f32.pop %v1956
        %v2213 = verf.f32.pop %v1957
        %v2214 = verf.f32.pop %v1958
        %v2215 = verf.f32.pop %v1959
        %v2216 = verf.f32.pop %v1960
        %v2217 = verf.f32.pop %v1961
        %v2218 = verf.f32.pop %v1962
        %v2219 = verf.f32.pop %v1963
        %v2220 = verf.f32.pop %v1964
        %v2221 = verf.f32.pop %v1965
        %v2222 = verf.f32.pop %v1966
        %v2223 = verf.f32.pop %v1967
        %v2224 = verf.f32.pop %v1968
        %v2225 = verf.f32.pop %v1969
        %v2226 = verf.f32.pop %v1970
        %v2227 = verf.f32.pop %v1971
        %v2228 = verf.f32.pop %v1972
        %v2229 = verf.f32.pop %v1973
        %v2230 = verf.f32.pop %v1974
        %v2231 = verf.f32.pop %v1975
        %v2232 = verf.f32.pop %v1976
        %v2233 = verf.f32.pop %v1977
        %v2234 = verf.f32.pop %v1978
        %v2235 = verf.f32.pop %v1979
        %v2236 = verf.f32.pop %v1980
        %v2237 = verf.f32.pop %v1981
        %v2238 = verf.f32.pop %v1982
        %v2239 = verf.f32.pop %v1983
        %v2240 = verf.f32.pop %v1984
        %v2241 = verf.f32.pop %v1985
        %v2242 = verf.f32.pop %v1986
        %v2243 = verf.f32.pop %v1987
        %v2244 = verf.f32.pop %v1988
        %v2245 = verf.f32.pop %v1989
        %v2246 = verf.f32.pop %v1990
        %v2247 = verf.f32.pop %v1991
        %v2248 = verf.f32.pop %v1992
        %v2249 = verf.f32.pop %v1993
        %v2250 = verf.f32.pop %v1994
        %v2251 = verf.f32.pop %v1995
        %v2252 = verf.f32.pop %v1996
        %v2253 = verf.f32.pop %v1997
        %v2254 = verf.f32.pop %v1998
        %v2255 = verf.f32.pop %v1999
        %v2256 = verf.f32.pop %v2000
        %v2257 = verf.f32.pop %v2001
        %v2258 = verf.f32.pop %v2002
        %v2259 = verf.f32.pop %v2003
        %v2260 = verf.f32.pop %v2004
        %v2261 = verf.f32.pop %v2005
        %v2262 = verf.f32.pop %v2006
        %v2263 = verf.f32.pop %v2007
        %v2264 = verf.f32.pop %v2008
        %v2265 = verf.f32.pop %v2009
        %v2266 = verf.f32.pop %v2010
        %v2267 = verf.f32.pop %v2011
        %v2268 = verf.f32.pop %v2012
        %v2269 = verf.f32.pop %v2013
        %v2270 = verf.f32.pop %v2014
        %v2271 = verf.f32.pop %v2015
        %v2272 = verf.f32.pop %v2016
        %v2273 = verf.f32.pop %v2017
        %v2274 = verf.f32.pop %v2018
        %v2275 = verf.f32.pop %v2019
        %v2276 = verf.f32.pop %v2020
        %v2277 = verf.f32.pop %v2021
        %v2278 = verf.f32.pop %v2022
        %v2279 = verf.f32.pop %v2023
        %v2280 = verf.f32.pop %v2024
        %v2281 = verf.f32.pop %v2025
        %v2282 = verf.f32.pop %v2026
        %v2283 = verf.f32.pop %v2027
        %v2284 = verf.f32.pop %v2028
        %v2285 = verf.f32.pop %v2029
        %v2286 = verf.f32.pop %v2030
        %v2287 = verf.f32.pop %v2031
        %v2288 = verf.f32.pop %v2032
        %v2289 = verf.f32.pop %v2033
        %v2290 = verf.f32.pop %v2034
        %v2291 = verf.f32.pop %v2035
        %v2292 = verf.f32.pop %v2036
        %v2293 = verf.f32.pop %v2037
        %v2294 = verf.f32.pop %v2038
        %v2295 = verf.f32.pop %v2039
        %v2296 = verf.f32.pop %v2040
        %v2297 = verf.f32.pop %v2041
        %v2298 = verf.f32.pop %v2042
        %v2299 = verf.f32.pop %v2043
        %v2300 = verf.f32.pop %v2044
        %v2301 = verf.f32.pop %v2045
        %v2302 = verf.f32.pop %v2046
        %v2303 = verf.f32.pop %v2047
        %v2304 = verf.f32.pop %v2048
        %v2305 = verf.f32.pop %v2049
        %v2306 = verf.f32.pop %v2050
        %v2307 = verf.f32.pop %v2051
        %v2308 = verf.f32.pop %v2052
        %v2309 = verf.f32.pop %v2053
        %v2310 = verf.f32.pop %v2054
        %v2311 = verf.f32.pop %v2055
        %v2312 = verf.f32.pop %v2056
        %v2313 = verf.f32.pop %v2057
        %v2314 = verf.f32.pop %v2058
        %v2315 = verf.f32.pop %v2059
        %v2316 = verf.f32.pop %v2060
        %v2317 = verf.f32.pop %v2061
        %v2318 = verf.f32.pop %v2062
        %v2319 = verf.f32.pop %v2063
        %v2320 = verf.f32.pop %v2064
        %v2321 = verf.f32.pop %v2065
        %v2322 = verf.f32.pop %v2066
        %v2323 = verf.f32.pop %v2067
        %v2324 = verf.f32.pop %v2068
        %v2325 = verf.f32.pop %v2069
        %v2326 = verf.f32.pop %v2070
        %v2327 = verf.f32.pop %v2071
        %v2328 = verf.f32.pop %v2072
        %v2329 = verf.f32.pop %v2073
        %v2330 = verf.f32.pop %v2074
        %v2331 = verf.f32.pop %v2075
        %v2332 = verf.f32.pop %v2076
        %v2333 = verf.f32.pop %v2077
        %v2334 = verf.f32.pop %v2078
        %v2335 = verf.f32.pop %v2079
        %v2336 = verf.f32.pop %v2080
        %v2337 = verf.f32.pop %v2081
        %v2338 = verf.f32.pop %v2082
        %v2339 = verf.f32.pop %v2083
        %v2340 = verf.f32.pop %v2084
        %v2341 = verf.f32.pop %v2085
        %v2342 = verf.f32.pop %v2086
        %v2343 = verf.f32.pop %v2087
        %v2344 = verf.f32.pop %v2088
        %v2345 = verf.f32.pop %v2089
        %v2346 = verf.f32.pop %v2090
        %v2347 = verf.f32.pop %v2091
        %v2348 = verf.f32.pop %v2092
        %v2349 = verf.f32.pop %v2093
        %v2350 = verf.f32.pop %v2094
        %v2351 = verf.f32.pop %v2095
        %v2352 = verf.f32.pop %v2096
        %v2353 = verf.f32.pop %v2097
        %v2354 = verf.f32.pop %v2098
        %v2355 = verf.f32.pop %v2099
        %v2356 = verf.f32.pop %v2100
        %v2357 = verf.f32.pop %v2101
        %v2358 = verf.f32.pop %v2102
        %v2359 = verf.f32.pop %v2103
        %v2360 = verf.f32.pop %v2104
        %v2361 = verf.f32.pop %v2105
        %v2362 = verf.f32.pop %v2106
        %v2363 = verf.f32.pop %v2107
        %v2364 = verf.f32.pop %v2108
        %v2365 = verf.f32.pop %v2109
        %v2366 = verf.f32.pop %v2110
        %v2367 = verf.f32.pop %v2111
        %v2368 = verf.f32.pop %v2112
        %v2369 = verf.f32.pop %v2113
        %v2370 = verf.f32.pop %v2114
        %v2371 = verf.f32.pop %v2115
        %v2372 = verf.f32.pop %v2116
        %v2373 = verf.f32.pop %v2117
        %v2374 = verf.f32.pop %v2118
        %v2375 = verf.f32.pop %v2119
        %v2376 = verf.f32.pop %v2120
        %v2377 = verf.f32.pop %v2121
        %v2378 = verf.f32.pop %v2122
        %v2379 = verf.f32.pop %v2123
        %v2380 = verf.f32.pop %v2124
        %v2381 = verf.f32.pop %v2125
        %v2382 = verf.f32.pop %v2126
        %v2383 = verf.f32.pop %v2127
        %v2384 = verf.f32.pop %v2128
        %v2385 = verf.f32.pop %v2129
        %v2386 = verf.f32.pop %v2130
        %v2387 = verf.f32.pop %v2131
        %v2388 = verf.f32.pop %v2132
        %v2389 = verf.f32.pop %v2133
        %v2390 = verf.f32.pop %v2134
        %v2391 = verf.f32.pop %v2135
        %v2392 = verf.f32.pop %v2136
        %v2393 = verf.f32.pop %v2137
        %v2394 = verf.f32.pop %v2138
        %v2395 = verf.f32.pop %v2139
        %v2396 = verf.f32.pop %v2140
        %v2397 = verf.f32.pop %v2141
        %v2398 = verf.f32.pop %v2142
        %v2399 = verf.f32.pop %v2143
        %v2400 = verf.f32.pop %v2144
        %v2401 = verf.f32.pop %v2145
        %v2402 = verf.f32.pop %v2146
        %v2403 = verf.f32.pop %v2147
        %v2404 = verf.f32.pop %v2148
        %v2405 = verf.f32.pop %v2149
        %v2406 = verf.f32.pop %v2150
        %v2407 = verf.f32.pop %v2151
        %v2408 = verf.f32.pop %v2152
        %v2409 = verf.f32.pop %v2153
        %v2410 = verf.f32.pop %v2154
        %v2411 = verf.f32.pop %v2155
        %v2412 = verf.f32.pop %v2156
        %v2413 = verf.f32.pop %v2157
        %v2414 = verf.f32.pop %v2158
        %v2415 = verf.f32.pop %v2159
        %v2416 = verf.f32.pop %v2160
        %v2417 = verf.f32.pop %v2161
        %v2418 = verf.f32.pop %v2162
        %v2419 = verf.f32.pop %v2163
        %v2420 = verf.f32.pop %v2164
        %v2421 = verf.f32.pop %v2165
        %v2422 = verf.f32.pop %v2166
        %v2423 = verf.f32.pop %v2167
        %v2424 = verf.f32.pop %v2168
        %v2425 = verf.f32.pop %v2169
        %v2426 = verf.f32.pop %v2170
        %v2427 = verf.f32.pop %v2171
        %v2428 = verf.f32.pop %v2172
        %v2429 = verf.f32.pop %v2173
        %v2430 = verf.f32.pop %v2174
        %v2431 = verf.f32.pop %v2175
        %v2432 = verf.f32.pop %v2176
        %v2433 = verf.f32.pop %v2177
        %v2434 = verf.f32.pop %v2178
        %v2435 = verf.f32.pop %v2179
        %v2436 = verf.f32.pop %v2180
        %v2437 = verf.f32.pop %v2181
        %v2438 = verf.f32.pop %v2182
        %v2439 = verf.f32.pop %v2183
        %v2440 = verf.f32.pop %v2184
        %v2441 = verf.f32.pop %v2185
        %v2442 = verf.f32.pop %v2186
        %v2443 = verf.f32.pop %v2187
        %v2444 = verf.f32.pop %v2188
        %v2445 = verf.f32.pop %v2189
        %v2446 = vadd.f32 %v2190, 1.0
        %v2447 = vadd.f32 %v2191, 1.0
        %v2448 = vadd.f32 %v2192, 1.0
        %v2449 = vadd.f32 %v2193, 1.0
        %v2450 = vadd.f32 %v2194, 1.0
        %v2451 = vadd.f32 %v2195, 1.0
        %v2452 = vadd.f32 %v2196, 1.0
        %v2453 = vadd.f32 %v2197, 1.0
        %v2454 = vadd.f32 %v2198, 1.0
        %v2455 = vadd.f32 %v2199, 1.0
        %v2456 = vadd.f32 %v2200, 1.0
        %v2457 = vadd.f32 %v2201, 1.0
        %v2458 = vadd.f32 %v2202, 1.0
        %v2459 = vadd.f32 %v2203, 1.0
        %v2460 = vadd.f32 %v2204, 1.0
        %v2461 = vadd.f32 %v2205, 1.0
        %v2462 = vadd.f32 %v2206, 1.0
        %v2463 = vadd.f32 %v2207, 1.0
        %v2464 = vadd.f32 %v2208, 1.0
        %v2465 = vadd.f32 %v2209, 1.0
        %v2466 = vadd.f32 %v2210, 1.0
        %v2467 = vadd.f32 %v2211, 1.0
        %v2468 = vadd.f32 %v2212, 1.0
        %v2469 = vadd.f32 %v2213, 1.0
        %v2470 = vadd.f32 %v2214, 1.0
        %v2471 = vadd.f32 %v2215, 1.0
        %v2472 = vadd.f32 %v2216, 1.0
        %v2473 = vadd.f32 %v2217, 1.0
        %v2474 = vadd.f32 %v2218, 1.0
        %v2475 = vadd.f32 %v2219, 1.0
        %v2476 = vadd.f32 %v2220, 1.0
        %v2477 = vadd.f32 %v2221, 1.0
        %v2478 = vadd.f32 %v2222, 1.0
        %v2479 = vadd.f32 %v2223, 1.0
        %v2480 = vadd.f32 %v2224, 1.0
        %v2481 = vadd.f32 %v2225, 1.0
        %v2482 = vadd.f32 %v2226, 1.0
        %v2483 = vadd.f32 %v2227, 1.0
        %v2484 = vadd.f32 %v2228, 1.0
        %v2485 = vadd.f32 %v2229, 1.0
        %v2486 = vadd.f32 %v2230, 1.0
        %v2487 = vadd.f32 %v2231, 1.0
        %v2488 = vadd.f32 %v2232, 1.0
        %v2489 = vadd.f32 %v2233, 1.0
        %v2490 = vadd.f32 %v2234, 1.0
        %v2491 = vadd.f32 %v2235, 1.0
        %v2492 = vadd.f32 %v2236, 1.0
        %v2493 = vadd.f32 %v2237, 1.0
        %v2494 = vadd.f32 %v2238, 1.0
        %v2495 = vadd.f32 %v2239, 1.0
        %v2496 = vadd.f32 %v2240, 1.0
        %v2497 = vadd.f32 %v2241, 1.0
        %v2498 = vadd.f32 %v2242, 1.0
        %v2499 = vadd.f32 %v2243, 1.0
        %v2500 = vadd.f32 %v2244, 1.0
        %v2501 = vadd.f32 %v2245, 1.0
        %v2502 = vadd.f32 %v2246, 1.0
        %v2503 = vadd.f32 %v2247, 1.0
        %v2504 = vadd.f32 %v2248, 1.0
        %v2505 = vadd.f32 %v2249, 1.0
        %v2506 = vadd.f32 %v2250, 1.0
        %v2507 = vadd.f32 %v2251, 1.0
        %v2508 = vadd.f32 %v2252, 1.0
        %v2509 = vadd.f32 %v2253, 1.0
        %v2510 = vadd.f32 %v2254, 1.0
        %v2511 = vadd.f32 %v2255, 1.0
        %v2512 = vadd.f32 %v2256, 1.0
        %v2513 = vadd.f32 %v2257, 1.0
        %v2514 = vadd.f32 %v2258, 1.0
        %v2515 = vadd.f32 %v2259, 1.0
        %v2516 = vadd.f32 %v2260, 1.0
        %v2517 = vadd.f32 %v2261, 1.0
        %v2518 = vadd.f32 %v2262, 1.0
        %v2519 = vadd.f32 %v2263, 1.0
        %v2520 = vadd.f32 %v2264, 1.0
        %v2521 = vadd.f32 %v2265, 1.0
        %v2522 = vadd.f32 %v2266, 1.0
        %v2523 = vadd.f32 %v2267, 1.0
        %v2524 = vadd.f32 %v2268, 1.0
        %v2525 = vadd.f32 %v2269, 1.0
        %v2526 = vadd.f32 %v2270, 1.0
        %v2527 = vadd.f32 %v2271, 1.0
        %v2528 = vadd.f32 %v2272, 1.0
        %v2529 = vadd.f32 %v2273, 1.0
        %v2530 = vadd.f32 %v2274, 1.0
        %v2531 = vadd.f32 %v2275, 1.0
        %v2532 = vadd.f32 %v2276, 1.0
        %v2533 = vadd.f32 %v2277, 1.0
        %v2534 = vadd.f32 %v2278, 1.0
        %v2535 = vadd.f32 %v2279, 1.0
        %v2536 = vadd.f32 %v2280, 1.0
        %v2537 = vadd.f32 %v2281, 1.0
        %v2538 = vadd.f32 %v2282, 1.0
        %v2539 = vadd.f32 %v2283, 1.0
        %v2540 = vadd.f32 %v2284, 1.0
        %v2541 = vadd.f32 %v2285, 1.0
        %v2542 = vadd.f32 %v2286, 1.0
        %v2543 = vadd.f32 %v2287, 1.0
        %v2544 = vadd.f32 %v2288, 1.0
        %v2545 = vadd.f32 %v2289, 1.0
        %v2546 = vadd.f32 %v2290, 1.0
        %v2547 = vadd.f32 %v2291, 1.0
        %v2548 = vadd.f32 %v2292, 1.0
        %v2549 = vadd.f32 %v2293, 1.0
        %v2550 = vadd.f32 %v2294, 1.0
        %v2551 = vadd.f32 %v2295, 1.0
        %v2552 = vadd.f32 %v2296, 1.0
        %v2553 = vadd.f32 %v2297, 1.0
        %v2554 = vadd.f32 %v2298, 1.0
        %v2555 = vadd.f32 %v2299, 1.0
        %v2556 = vadd.f32 %v2300, 1.0
        %v2557 = vadd.f32 %v2301, 1.0
        %v2558 = vadd.f32 %v2302, 1.0
        %v2559 = vadd.f32 %v2303, 1.0
        %v2560 = vadd.f32 %v2304, 1.0
        %v2561 = vadd.f32 %v2305, 1.0
        %v2562 = vadd.f32 %v2306, 1.0
        %v2563 = vadd.f32 %v2307, 1.0
        %v2564 = vadd.f32 %v2308, 1.0
        %v2565 = vadd.f32 %v2309, 1.0
        %v2566 = vadd.f32 %v2310, 1.0
        %v2567 = vadd.f32 %v2311, 1.0
        %v2568 = vadd.f32 %v2312, 1.0
        %v2569 = vadd.f32 %v2313, 1.0
        %v2570 = vadd.f32 %v2314, 1.0
        %v2571 = vadd.f32 %v2315, 1.0
        %v2572 = vadd.f32 %v2316, 1.0
        %v2573 = vadd.f32 %v2317, 1.0
        %v2574 = vadd.f32 %v2318, 1.0
        %v2575 = vadd.f32 %v2319, 1.0
        %v2576 = vadd.f32 %v2320, 1.0
        %v2577 = vadd.f32 %v2321, 1.0
        %v2578 = vadd.f32 %v2322, 1.0
        %v2579 = vadd.f32 %v2323, 1.0
        %v2580 = vadd.f32 %v2324, 1.0
        %v2581 = vadd.f32 %v2325, 1.0
        %v2582 = vadd.f32 %v2326, 1.0
        %v2583 = vadd.f32 %v2327, 1.0
        %v2584 = vadd.f32 %v2328, 1.0
        %v2585 = vadd.f32 %v2329, 1.0
        %v2586 = vadd.f32 %v2330, 1.0
        %v2587 = vadd.f32 %v2331, 1.0
        %v2588 = vadd.f32 %v2332, 1.0
        %v2589 = vadd.f32 %v2333, 1.0
        %v2590 = vadd.f32 %v2334, 1.0
        %v2591 = vadd.f32 %v2335, 1.0
        %v2592 = vadd.f32 %v2336, 1.0
        %v2593 = vadd.f32 %v2337, 1.0
        %v2594 = vadd.f32 %v2338, 1.0
        %v2595 = vadd.f32 %v2339, 1.0
        %v2596 = vadd.f32 %v2340, 1.0
        %v2597 = vadd.f32 %v2341, 1.0
        %v2598 = vadd.f32 %v2342, 1.0
        %v2599 = vadd.f32 %v2343, 1.0
        %v2600 = vadd.f32 %v2344, 1.0
        %v2601 = vadd.f32 %v2345, 1.0
        %v2602 = vadd.f32 %v2346, 1.0
        %v2603 = vadd.f32 %v2347, 1.0
        %v2604 = vadd.f32 %v2348, 1.0
        %v2605 = vadd.f32 %v2349, 1.0
        %v2606 = vadd.f32 %v2350, 1.0
        %v2607 = vadd.f32 %v2351, 1.0
        %v2608 = vadd.f32 %v2352, 1.0
        %v2609 = vadd.f32 %v2353, 1.0
        %v2610 = vadd.f32 %v2354, 1.0
        %v2611 = vadd.f32 %v2355, 1.0
        %v2612 = vadd.f32 %v2356, 1.0
        %v2613 = vadd.f32 %v2357, 1.0
        %v2614 = vadd.f32 %v2358, 1.0
        %v2615 = vadd.f32 %v2359, 1.0
        %v2616 = vadd.f32 %v2360, 1.0
        %v2617 = vadd.f32 %v2361, 1.0
        %v2618 = vadd.f32 %v2362, 1.0
        %v2619 = vadd.f32 %v2363, 1.0
        %v2620 = vadd.f32 %v2364, 1.0
        %v2621 = vadd.f32 %v2365, 1.0
        %v2622 = vadd.f32 %v2366, 1.0
        %v2623 = vadd.f32 %v2367, 1.0
        %v2624 = vadd.f32 %v2368, 1.0
        %v2625 = vadd.f32 %v2369, 1.0
        %v2626 = vadd.f32 %v2370, 1.0
        %v2627 = vadd.f32 %v2371, 1.0
        %v2628 = vadd.f32 %v2372, 1.0
        %v2629 = vadd.f32 %v2373, 1.0
        %v2630 = vadd.f32 %v2374, 1.0
        %v2631 = vadd.f32 %v2375, 1.0
        %v2632 = vadd.f32 %v2376, 1.0
        %v2633 = vadd.f32 %v2377, 1.0
        %v2634 = vadd.f32 %v2378, 1.0
        %v2635 = vadd.f32 %v2379, 1.0
        %v2636 = vadd.f32 %v2380, 1.0
        %v2637 = vadd.f32 %v2381, 1.0
        %v2638 = vadd.f32 %v2382, 1.0
        %v2639 = vadd.f32 %v2383, 1.0
        %v2640 = vadd.f32 %v2384, 1.0
        %v2641 = vadd.f32 %v2385, 1.0
        %v2642 = vadd.f32 %v2386, 1.0
        %v2643 = vadd.f32 %v2387, 1.0
        %v2644 = vadd.f32 %v2388, 1.0
        %v2645 = vadd.f32 %v2389, 1.0
        %v2646 = vadd.f32 %v2390, 1.0
        %v2647 = vadd.f32 %v2391, 1.0
        %v2648 = vadd.f32 %v2392, 1.0
        %v2649 = vadd.f32 %v2393, 1.0
        %v2650 = vadd.f32 %v2394, 1.0
        %v2651 = vadd.f32 %v2395, 1.0
        %v2652 = vadd.f32 %v2396, 1.0
        %v2653 = vadd.f32 %v2397, 1.0
        %v2654 = vadd.f32 %v2398, 1.0
        %v2655 = vadd.f32 %v2399, 1.0
        %v2656 = vadd.f32 %v2400, 1.0
        %v2657 = vadd.f32 %v2401, 1.0
        %v2658 = vadd.f32 %v2402, 1.0
        %v2659 = vadd.f32 %v2403, 1.0
        %v2660 = vadd.f32 %v2404, 1.0
        %v2661 = vadd.f32 %v2405, 1.0
        %v2662 = vadd.f32 %v2406, 1.0
        %v2663 = vadd.f32 %v2407, 1.0
        %v2664 = vadd.f32 %v2408, 1.0
        %v2665 = vadd.f32 %v2409, 1.0
        %v2666 = vadd.f32 %v2410, 1.0
        %v2667 = vadd.f32 %v2411, 1.0
        %v2668 = vadd.f32 %v2412, 1.0
        %v2669 = vadd.f32 %v2413, 1.0
        %v2670 = vadd.f32 %v2414, 1.0
        %v2671 = vadd.f32 %v2415, 1.0
        %v2672 = vadd.f32 %v2416, 1.0
        %v2673 = vadd.f32 %v2417, 1.0
        %v2674 = vadd.f32 %v2418, 1.0
        %v2675 = vadd.f32 %v2419, 1.0
        %v2676 = vadd.f32 %v2420, 1.0
        %v2677 = vadd.f32 %v2421, 1.0
        %v2678 = vadd.f32 %v2422, 1.0
        %v2679 = vadd.f32 %v2423, 1.0
        %v2680 = vadd.f32 %v2424, 1.0
        %v2681 = vadd.f32 %v2425, 1.0
        %v2682 = vadd.f32 %v2426, 1.0
        %v2683 = vadd.f32 %v2427, 1.0
        %v2684 = vadd.f32 %v2428, 1.0
        %v2685 = vadd.f32 %v2429, 1.0
        %v2686 = vadd.f32 %v2430, 1.0
        %v2687 = vadd.f32 %v2431, 1.0
        %v2688 = vadd.f32 %v2432, 1.0
        %v2689 = vadd.f32 %v2433, 1.0
        %v2690 = vadd.f32 %v2434, 1.0
        %v2691 = vadd.f32 %v2435, 1.0
        %v2692 = vadd.f32 %v2436, 1.0
        %v2693 = vadd.f32 %v2437, 1.0
        %v2694 = vadd.f32 %v2438, 1.0
        %v2695 = vadd.f32 %v2439, 1.0
        %v2696 = vadd.f32 %v2440, 1.0
        %v2697 = vadd.f32 %v2441, 1.0
        %v2698 = vadd.f32 %v2442, 1.0
        %v2699 = vadd.f32 %v2443, 1.0
        %v2700 = vadd.f32 %v2444, 1.0
        %v2701 = vadd.f32 %v2445, 1.0
        %v2702 = vmul.f32 %v1678, %v2446
        %v2703 = vmul.f32 %v1679, %v2447
        %v2704 = vmul.f32 %v1680, %v2448
        %v2705 = vmul.f32 %v1681, %v2449
        %v2706 = vmul.f32 %v1682, %v2450
        %v2707 = vmul.f32 %v1683, %v2451
        %v2708 = vmul.f32 %v1684, %v2452
        %v2709 = vmul.f32 %v1685, %v2453
        %v2710 = vmul.f32 %v1686, %v2454
        %v2711 = vmul.f32 %v1687, %v2455
        %v2712 = vmul.f32 %v1688, %v2456
        %v2713 = vmul.f32 %v1689, %v2457
        %v2714 = vmul.f32 %v1690, %v2458
        %v2715 = vmul.f32 %v1691, %v2459
        %v2716 = vmul.f32 %v1692, %v2460
        %v2717 = vmul.f32 %v1693, %v2461
        %v2718 = vmul.f32 %v1694, %v2462
        %v2719 = vmul.f32 %v1695, %v2463
        %v2720 = vmul.f32 %v1696, %v2464
        %v2721 = vmul.f32 %v1697, %v2465
        %v2722 = vmul.f32 %v1698, %v2466
        %v2723 = vmul.f32 %v1699, %v2467
        %v2724 = vmul.f32 %v1700, %v2468
        %v2725 = vmul.f32 %v1701, %v2469
        %v2726 = vmul.f32 %v1702, %v2470
        %v2727 = vmul.f32 %v1703, %v2471
        %v2728 = vmul.f32 %v1704, %v2472
        %v2729 = vmul.f32 %v1705, %v2473
        %v2730 = vmul.f32 %v1706, %v2474
        %v2731 = vmul.f32 %v1707, %v2475
        %v2732 = vmul.f32 %v1708, %v2476
        %v2733 = vmul.f32 %v1709, %v2477
        %v2734 = vmul.f32 %v1710, %v2478
        %v2735 = vmul.f32 %v1711, %v2479
        %v2736 = vmul.f32 %v1712, %v2480
        %v2737 = vmul.f32 %v1713, %v2481
        %v2738 = vmul.f32 %v1714, %v2482
        %v2739 = vmul.f32 %v1715, %v2483
        %v2740 = vmul.f32 %v1716, %v2484
        %v2741 = vmul.f32 %v1717, %v2485
        %v2742 = vmul.f32 %v1718, %v2486
        %v2743 = vmul.f32 %v1719, %v2487
        %v2744 = vmul.f32 %v1720, %v2488
        %v2745 = vmul.f32 %v1721, %v2489
        %v2746 = vmul.f32 %v1722, %v2490
        %v2747 = vmul.f32 %v1723, %v2491
        %v2748 = vmul.f32 %v1724, %v2492
        %v2749 = vmul.f32 %v1725, %v2493
        %v2750 = vmul.f32 %v1726, %v2494
        %v2751 = vmul.f32 %v1727, %v2495
        %v2752 = vmul.f32 %v1728, %v2496
        %v2753 = vmul.f32 %v1729, %v2497
        %v2754 = vmul.f32 %v1730, %v2498
        %v2755 = vmul.f32 %v1731, %v2499
        %v2756 = vmul.f32 %v1732, %v2500
        %v2757 = vmul.f32 %v1733, %v2501
        %v2758 = vmul.f32 %v1734, %v2502
        %v2759 = vmul.f32 %v1735, %v2503
        %v2760 = vmul.f32 %v1736, %v2504
        %v2761 = vmul.f32 %v1737, %v2505
        %v2762 = vmul.f32 %v1738, %v2506
        %v2763 = vmul.f32 %v1739, %v2507
        %v2764 = vmul.f32 %v1740, %v2508
        %v2765 = vmul.f32 %v1741, %v2509
        %v2766 = vmul.f32 %v1742, %v2510
        %v2767 = vmul.f32 %v1743, %v2511
        %v2768 = vmul.f32 %v1744, %v2512
        %v2769 = vmul.f32 %v1745, %v2513
        %v2770 = vmul.f32 %v1746, %v2514
        %v2771 = vmul.f32 %v1747, %v2515
        %v2772 = vmul.f32 %v1748, %v2516
        %v2773 = vmul.f32 %v1749, %v2517
        %v2774 = vmul.f32 %v1750, %v2518
        %v2775 = vmul.f32 %v1751, %v2519
        %v2776 = vmul.f32 %v1752, %v2520
        %v2777 = vmul.f32 %v1753, %v2521
        %v2778 = vmul.f32 %v1754, %v2522
        %v2779 = vmul.f32 %v1755, %v2523
        %v2780 = vmul.f32 %v1756, %v2524
        %v2781 = vmul.f32 %v1757, %v2525
        %v2782 = vmul.f32 %v1758, %v2526
        %v2783 = vmul.f32 %v1759, %v2527
        %v2784 = vmul.f32 %v1760, %v2528
        %v2785 = vmul.f32 %v1761, %v2529
        %v2786 = vmul.f32 %v1762, %v2530
        %v2787 = vmul.f32 %v1763, %v2531
        %v2788 = vmul.f32 %v1764, %v2532
        %v2789 = vmul.f32 %v1765, %v2533
        %v2790 = vmul.f32 %v1766, %v2534
        %v2791 = vmul.f32 %v1767, %v2535
        %v2792 = vmul.f32 %v1768, %v2536
        %v2793 = vmul.f32 %v1769, %v2537
        %v2794 = vmul.f32 %v1770, %v2538
        %v2795 = vmul.f32 %v1771, %v2539
        %v2796 = vmul.f32 %v1772, %v2540
        %v2797 = vmul.f32 %v1773, %v2541
        %v2798 = vmul.f32 %v1774, %v2542
        %v2799 = vmul.f32 %v1775, %v2543
        %v2800 = vmul.f32 %v1776, %v2544
        %v2801 = vmul.f32 %v1777, %v2545
        %v2802 = vmul.f32 %v1778, %v2546
        %v2803 = vmul.f32 %v1779, %v2547
        %v2804 = vmul.f32 %v1780, %v2548
        %v2805 = vmul.f32 %v1781, %v2549
        %v2806 = vmul.f32 %v1782, %v2550
        %v2807 = vmul.f32 %v1783, %v2551
        %v2808 = vmul.f32 %v1784, %v2552
        %v2809 = vmul.f32 %v1785, %v2553
        %v2810 = vmul.f32 %v1786, %v2554
        %v2811 = vmul.f32 %v1787, %v2555
        %v2812 = vmul.f32 %v1788, %v2556
        %v2813 = vmul.f32 %v1789, %v2557
        %v2814 = vmul.f32 %v1790, %v2558
        %v2815 = vmul.f32 %v1791, %v2559
        %v2816 = vmul.f32 %v1792, %v2560
        %v2817 = vmul.f32 %v1793, %v2561
        %v2818 = vmul.f32 %v1794, %v2562
        %v2819 = vmul.f32 %v1795, %v2563
        %v2820 = vmul.f32 %v1796, %v2564
        %v2821 = vmul.f32 %v1797, %v2565
        %v2822 = vmul.f32 %v1798, %v2566
        %v2823 = vmul.f32 %v1799, %v2567
        %v2824 = vmul.f32 %v1800, %v2568
        %v2825 = vmul.f32 %v1801, %v2569
        %v2826 = vmul.f32 %v1802, %v2570
        %v2827 = vmul.f32 %v1803, %v2571
        %v2828 = vmul.f32 %v1804, %v2572
        %v2829 = vmul.f32 %v1805, %v2573
        %v2830 = vmul.f32 %v1806, %v2574
        %v2831 = vmul.f32 %v1807, %v2575
        %v2832 = vmul.f32 %v1808, %v2576
        %v2833 = vmul.f32 %v1809, %v2577
        %v2834 = vmul.f32 %v1810, %v2578
        %v2835 = vmul.f32 %v1811, %v2579
        %v2836 = vmul.f32 %v1812, %v2580
        %v2837 = vmul.f32 %v1813, %v2581
        %v2838 = vmul.f32 %v1814, %v2582
        %v2839 = vmul.f32 %v1815, %v2583
        %v2840 = vmul.f32 %v1816, %v2584
        %v2841 = vmul.f32 %v1817, %v2585
        %v2842 = vmul.f32 %v1818, %v2586
        %v2843 = vmul.f32 %v1819, %v2587
        %v2844 = vmul.f32 %v1820, %v2588
        %v2845 = vmul.f32 %v1821, %v2589
        %v2846 = vmul.f32 %v1822, %v2590
        %v2847 = vmul.f32 %v1823, %v2591
        %v2848 = vmul.f32 %v1824, %v2592
        %v2849 = vmul.f32 %v1825, %v2593
        %v2850 = vmul.f32 %v1826, %v2594
        %v2851 = vmul.f32 %v1827, %v2595
        %v2852 = vmul.f32 %v1828, %v2596
        %v2853 = vmul.f32 %v1829, %v2597
        %v2854 = vmul.f32 %v1830, %v2598
        %v2855 = vmul.f32 %v1831, %v2599
        %v2856 = vmul.f32 %v1832, %v2600
        %v2857 = vmul.f32 %v1833, %v2601
        %v2858 = vmul.f32 %v1834, %v2602
        %v2859 = vmul.f32 %v1835, %v2603
        %v2860 = vmul.f32 %v1836, %v2604
        %v2861 = vmul.f32 %v1837, %v2605
        %v2862 = vmul.f32 %v1838, %v2606
        %v2863 = vmul.f32 %v1839, %v2607
        %v2864 = vmul.f32 %v1840, %v2608
        %v2865 = vmul.f32 %v1841, %v2609
        %v2866 = vmul.f32 %v1842, %v2610
        %v2867 = vmul.f32 %v1843, %v2611
        %v2868 = vmul.f32 %v1844, %v2612
        %v2869 = vmul.f32 %v1845, %v2613
        %v2870 = vmul.f32 %v1846, %v2614
        %v2871 = vmul.f32 %v1847, %v2615
        %v2872 = vmul.f32 %v1848, %v2616
        %v2873 = vmul.f32 %v1849, %v2617
        %v2874 = vmul.f32 %v1850, %v2618
        %v2875 = vmul.f32 %v1851, %v2619
        %v2876 = vmul.f32 %v1852, %v2620
        %v2877 = vmul.f32 %v1853, %v2621
        %v2878 = vmul.f32 %v1854, %v2622
        %v2879 = vmul.f32 %v1855, %v2623
        %v2880 = vmul.f32 %v1856, %v2624
        %v2881 = vmul.f32 %v1857, %v2625
        %v2882 = vmul.f32 %v1858, %v2626
        %v2883 = vmul.f32 %v1859, %v2627
        %v2884 = vmul.f32 %v1860, %v2628
        %v2885 = vmul.f32 %v1861, %v2629
        %v2886 = vmul.f32 %v1862, %v2630
        %v2887 = vmul.f32 %v1863, %v2631
        %v2888 = vmul.f32 %v1864, %v2632
        %v2889 = vmul.f32 %v1865, %v2633
        %v2890 = vmul.f32 %v1866, %v2634
        %v2891 = vmul.f32 %v1867, %v2635
        %v2892 = vmul.f32 %v1868, %v2636
        %v2893 = vmul.f32 %v1869, %v2637
        %v2894 = vmul.f32 %v1870, %v2638
        %v2895 = vmul.f32 %v1871, %v2639
        %v2896 = vmul.f32 %v1872, %v2640
        %v2897 = vmul.f32 %v1873, %v2641
        %v2898 = vmul.f32 %v1874, %v2642
        %v2899 = vmul.f32 %v1875, %v2643
        %v2900 = vmul.f32 %v1876, %v2644
        %v2901 = vmul.f32 %v1877, %v2645
        %v2902 = vmul.f32 %v1878, %v2646
        %v2903 = vmul.f32 %v1879, %v2647
        %v2904 = vmul.f32 %v1880, %v2648
        %v2905 = vmul.f32 %v1881, %v2649
        %v2906 = vmul.f32 %v1882, %v2650
        %v2907 = vmul.f32 %v1883, %v2651
        %v2908 = vmul.f32 %v1884, %v2652
        %v2909 = vmul.f32 %v1885, %v2653
        %v2910 = vmul.f32 %v1886, %v2654
        %v2911 = vmul.f32 %v1887, %v2655
        %v2912 = vmul.f32 %v1888, %v2656
        %v2913 = vmul.f32 %v1889, %v2657
        %v2914 = vmul.f32 %v1890, %v2658
        %v2915 = vmul.f32 %v1891, %v2659
        %v2916 = vmul.f32 %v1892, %v2660
        %v2917 = vmul.f32 %v1893, %v2661
        %v2918 = vmul.f32 %v1894, %v2662
        %v2919 = vmul.f32 %v1895, %v2663
        %v2920 = vmul.f32 %v1896, %v2664
        %v2921 = vmul.f32 %v1897, %v2665
        %v2922 = vmul.f32 %v1898, %v2666
        %v2923 = vmul.f32 %v1899, %v2667
        %v2924 = vmul.f32 %v1900, %v2668
        %v2925 = vmul.f32 %v1901, %v2669
        %v2926 = vmul.f32 %v1902, %v2670
        %v2927 = vmul.f32 %v1903, %v2671
        %v2928 = vmul.f32 %v1904, %v2672
        %v2929 = vmul.f32 %v1905, %v2673
        %v2930 = vmul.f32 %v1906, %v2674
        %v2931 = vmul.f32 %v1907, %v2675
        %v2932 = vmul.f32 %v1908, %v2676
        %v2933 = vmul.f32 %v1909, %v2677
        %v2934 = vmul.f32 %v1910, %v2678
        %v2935 = vmul.f32 %v1911, %v2679
        %v2936 = vmul.f32 %v1912, %v2680
        %v2937 = vmul.f32 %v1913, %v2681
        %v2938 = vmul.f32 %v1914, %v2682
        %v2939 = vmul.f32 %v1915, %v2683
        %v2940 = vmul.f32 %v1916, %v2684
        %v2941 = vmul.f32 %v1917, %v2685
        %v2942 = vmul.f32 %v1918, %v2686
        %v2943 = vmul.f32 %v1919, %v2687
        %v2944 = vmul.f32 %v1920, %v2688
        %v2945 = vmul.f32 %v1921, %v2689
        %v2946 = vmul.f32 %v1922, %v2690
        %v2947 = vmul.f32 %v1923, %v2691
        %v2948 = vmul.f32 %v1924, %v2692
        %v2949 = vmul.f32 %v1925, %v2693
        %v2950 = vmul.f32 %v1926, %v2694
        %v2951 = vmul.f32 %v1927, %v2695
        %v2952 = vmul.f32 %v1928, %v2696
        %v2953 = vmul.f32 %v1929, %v2697
        %v2954 = vmul.f32 %v1930, %v2698
        %v2955 = vmul.f32 %v1931, %v2699
        %v2956 = vmul.f32 %v1932, %v2700
        %v2957 = vmul.f32 %v1933, %v2701
        %v2958 = vld [vmem:[#allocation8] sm:$0xff]
        %v2959 = vld [vmem:[#allocation8 + $0x8] sm:$0xff]
        %v2960 = vld [vmem:[#allocation8 + $0x10] sm:$0xff]
        %v2961 = vld [vmem:[#allocation8 + $0x18] sm:$0xff]
        %v2962 = vld [vmem:[#allocation8 + $0x20] sm:$0xff]
        %v2963 = vld [vmem:[#allocation8 + $0x28] sm:$0xff]
        %v2964 = vld [vmem:[#allocation8 + $0x30] sm:$0xff]
        %v2965 = vld [vmem:[#allocation8 + $0x38] sm:$0xff]
        %v2966 = vld [vmem:[#allocation8 + $0x40] sm:$0xff]
        %v2967 = vld [vmem:[#allocation8 + $0x48] sm:$0xff]
        %v2968 = vld [vmem:[#allocation8 + $0x50] sm:$0xff]
        %v2969 = vld [vmem:[#allocation8 + $0x58] sm:$0xff]
        %v2970 = vld [vmem:[#allocation8 + $0x60] sm:$0xff]
        %v2971 = vld [vmem:[#allocation8 + $0x68] sm:$0xff]
        %v2972 = vld [vmem:[#allocation8 + $0x70] sm:$0xff]
        %v2973 = vld [vmem:[#allocation8 + $0x78] sm:$0xff]
        %v2974 = vld [vmem:[#allocation8 + $0x80] sm:$0xff]
        %v2975 = vld [vmem:[#allocation8 + $0x88] sm:$0xff]
        %v2976 = vld [vmem:[#allocation8 + $0x90] sm:$0xff]
        %v2977 = vld [vmem:[#allocation8 + $0x98] sm:$0xff]
        %v2978 = vld [vmem:[#allocation8 + $0xa0] sm:$0xff]
        %v2979 = vld [vmem:[#allocation8 + $0xa8] sm:$0xff]
        %v2980 = vld [vmem:[#allocation8 + $0xb0] sm:$0xff]
        %v2981 = vld [vmem:[#allocation8 + $0xb8] sm:$0xff]
        %v2982 = vld [vmem:[#allocation8 + $0xc0] sm:$0xff]
        %v2983 = vld [vmem:[#allocation8 + $0xc8] sm:$0xff]
        %v2984 = vld [vmem:[#allocation8 + $0xd0] sm:$0xff]
        %v2985 = vld [vmem:[#allocation8 + $0xd8] sm:$0xff]
        %v2986 = vld [vmem:[#allocation8 + $0xe0] sm:$0xff]
        %v2987 = vld [vmem:[#allocation8 + $0xe8] sm:$0xff]
        %v2988 = vld [vmem:[#allocation8 + $0xf0] sm:$0xff]
        %v2989 = vld [vmem:[#allocation8 + $0xf8] sm:$0xff]
        %v2990 = vld [vmem:[#allocation8 + $0x100] sm:$0xff]
        %v2991 = vld [vmem:[#allocation8 + $0x108] sm:$0xff]
        %v2992 = vld [vmem:[#allocation8 + $0x110] sm:$0xff]
        %v2993 = vld [vmem:[#allocation8 + $0x118] sm:$0xff]
        %v2994 = vld [vmem:[#allocation8 + $0x120] sm:$0xff]
        %v2995 = vld [vmem:[#allocation8 + $0x128] sm:$0xff]
        %v2996 = vld [vmem:[#allocation8 + $0x130] sm:$0xff]
        %v2997 = vld [vmem:[#allocation8 + $0x138] sm:$0xff]
        %v2998 = vld [vmem:[#allocation8 + $0x140] sm:$0xff]
        %v2999 = vld [vmem:[#allocation8 + $0x148] sm:$0xff]
        %v3000 = vld [vmem:[#allocation8 + $0x150] sm:$0xff]
        %v3001 = vld [vmem:[#allocation8 + $0x158] sm:$0xff]
        %v3002 = vld [vmem:[#allocation8 + $0x160] sm:$0xff]
        %v3003 = vld [vmem:[#allocation8 + $0x168] sm:$0xff]
        %v3004 = vld [vmem:[#allocation8 + $0x170] sm:$0xff]
        %v3005 = vld [vmem:[#allocation8 + $0x178] sm:$0xff]
        %v3006 = vld [vmem:[#allocation8 + $0x180] sm:$0xff]
        %v3007 = vld [vmem:[#allocation8 + $0x188] sm:$0xff]
        %v3008 = vld [vmem:[#allocation8 + $0x190] sm:$0xff]
        %v3009 = vld [vmem:[#allocation8 + $0x198] sm:$0xff]
        %v3010 = vld [vmem:[#allocation8 + $0x1a0] sm:$0xff]
        %v3011 = vld [vmem:[#allocation8 + $0x1a8] sm:$0xff]
        %v3012 = vld [vmem:[#allocation8 + $0x1b0] sm:$0xff]
        %v3013 = vld [vmem:[#allocation8 + $0x1b8] sm:$0xff]
        %v3014 = vld [vmem:[#allocation8 + $0x1c0] sm:$0xff]
        %v3015 = vld [vmem:[#allocation8 + $0x1c8] sm:$0xff]
        %v3016 = vld [vmem:[#allocation8 + $0x1d0] sm:$0xff]
        %v3017 = vld [vmem:[#allocation8 + $0x1d8] sm:$0xff]
        %v3018 = vld [vmem:[#allocation8 + $0x1e0] sm:$0xff]
        %v3019 = vld [vmem:[#allocation8 + $0x1e8] sm:$0xff]
        %v3020 = vld [vmem:[#allocation8 + $0x1f0] sm:$0xff]
        %v3021 = vld [vmem:[#allocation8 + $0x1f8] sm:$0xff]
        %v3022 = vld [vmem:[#allocation8 + $0x200] sm:$0xff]
        %v3023 = vld [vmem:[#allocation8 + $0x208] sm:$0xff]
        %v3024 = vld [vmem:[#allocation8 + $0x210] sm:$0xff]
        %v3025 = vld [vmem:[#allocation8 + $0x218] sm:$0xff]
        %v3026 = vld [vmem:[#allocation8 + $0x220] sm:$0xff]
        %v3027 = vld [vmem:[#allocation8 + $0x228] sm:$0xff]
        %v3028 = vld [vmem:[#allocation8 + $0x230] sm:$0xff]
        %v3029 = vld [vmem:[#allocation8 + $0x238] sm:$0xff]
        %v3030 = vld [vmem:[#allocation8 + $0x240] sm:$0xff]
        %v3031 = vld [vmem:[#allocation8 + $0x248] sm:$0xff]
        %v3032 = vld [vmem:[#allocation8 + $0x250] sm:$0xff]
        %v3033 = vld [vmem:[#allocation8 + $0x258] sm:$0xff]
        %v3034 = vld [vmem:[#allocation8 + $0x260] sm:$0xff]
        %v3035 = vld [vmem:[#allocation8 + $0x268] sm:$0xff]
        %v3036 = vld [vmem:[#allocation8 + $0x270] sm:$0xff]
        %v3037 = vld [vmem:[#allocation8 + $0x278] sm:$0xff]
        %v3038 = vld [vmem:[#allocation8 + $0x280] sm:$0xff]
        %v3039 = vld [vmem:[#allocation8 + $0x288] sm:$0xff]
        %v3040 = vld [vmem:[#allocation8 + $0x290] sm:$0xff]
        %v3041 = vld [vmem:[#allocation8 + $0x298] sm:$0xff]
        %v3042 = vld [vmem:[#allocation8 + $0x2a0] sm:$0xff]
        %v3043 = vld [vmem:[#allocation8 + $0x2a8] sm:$0xff]
        %v3044 = vld [vmem:[#allocation8 + $0x2b0] sm:$0xff]
        %v3045 = vld [vmem:[#allocation8 + $0x2b8] sm:$0xff]
        %v3046 = vld [vmem:[#allocation8 + $0x2c0] sm:$0xff]
        %v3047 = vld [vmem:[#allocation8 + $0x2c8] sm:$0xff]
        %v3048 = vld [vmem:[#allocation8 + $0x2d0] sm:$0xff]
        %v3049 = vld [vmem:[#allocation8 + $0x2d8] sm:$0xff]
        %v3050 = vld [vmem:[#allocation8 + $0x2e0] sm:$0xff]
        %v3051 = vld [vmem:[#allocation8 + $0x2e8] sm:$0xff]
        %v3052 = vld [vmem:[#allocation8 + $0x2f0] sm:$0xff]
        %v3053 = vld [vmem:[#allocation8 + $0x2f8] sm:$0xff]
        %v3054 = vld [vmem:[#allocation8 + $0x300] sm:$0xff]
        %v3055 = vld [vmem:[#allocation8 + $0x308] sm:$0xff]
        %v3056 = vld [vmem:[#allocation8 + $0x310] sm:$0xff]
        %v3057 = vld [vmem:[#allocation8 + $0x318] sm:$0xff]
        %v3058 = vld [vmem:[#allocation8 + $0x320] sm:$0xff]
        %v3059 = vld [vmem:[#allocation8 + $0x328] sm:$0xff]
        %v3060 = vld [vmem:[#allocation8 + $0x330] sm:$0xff]
        %v3061 = vld [vmem:[#allocation8 + $0x338] sm:$0xff]
        %v3062 = vld [vmem:[#allocation8 + $0x340] sm:$0xff]
        %v3063 = vld [vmem:[#allocation8 + $0x348] sm:$0xff]
        %v3064 = vld [vmem:[#allocation8 + $0x350] sm:$0xff]
        %v3065 = vld [vmem:[#allocation8 + $0x358] sm:$0xff]
        %v3066 = vld [vmem:[#allocation8 + $0x360] sm:$0xff]
        %v3067 = vld [vmem:[#allocation8 + $0x368] sm:$0xff]
        %v3068 = vld [vmem:[#allocation8 + $0x370] sm:$0xff]
        %v3069 = vld [vmem:[#allocation8 + $0x378] sm:$0xff]
        %v3070 = vld [vmem:[#allocation8 + $0x380] sm:$0xff]
        %v3071 = vld [vmem:[#allocation8 + $0x388] sm:$0xff]
        %v3072 = vld [vmem:[#allocation8 + $0x390] sm:$0xff]
        %v3073 = vld [vmem:[#allocation8 + $0x398] sm:$0xff]
        %v3074 = vld [vmem:[#allocation8 + $0x3a0] sm:$0xff]
        %v3075 = vld [vmem:[#allocation8 + $0x3a8] sm:$0xff]
        %v3076 = vld [vmem:[#allocation8 + $0x3b0] sm:$0xff]
        %v3077 = vld [vmem:[#allocation8 + $0x3b8] sm:$0xff]
        %v3078 = vld [vmem:[#allocation8 + $0x3c0] sm:$0xff]
        %v3079 = vld [vmem:[#allocation8 + $0x3c8] sm:$0xff]
        %v3080 = vld [vmem:[#allocation8 + $0x3d0] sm:$0xff]
        %v3081 = vld [vmem:[#allocation8 + $0x3d8] sm:$0xff]
        %v3082 = vld [vmem:[#allocation8 + $0x3e0] sm:$0xff]
        %v3083 = vld [vmem:[#allocation8 + $0x3e8] sm:$0xff]
        %v3084 = vld [vmem:[#allocation8 + $0x3f0] sm:$0xff]
        %v3085 = vld [vmem:[#allocation8 + $0x3f8] sm:$0xff]
        %v3086 = vld [vmem:[#allocation8 + $0x400] sm:$0xff]
        %v3087 = vld [vmem:[#allocation8 + $0x408] sm:$0xff]
        %v3088 = vld [vmem:[#allocation8 + $0x410] sm:$0xff]
        %v3089 = vld [vmem:[#allocation8 + $0x418] sm:$0xff]
        %v3090 = vld [vmem:[#allocation8 + $0x420] sm:$0xff]
        %v3091 = vld [vmem:[#allocation8 + $0x428] sm:$0xff]
        %v3092 = vld [vmem:[#allocation8 + $0x430] sm:$0xff]
        %v3093 = vld [vmem:[#allocation8 + $0x438] sm:$0xff]
        %v3094 = vld [vmem:[#allocation8 + $0x440] sm:$0xff]
        %v3095 = vld [vmem:[#allocation8 + $0x448] sm:$0xff]
        %v3096 = vld [vmem:[#allocation8 + $0x450] sm:$0xff]
        %v3097 = vld [vmem:[#allocation8 + $0x458] sm:$0xff]
        %v3098 = vld [vmem:[#allocation8 + $0x460] sm:$0xff]
        %v3099 = vld [vmem:[#allocation8 + $0x468] sm:$0xff]
        %v3100 = vld [vmem:[#allocation8 + $0x470] sm:$0xff]
        %v3101 = vld [vmem:[#allocation8 + $0x478] sm:$0xff]
        %v3102 = vld [vmem:[#allocation8 + $0x480] sm:$0xff]
        %v3103 = vld [vmem:[#allocation8 + $0x488] sm:$0xff]
        %v3104 = vld [vmem:[#allocation8 + $0x490] sm:$0xff]
        %v3105 = vld [vmem:[#allocation8 + $0x498] sm:$0xff]
        %v3106 = vld [vmem:[#allocation8 + $0x4a0] sm:$0xff]
        %v3107 = vld [vmem:[#allocation8 + $0x4a8] sm:$0xff]
        %v3108 = vld [vmem:[#allocation8 + $0x4b0] sm:$0xff]
        %v3109 = vld [vmem:[#allocation8 + $0x4b8] sm:$0xff]
        %v3110 = vld [vmem:[#allocation8 + $0x4c0] sm:$0xff]
        %v3111 = vld [vmem:[#allocation8 + $0x4c8] sm:$0xff]
        %v3112 = vld [vmem:[#allocation8 + $0x4d0] sm:$0xff]
        %v3113 = vld [vmem:[#allocation8 + $0x4d8] sm:$0xff]
        %v3114 = vld [vmem:[#allocation8 + $0x4e0] sm:$0xff]
        %v3115 = vld [vmem:[#allocation8 + $0x4e8] sm:$0xff]
        %v3116 = vld [vmem:[#allocation8 + $0x4f0] sm:$0xff]
        %v3117 = vld [vmem:[#allocation8 + $0x4f8] sm:$0xff]
        %v3118 = vld [vmem:[#allocation8 + $0x500] sm:$0xff]
        %v3119 = vld [vmem:[#allocation8 + $0x508] sm:$0xff]
        %v3120 = vld [vmem:[#allocation8 + $0x510] sm:$0xff]
        %v3121 = vld [vmem:[#allocation8 + $0x518] sm:$0xff]
        %v3122 = vld [vmem:[#allocation8 + $0x520] sm:$0xff]
        %v3123 = vld [vmem:[#allocation8 + $0x528] sm:$0xff]
        %v3124 = vld [vmem:[#allocation8 + $0x530] sm:$0xff]
        %v3125 = vld [vmem:[#allocation8 + $0x538] sm:$0xff]
        %v3126 = vld [vmem:[#allocation8 + $0x540] sm:$0xff]
        %v3127 = vld [vmem:[#allocation8 + $0x548] sm:$0xff]
        %v3128 = vld [vmem:[#allocation8 + $0x550] sm:$0xff]
        %v3129 = vld [vmem:[#allocation8 + $0x558] sm:$0xff]
        %v3130 = vld [vmem:[#allocation8 + $0x560] sm:$0xff]
        %v3131 = vld [vmem:[#allocation8 + $0x568] sm:$0xff]
        %v3132 = vld [vmem:[#allocation8 + $0x570] sm:$0xff]
        %v3133 = vld [vmem:[#allocation8 + $0x578] sm:$0xff]
        %v3134 = vld [vmem:[#allocation8 + $0x580] sm:$0xff]
        %v3135 = vld [vmem:[#allocation8 + $0x588] sm:$0xff]
        %v3136 = vld [vmem:[#allocation8 + $0x590] sm:$0xff]
        %v3137 = vld [vmem:[#allocation8 + $0x598] sm:$0xff]
        %v3138 = vld [vmem:[#allocation8 + $0x5a0] sm:$0xff]
        %v3139 = vld [vmem:[#allocation8 + $0x5a8] sm:$0xff]
        %v3140 = vld [vmem:[#allocation8 + $0x5b0] sm:$0xff]
        %v3141 = vld [vmem:[#allocation8 + $0x5b8] sm:$0xff]
        %v3142 = vld [vmem:[#allocation8 + $0x5c0] sm:$0xff]
        %v3143 = vld [vmem:[#allocation8 + $0x5c8] sm:$0xff]
        %v3144 = vld [vmem:[#allocation8 + $0x5d0] sm:$0xff]
        %v3145 = vld [vmem:[#allocation8 + $0x5d8] sm:$0xff]
        %v3146 = vld [vmem:[#allocation8 + $0x5e0] sm:$0xff]
        %v3147 = vld [vmem:[#allocation8 + $0x5e8] sm:$0xff]
        %v3148 = vld [vmem:[#allocation8 + $0x5f0] sm:$0xff]
        %v3149 = vld [vmem:[#allocation8 + $0x5f8] sm:$0xff]
        %v3150 = vld [vmem:[#allocation8 + $0x600] sm:$0xff]
        %v3151 = vld [vmem:[#allocation8 + $0x608] sm:$0xff]
        %v3152 = vld [vmem:[#allocation8 + $0x610] sm:$0xff]
        %v3153 = vld [vmem:[#allocation8 + $0x618] sm:$0xff]
        %v3154 = vld [vmem:[#allocation8 + $0x620] sm:$0xff]
        %v3155 = vld [vmem:[#allocation8 + $0x628] sm:$0xff]
        %v3156 = vld [vmem:[#allocation8 + $0x630] sm:$0xff]
        %v3157 = vld [vmem:[#allocation8 + $0x638] sm:$0xff]
        %v3158 = vld [vmem:[#allocation8 + $0x640] sm:$0xff]
        %v3159 = vld [vmem:[#allocation8 + $0x648] sm:$0xff]
        %v3160 = vld [vmem:[#allocation8 + $0x650] sm:$0xff]
        %v3161 = vld [vmem:[#allocation8 + $0x658] sm:$0xff]
        %v3162 = vld [vmem:[#allocation8 + $0x660] sm:$0xff]
        %v3163 = vld [vmem:[#allocation8 + $0x668] sm:$0xff]
        %v3164 = vld [vmem:[#allocation8 + $0x670] sm:$0xff]
        %v3165 = vld [vmem:[#allocation8 + $0x678] sm:$0xff]
        %v3166 = vld [vmem:[#allocation8 + $0x680] sm:$0xff]
        %v3167 = vld [vmem:[#allocation8 + $0x688] sm:$0xff]
        %v3168 = vld [vmem:[#allocation8 + $0x690] sm:$0xff]
        %v3169 = vld [vmem:[#allocation8 + $0x698] sm:$0xff]
        %v3170 = vld [vmem:[#allocation8 + $0x6a0] sm:$0xff]
        %v3171 = vld [vmem:[#allocation8 + $0x6a8] sm:$0xff]
        %v3172 = vld [vmem:[#allocation8 + $0x6b0] sm:$0xff]
        %v3173 = vld [vmem:[#allocation8 + $0x6b8] sm:$0xff]
        %v3174 = vld [vmem:[#allocation8 + $0x6c0] sm:$0xff]
        %v3175 = vld [vmem:[#allocation8 + $0x6c8] sm:$0xff]
        %v3176 = vld [vmem:[#allocation8 + $0x6d0] sm:$0xff]
        %v3177 = vld [vmem:[#allocation8 + $0x6d8] sm:$0xff]
        %v3178 = vld [vmem:[#allocation8 + $0x6e0] sm:$0xff]
        %v3179 = vld [vmem:[#allocation8 + $0x6e8] sm:$0xff]
        %v3180 = vld [vmem:[#allocation8 + $0x6f0] sm:$0xff]
        %v3181 = vld [vmem:[#allocation8 + $0x6f8] sm:$0xff]
        %v3182 = vld [vmem:[#allocation8 + $0x700] sm:$0xff]
        %v3183 = vld [vmem:[#allocation8 + $0x708] sm:$0xff]
        %v3184 = vld [vmem:[#allocation8 + $0x710] sm:$0xff]
        %v3185 = vld [vmem:[#allocation8 + $0x718] sm:$0xff]
        %v3186 = vld [vmem:[#allocation8 + $0x720] sm:$0xff]
        %v3187 = vld [vmem:[#allocation8 + $0x728] sm:$0xff]
        %v3188 = vld [vmem:[#allocation8 + $0x730] sm:$0xff]
        %v3189 = vld [vmem:[#allocation8 + $0x738] sm:$0xff]
        %v3190 = vld [vmem:[#allocation8 + $0x740] sm:$0xff]
        %v3191 = vld [vmem:[#allocation8 + $0x748] sm:$0xff]
        %v3192 = vld [vmem:[#allocation8 + $0x750] sm:$0xff]
        %v3193 = vld [vmem:[#allocation8 + $0x758] sm:$0xff]
        %v3194 = vld [vmem:[#allocation8 + $0x760] sm:$0xff]
        %v3195 = vld [vmem:[#allocation8 + $0x768] sm:$0xff]
        %v3196 = vld [vmem:[#allocation8 + $0x770] sm:$0xff]
        %v3197 = vld [vmem:[#allocation8 + $0x778] sm:$0xff]
        %v3198 = vld [vmem:[#allocation8 + $0x780] sm:$0xff]
        %v3199 = vld [vmem:[#allocation8 + $0x788] sm:$0xff]
        %v3200 = vld [vmem:[#allocation8 + $0x790] sm:$0xff]
        %v3201 = vld [vmem:[#allocation8 + $0x798] sm:$0xff]
        %v3202 = vld [vmem:[#allocation8 + $0x7a0] sm:$0xff]
        %v3203 = vld [vmem:[#allocation8 + $0x7a8] sm:$0xff]
        %v3204 = vld [vmem:[#allocation8 + $0x7b0] sm:$0xff]
        %v3205 = vld [vmem:[#allocation8 + $0x7b8] sm:$0xff]
        %v3206 = vld [vmem:[#allocation8 + $0x7c0] sm:$0xff]
        %v3207 = vld [vmem:[#allocation8 + $0x7c8] sm:$0xff]
        %v3208 = vld [vmem:[#allocation8 + $0x7d0] sm:$0xff]
        %v3209 = vld [vmem:[#allocation8 + $0x7d8] sm:$0xff]
        %v3210 = vld [vmem:[#allocation8 + $0x7e0] sm:$0xff]
        %v3211 = vld [vmem:[#allocation8 + $0x7e8] sm:$0xff]
        %v3212 = vld [vmem:[#allocation8 + $0x7f0] sm:$0xff]
        %v3213 = vld [vmem:[#allocation8 + $0x7f8] sm:$0xff]
        %v3214 = vld [vmem:[%s4] sm:$0x3]
        %v3216 = vlaneseq
        %v3217 = vshrl.u32 %v3216, 7
        %v3218 = vsub.s32 0, %v3217
        %v3219 = vrot.slane %v3214, %v3218
        %v3220 = vlaneseq
        %v3221 = vshrl.u32 %v3220, 7
        %v3222 = vsub.s32 1, %v3221
        %v3223 = vrot.slane %v3214, %v3222
        %3226 = vmatprep.subr.mxu0 %v2959
        %3227 = vmatpush1.msra.mxu0 %v2958
        %3228 = vmatprep.subr.mxu0 %v2961
        %3229 = vmatpush1.msra.mxu0 %v2960
        %3230 = vmatprep.subr.mxu0 %v2963
        %3231 = vmatpush1.msra.mxu0 %v2962
        %3232 = vmatprep.subr.mxu0 %v2965
        %3233 = vmatpush1.msra.mxu0 %v2964
        %3234 = vmatprep.subr.mxu0 %v2967
        %3235 = vmatpush1.msra.mxu0 %v2966
        %3236 = vmatprep.subr.mxu0 %v2969
        %3237 = vmatpush1.msra.mxu0 %v2968
        %3238 = vmatprep.subr.mxu0 %v2971
        %3239 = vmatpush1.msra.mxu0 %v2970
        %3240 = vmatprep.subr.mxu0 %v2973
        %3241 = vmatpush1.msra.mxu0 %v2972
        %3242 = vmatprep.subr.mxu0 %v2975
        %3243 = vmatpush1.msra.mxu0 %v2974
        %3244 = vmatprep.subr.mxu0 %v2977
        %3245 = vmatpush1.msra.mxu0 %v2976
        %3246 = vmatprep.subr.mxu0 %v2979
        %3247 = vmatpush1.msra.mxu0 %v2978
        %3248 = vmatprep.subr.mxu0 %v2981
        %3249 = vmatpush1.msra.mxu0 %v2980
        %3250 = vmatprep.subr.mxu0 %v2983
        %3251 = vmatpush1.msra.mxu0 %v2982
        %3252 = vmatprep.subr.mxu0 %v2985
        %3253 = vmatpush1.msra.mxu0 %v2984
        %3254 = vmatprep.subr.mxu0 %v2987
        %3255 = vmatpush1.msra.mxu0 %v2986
        %3256 = vmatprep.subr.mxu0 %v2989
        %3257 = vmatpush1.msra.mxu0 %v2988
        %3258 = vmatprep.subr.mxu0 %v2991
        %3259 = vmatpush1.msra.mxu0 %v2990
        %3260 = vmatprep.subr.mxu0 %v2993
        %3261 = vmatpush1.msra.mxu0 %v2992
        %3262 = vmatprep.subr.mxu0 %v2995
        %3263 = vmatpush1.msra.mxu0 %v2994
        %3264 = vmatprep.subr.mxu0 %v2997
        %3265 = vmatpush1.msra.mxu0 %v2996
        %3266 = vmatprep.subr.mxu0 %v2999
        %3267 = vmatpush1.msra.mxu0 %v2998
        %3268 = vmatprep.subr.mxu0 %v3001
        %3269 = vmatpush1.msra.mxu0 %v3000
        %3270 = vmatprep.subr.mxu0 %v3003
        %3271 = vmatpush1.msra.mxu0 %v3002
        %3272 = vmatprep.subr.mxu0 %v3005
        %3273 = vmatpush1.msra.mxu0 %v3004
        %3274 = vmatprep.subr.mxu0 %v3007
        %3275 = vmatpush1.msra.mxu0 %v3006
        %3276 = vmatprep.subr.mxu0 %v3009
        %3277 = vmatpush1.msra.mxu0 %v3008
        %3278 = vmatprep.subr.mxu0 %v3011
        %3279 = vmatpush1.msra.mxu0 %v3010
        %3280 = vmatprep.subr.mxu0 %v3013
        %3281 = vmatpush1.msra.mxu0 %v3012
        %3282 = vmatprep.subr.mxu0 %v3015
        %3283 = vmatpush1.msra.mxu0 %v3014
        %3284 = vmatprep.subr.mxu0 %v3017
        %3285 = vmatpush1.msra.mxu0 %v3016
        %3286 = vmatprep.subr.mxu0 %v3019
        %3287 = vmatpush1.msra.mxu0 %v3018
        %3288 = vmatprep.subr.mxu0 %v3021
        %3289 = vmatpush1.msra.mxu0 %v3020
        %3290 = vmatprep.mubr.f32.mxu0 %v2703
        %3291 = vmatmul.mubr.f32.gmra.mrb[0].mxu0 %v2702
        %v3292 = vpop.f32.mrb[0].mxu0
        %v3293 = vadd.f32 %v3219, %v3292
        %v3294 = vpop.f32.mrb[0].mxu0
        %v3295 = vadd.f32 %v3223, %v3294
        %3296 = vmatprep.mubr.f32.mxu0 %v2711
        %3297 = vmatmul.mubr.f32.gmra.mrb[0].mxu0 %v2710
        %v3298 = vpop.f32.mrb[0].mxu0
        %v3299 = vadd.f32 %v3219, %v3298
        %v3300 = vpop.f32.mrb[0].mxu0
        %v3301 = vadd.f32 %v3223, %v3300
        %3302 = vmatprep.mubr.f32.mxu0 %v2719
        %3303 = vmatmul.mubr.f32.gmra.mrb[0].mxu0 %v2718
        %v3304 = vpop.f32.mrb[0].mxu0
        %v3305 = vadd.f32 %v3219, %v3304
        %v3306 = vpop.f32.mrb[0].mxu0
        %v3307 = vadd.f32 %v3223, %v3306
        %3308 = vmatprep.mubr.f32.mxu0 %v2727
        %3309 = vmatmul.mubr.f32.gmra.mrb[0].mxu0 %v2726
        %v3310 = vpop.f32.mrb[0].mxu0
        %v3311 = vadd.f32 %v3219, %v3310
        %v3312 = vpop.f32.mrb[0].mxu0
        %v3313 = vadd.f32 %v3223, %v3312
        %3314 = vmatprep.mubr.f32.mxu0 %v2735
        %3315 = vmatmul.mubr.f32.gmra.mrb[0].mxu0 %v2734
        %v3316 = vpop.f32.mrb[0].mxu0
        %v3317 = vadd.f32 %v3219, %v3316
        %v3318 = vpop.f32.mrb[0].mxu0
        %v3319 = vadd.f32 %v3223, %v3318
        %3320 = vmatprep.mubr.f32.mxu0 %v2743
        %3321 = vmatmul.mubr.f32.gmra.mrb[0].mxu0 %v2742
        %v3322 = vpop.f32.mrb[0].mxu0
        %v3323 = vadd.f32 %v3219, %v3322
        %v3324 = vpop.f32.mrb[0].mxu0
        %v3325 = vadd.f32 %v3223, %v3324
        %3326 = vmatprep.mubr.f32.mxu0 %v2751
        %3327 = vmatmul.mubr.f32.gmra.mrb[0].mxu0 %v2750
        %v3328 = vpop.f32.mrb[0].mxu0
        %v3329 = vadd.f32 %v3219, %v3328
        %v3330 = vpop.f32.mrb[0].mxu0
        %v3331 = vadd.f32 %v3223, %v3330
        %3332 = vmatprep.mubr.f32.mxu0 %v2759
        %3333 = vmatmul.mubr.f32.gmra.mrb[0].mxu0 %v2758
        %v3334 = vpop.f32.mrb[0].mxu0
        %v3335 = vadd.f32 %v3219, %v3334
        %v3336 = vpop.f32.mrb[0].mxu0
        %v3337 = vadd.f32 %v3223, %v3336
        %3338 = vmatprep.mubr.f32.mxu0 %v2767
        %3339 = vmatmul.mubr.f32.gmra.mrb[0].mxu0 %v2766
        %v3340 = vpop.f32.mrb[0].mxu0
        %v3341 = vadd.f32 %v3219, %v3340
        %v3342 = vpop.f32.mrb[0].mxu0
        %v3343 = vadd.f32 %v3223, %v3342
        %3344 = vmatprep.mubr.f32.mxu0 %v2775
        %3345 = vmatmul.mubr.f32.gmra.mrb[0].mxu0 %v2774
        %v3346 = vpop.f32.mrb[0].mxu0
        %v3347 = vadd.f32 %v3219, %v3346
        %v3348 = vpop.f32.mrb[0].mxu0
        %v3349 = vadd.f32 %v3223, %v3348
        %3350 = vmatprep.mubr.f32.mxu0 %v2783
        %3351 = vmatmul.mubr.f32.gmra.mrb[0].mxu0 %v2782
        %v3352 = vpop.f32.mrb[0].mxu0
        %v3353 = vadd.f32 %v3219, %v3352
        %v3354 = vpop.f32.mrb[0].mxu0
        %v3355 = vadd.f32 %v3223, %v3354
        %3356 = vmatprep.mubr.f32.mxu0 %v2791
        %3357 = vmatmul.mubr.f32.gmra.mrb[0].mxu0 %v2790
        %v3358 = vpop.f32.mrb[0].mxu0
        %v3359 = vadd.f32 %v3219, %v3358
        %v3360 = vpop.f32.mrb[0].mxu0
        %v3361 = vadd.f32 %v3223, %v3360
        %3362 = vmatprep.mubr.f32.mxu0 %v2799
        %3363 = vmatmul.mubr.f32.gmra.mrb[0].mxu0 %v2798
        %v3364 = vpop.f32.mrb[0].mxu0
        %v3365 = vadd.f32 %v3219, %v3364
        %v3366 = vpop.f32.mrb[0].mxu0
        %v3367 = vadd.f32 %v3223, %v3366
        %3368 = vmatprep.mubr.f32.mxu0 %v2807
        %3369 = vmatmul.mubr.f32.gmra.mrb[0].mxu0 %v2806
        %v3370 = vpop.f32.mrb[0].mxu0
        %v3371 = vadd.f32 %v3219, %v3370
        %v3372 = vpop.f32.mrb[0].mxu0
        %v3373 = vadd.f32 %v3223, %v3372
        %3374 = vmatprep.mubr.f32.mxu0 %v2815
        %3375 = vmatmul.mubr.f32.gmra.mrb[0].mxu0 %v2814
        %v3376 = vpop.f32.mrb[0].mxu0
        %v3377 = vadd.f32 %v3219, %v3376
        %v3378 = vpop.f32.mrb[0].mxu0
        %v3379 = vadd.f32 %v3223, %v3378
        %3380 = vmatprep.mubr.f32.mxu0 %v2823
        %3381 = vmatmul.mubr.f32.gmra.mrb[0].mxu0 %v2822
        %v3382 = vpop.f32.mrb[0].mxu0
        %v3383 = vadd.f32 %v3219, %v3382
        %v3384 = vpop.f32.mrb[0].mxu0
        %v3385 = vadd.f32 %v3223, %v3384
        %3386 = vmatprep.mubr.f32.mxu0 %v2831
        %3387 = vmatmul.mubr.f32.gmra.mrb[0].mxu0 %v2830
        %v3388 = vpop.f32.mrb[0].mxu0
        %v3389 = vadd.f32 %v3219, %v3388
        %v3390 = vpop.f32.mrb[0].mxu0
        %v3391 = vadd.f32 %v3223, %v3390
        %3392 = vmatprep.mubr.f32.mxu0 %v2839
        %3393 = vmatmul.mubr.f32.gmra.mrb[0].mxu0 %v2838
        %v3394 = vpop.f32.mrb[0].mxu0
        %v3395 = vadd.f32 %v3219, %v3394
        %v3396 = vpop.f32.mrb[0].mxu0
        %v3397 = vadd.f32 %v3223, %v3396
        %3398 = vmatprep.mubr.f32.mxu0 %v2847
        %3399 = vmatmul.mubr.f32.gmra.mrb[0].mxu0 %v2846
        %v3400 = vpop.f32.mrb[0].mxu0
        %v3401 = vadd.f32 %v3219, %v3400
        %v3402 = vpop.f32.mrb[0].mxu0
        %v3403 = vadd.f32 %v3223, %v3402
        %3404 = vmatprep.mubr.f32.mxu0 %v2855
        %3405 = vmatmul.mubr.f32.gmra.mrb[0].mxu0 %v2854
        %v3406 = vpop.f32.mrb[0].mxu0
        %v3407 = vadd.f32 %v3219, %v3406
        %v3408 = vpop.f32.mrb[0].mxu0
        %v3409 = vadd.f32 %v3223, %v3408
        %3410 = vmatprep.mubr.f32.mxu0 %v2863
        %3411 = vmatmul.mubr.f32.gmra.mrb[0].mxu0 %v2862
        %v3412 = vpop.f32.mrb[0].mxu0
        %v3413 = vadd.f32 %v3219, %v3412
        %v3414 = vpop.f32.mrb[0].mxu0
        %v3415 = vadd.f32 %v3223, %v3414
        %3416 = vmatprep.mubr.f32.mxu0 %v2871
        %3417 = vmatmul.mubr.f32.gmra.mrb[0].mxu0 %v2870
        %v3418 = vpop.f32.mrb[0].mxu0
        %v3419 = vadd.f32 %v3219, %v3418
        %v3420 = vpop.f32.mrb[0].mxu0
        %v3421 = vadd.f32 %v3223, %v3420
        %3422 = vmatprep.mubr.f32.mxu0 %v2879
        %3423 = vmatmul.mubr.f32.gmra.mrb[0].mxu0 %v2878
        %v3424 = vpop.f32.mrb[0].mxu0
        %v3425 = vadd.f32 %v3219, %v3424
        %v3426 = vpop.f32.mrb[0].mxu0
        %v3427 = vadd.f32 %v3223, %v3426
        %3428 = vmatprep.mubr.f32.mxu0 %v2887
        %3429 = vmatmul.mubr.f32.gmra.mrb[0].mxu0 %v2886
        %v3430 = vpop.f32.mrb[0].mxu0
        %v3431 = vadd.f32 %v3219, %v3430
        %v3432 = vpop.f32.mrb[0].mxu0
        %v3433 = vadd.f32 %v3223, %v3432
        %3434 = vmatprep.mubr.f32.mxu0 %v2895
        %3435 = vmatmul.mubr.f32.gmra.mrb[0].mxu0 %v2894
        %v3436 = vpop.f32.mrb[0].mxu0
        %v3437 = vadd.f32 %v3219, %v3436
        %v3438 = vpop.f32.mrb[0].mxu0
        %v3439 = vadd.f32 %v3223, %v3438
        %3440 = vmatprep.mubr.f32.mxu0 %v2903
        %3441 = vmatmul.mubr.f32.gmra.mrb[0].mxu0 %v2902
        %v3442 = vpop.f32.mrb[0].mxu0
        %v3443 = vadd.f32 %v3219, %v3442
        %v3444 = vpop.f32.mrb[0].mxu0
        %v3445 = vadd.f32 %v3223, %v3444
        %3446 = vmatprep.mubr.f32.mxu0 %v2911
        %3447 = vmatmul.mubr.f32.gmra.mrb[0].mxu0 %v2910
        %v3448 = vpop.f32.mrb[0].mxu0
        %v3449 = vadd.f32 %v3219, %v3448
        %v3450 = vpop.f32.mrb[0].mxu0
        %v3451 = vadd.f32 %v3223, %v3450
        %3452 = vmatprep.mubr.f32.mxu0 %v2919
        %3453 = vmatmul.mubr.f32.gmra.mrb[0].mxu0 %v2918
        %v3454 = vpop.f32.mrb[0].mxu0
        %v3455 = vadd.f32 %v3219, %v3454
        %v3456 = vpop.f32.mrb[0].mxu0
        %v3457 = vadd.f32 %v3223, %v3456
        %3458 = vmatprep.mubr.f32.mxu0 %v2927
        %3459 = vmatmul.mubr.f32.gmra.mrb[0].mxu0 %v2926
        %v3460 = vpop.f32.mrb[0].mxu0
        %v3461 = vadd.f32 %v3219, %v3460
        %v3462 = vpop.f32.mrb[0].mxu0
        %v3463 = vadd.f32 %v3223, %v3462
        %3464 = vmatprep.mubr.f32.mxu0 %v2935
        %3465 = vmatmul.mubr.f32.gmra.mrb[0].mxu0 %v2934
        %v3466 = vpop.f32.mrb[0].mxu0
        %v3467 = vadd.f32 %v3219, %v3466
        %v3468 = vpop.f32.mrb[0].mxu0
        %v3469 = vadd.f32 %v3223, %v3468
        %3470 = vmatprep.mubr.f32.mxu0 %v2943
        %3471 = vmatmul.mubr.f32.gmra.mrb[0].mxu0 %v2942
        %v3472 = vpop.f32.mrb[0].mxu0
        %v3473 = vadd.f32 %v3219, %v3472
        %v3474 = vpop.f32.mrb[0].mxu0
        %v3475 = vadd.f32 %v3223, %v3474
        %3476 = vmatprep.mubr.f32.mxu0 %v2951
        %3477 = vmatmul.mubr.f32.gmra.mrb[0].mxu0 %v2950
        %v3478 = vpop.f32.mrb[0].mxu0
        %v3479 = vadd.f32 %v3219, %v3478
        %v3480 = vpop.f32.mrb[0].mxu0
        %v3481 = vadd.f32 %v3223, %v3480
        %3482 = vdwg.mxu0
        %3483 = vmatprep.subr.mxu0 %v3023
        %3484 = vmatpush1.msra.mxu0 %v3022
        %3485 = vmatprep.subr.mxu0 %v3025
        %3486 = vmatpush1.msra.mxu0 %v3024
        %3487 = vmatprep.subr.mxu0 %v3027
        %3488 = vmatpush1.msra.mxu0 %v3026
        %3489 = vmatprep.subr.mxu0 %v3029
        %3490 = vmatpush1.msra.mxu0 %v3028
        %3491 = vmatprep.subr.mxu0 %v3031
        %3492 = vmatpush1.msra.mxu0 %v3030
        %3493 = vmatprep.subr.mxu0 %v3033
        %3494 = vmatpush1.msra.mxu0 %v3032
        %3495 = vmatprep.subr.mxu0 %v3035
        %3496 = vmatpush1.msra.mxu0 %v3034
        %3497 = vmatprep.subr.mxu0 %v3037
        %3498 = vmatpush1.msra.mxu0 %v3036
        %3499 = vmatprep.subr.mxu0 %v3039
        %3500 = vmatpush1.msra.mxu0 %v3038
        %3501 = vmatprep.subr.mxu0 %v3041
        %3502 = vmatpush1.msra.mxu0 %v3040
        %3503 = vmatprep.subr.mxu0 %v3043
        %3504 = vmatpush1.msra.mxu0 %v3042
        %3505 = vmatprep.subr.mxu0 %v3045
        %3506 = vmatpush1.msra.mxu0 %v3044
        %3507 = vmatprep.subr.mxu0 %v3047
        %3508 = vmatpush1.msra.mxu0 %v3046
        %3509 = vmatprep.subr.mxu0 %v3049
        %3510 = vmatpush1.msra.mxu0 %v3048
        %3511 = vmatprep.subr.mxu0 %v3051
        %3512 = vmatpush1.msra.mxu0 %v3050
        %3513 = vmatprep.subr.mxu0 %v3053
        %3514 = vmatpush1.msra.mxu0 %v3052
        %3515 = vmatprep.subr.mxu0 %v3055
        %3516 = vmatpush1.msra.mxu0 %v3054
        %3517 = vmatprep.subr.mxu0 %v3057
        %3518 = vmatpush1.msra.mxu0 %v3056
        %3519 = vmatprep.subr.mxu0 %v3059
        %3520 = vmatpush1.msra.mxu0 %v3058
        %3521 = vmatprep.subr.mxu0 %v3061
        %3522 = vmatpush1.msra.mxu0 %v3060
        %3523 = vmatprep.subr.mxu0 %v3063
        %3524 = vmatpush1.msra.mxu0 %v3062
        %3525 = vmatprep.subr.mxu0 %v3065
        %3526 = vmatpush1.msra.mxu0 %v3064
        %3527 = vmatprep.subr.mxu0 %v3067
        %3528 = vmatpush1.msra.mxu0 %v3066
        %3529 = vmatprep.subr.mxu0 %v3069
        %3530 = vmatpush1.msra.mxu0 %v3068
        %3531 = vmatprep.subr.mxu0 %v3071
        %3532 = vmatpush1.msra.mxu0 %v3070
        %3533 = vmatprep.subr.mxu0 %v3073
        %3534 = vmatpush1.msra.mxu0 %v3072
        %3535 = vmatprep.subr.mxu0 %v3075
        %3536 = vmatpush1.msra.mxu0 %v3074
        %3537 = vmatprep.subr.mxu0 %v3077
        %3538 = vmatpush1.msra.mxu0 %v3076
        %3539 = vmatprep.subr.mxu0 %v3079
        %3540 = vmatpush1.msra.mxu0 %v3078
        %3541 = vmatprep.subr.mxu0 %v3081
        %3542 = vmatpush1.msra.mxu0 %v3080
        %3543 = vmatprep.subr.mxu0 %v3083
        %3544 = vmatpush1.msra.mxu0 %v3082
        %3545 = vmatprep.subr.mxu0 %v3085
        %3546 = vmatpush1.msra.mxu0 %v3084
        %3547 = vmatprep.mubr.f32.mxu0 %v2705
        %3548 = vmatmul.mubr.f32.gmra.mrb[0].mxu0 %v2704
        %v3549 = vpop.f32.mrb[0].mxu0
        %v3550 = vadd.f32 %v3293, %v3549
        %v3551 = vpop.f32.mrb[0].mxu0
        %v3552 = vadd.f32 %v3295, %v3551
        %3553 = vmatprep.mubr.f32.mxu0 %v2713
        %3554 = vmatmul.mubr.f32.gmra.mrb[0].mxu0 %v2712
        %v3555 = vpop.f32.mrb[0].mxu0
        %v3556 = vadd.f32 %v3299, %v3555
        %v3557 = vpop.f32.mrb[0].mxu0
        %v3558 = vadd.f32 %v3301, %v3557
        %3559 = vmatprep.mubr.f32.mxu0 %v2721
        %3560 = vmatmul.mubr.f32.gmra.mrb[0].mxu0 %v2720
        %v3561 = vpop.f32.mrb[0].mxu0
        %v3562 = vadd.f32 %v3305, %v3561
        %v3563 = vpop.f32.mrb[0].mxu0
        %v3564 = vadd.f32 %v3307, %v3563
        %3565 = vmatprep.mubr.f32.mxu0 %v2729
        %3566 = vmatmul.mubr.f32.gmra.mrb[0].mxu0 %v2728
        %v3567 = vpop.f32.mrb[0].mxu0
        %v3568 = vadd.f32 %v3311, %v3567
        %v3569 = vpop.f32.mrb[0].mxu0
        %v3570 = vadd.f32 %v3313, %v3569
        %3571 = vmatprep.mubr.f32.mxu0 %v2737
        %3572 = vmatmul.mubr.f32.gmra.mrb[0].mxu0 %v2736
        %v3573 = vpop.f32.mrb[0].mxu0
        %v3574 = vadd.f32 %v3317, %v3573
        %v3575 = vpop.f32.mrb[0].mxu0
        %v3576 = vadd.f32 %v3319, %v3575
        %3577 = vmatprep.mubr.f32.mxu0 %v2745
        %3578 = vmatmul.mubr.f32.gmra.mrb[0].mxu0 %v2744
        %v3579 = vpop.f32.mrb[0].mxu0
        %v3580 = vadd.f32 %v3323, %v3579
        %v3581 = vpop.f32.mrb[0].mxu0
        %v3582 = vadd.f32 %v3325, %v3581
        %3583 = vmatprep.mubr.f32.mxu0 %v2753
        %3584 = vmatmul.mubr.f32.gmra.mrb[0].mxu0 %v2752
        %v3585 = vpop.f32.mrb[0].mxu0
        %v3586 = vadd.f32 %v3329, %v3585
        %v3587 = vpop.f32.mrb[0].mxu0
        %v3588 = vadd.f32 %v3331, %v3587
        %3589 = vmatprep.mubr.f32.mxu0 %v2761
        %3590 = vmatmul.mubr.f32.gmra.mrb[0].mxu0 %v2760
        %v3591 = vpop.f32.mrb[0].mxu0
        %v3592 = vadd.f32 %v3335, %v3591
        %v3593 = vpop.f32.mrb[0].mxu0
        %v3594 = vadd.f32 %v3337, %v3593
        %3595 = vmatprep.mubr.f32.mxu0 %v2769
        %3596 = vmatmul.mubr.f32.gmra.mrb[0].mxu0 %v2768
        %v3597 = vpop.f32.mrb[0].mxu0
        %v3598 = vadd.f32 %v3341, %v3597
        %v3599 = vpop.f32.mrb[0].mxu0
        %v3600 = vadd.f32 %v3343, %v3599
        %3601 = vmatprep.mubr.f32.mxu0 %v2777
        %3602 = vmatmul.mubr.f32.gmra.mrb[0].mxu0 %v2776
        %v3603 = vpop.f32.mrb[0].mxu0
        %v3604 = vadd.f32 %v3347, %v3603
        %v3605 = vpop.f32.mrb[0].mxu0
        %v3606 = vadd.f32 %v3349, %v3605
        %3607 = vmatprep.mubr.f32.mxu0 %v2785
        %3608 = vmatmul.mubr.f32.gmra.mrb[0].mxu0 %v2784
        %v3609 = vpop.f32.mrb[0].mxu0
        %v3610 = vadd.f32 %v3353, %v3609
        %v3611 = vpop.f32.mrb[0].mxu0
        %v3612 = vadd.f32 %v3355, %v3611
        %3613 = vmatprep.mubr.f32.mxu0 %v2793
        %3614 = vmatmul.mubr.f32.gmra.mrb[0].mxu0 %v2792
        %v3615 = vpop.f32.mrb[0].mxu0
        %v3616 = vadd.f32 %v3359, %v3615
        %v3617 = vpop.f32.mrb[0].mxu0
        %v3618 = vadd.f32 %v3361, %v3617
        %3619 = vmatprep.mubr.f32.mxu0 %v2801
        %3620 = vmatmul.mubr.f32.gmra.mrb[0].mxu0 %v2800
        %v3621 = vpop.f32.mrb[0].mxu0
        %v3622 = vadd.f32 %v3365, %v3621
        %v3623 = vpop.f32.mrb[0].mxu0
        %v3624 = vadd.f32 %v3367, %v3623
        %3625 = vmatprep.mubr.f32.mxu0 %v2809
        %3626 = vmatmul.mubr.f32.gmra.mrb[0].mxu0 %v2808
        %v3627 = vpop.f32.mrb[0].mxu0
        %v3628 = vadd.f32 %v3371, %v3627
        %v3629 = vpop.f32.mrb[0].mxu0
        %v3630 = vadd.f32 %v3373, %v3629
        %3631 = vmatprep.mubr.f32.mxu0 %v2817
        %3632 = vmatmul.mubr.f32.gmra.mrb[0].mxu0 %v2816
        %v3633 = vpop.f32.mrb[0].mxu0
        %v3634 = vadd.f32 %v3377, %v3633
        %v3635 = vpop.f32.mrb[0].mxu0
        %v3636 = vadd.f32 %v3379, %v3635
        %3637 = vmatprep.mubr.f32.mxu0 %v2825
        %3638 = vmatmul.mubr.f32.gmra.mrb[0].mxu0 %v2824
        %v3639 = vpop.f32.mrb[0].mxu0
        %v3640 = vadd.f32 %v3383, %v3639
        %v3641 = vpop.f32.mrb[0].mxu0
        %v3642 = vadd.f32 %v3385, %v3641
        %3643 = vmatprep.mubr.f32.mxu0 %v2833
        %3644 = vmatmul.mubr.f32.gmra.mrb[0].mxu0 %v2832
        %v3645 = vpop.f32.mrb[0].mxu0
        %v3646 = vadd.f32 %v3389, %v3645
        %v3647 = vpop.f32.mrb[0].mxu0
        %v3648 = vadd.f32 %v3391, %v3647
        %3649 = vmatprep.mubr.f32.mxu0 %v2841
        %3650 = vmatmul.mubr.f32.gmra.mrb[0].mxu0 %v2840
        %v3651 = vpop.f32.mrb[0].mxu0
        %v3652 = vadd.f32 %v3395, %v3651
        %v3653 = vpop.f32.mrb[0].mxu0
        %v3654 = vadd.f32 %v3397, %v3653
        %3655 = vmatprep.mubr.f32.mxu0 %v2849
        %3656 = vmatmul.mubr.f32.gmra.mrb[0].mxu0 %v2848
        %v3657 = vpop.f32.mrb[0].mxu0
        %v3658 = vadd.f32 %v3401, %v3657
        %v3659 = vpop.f32.mrb[0].mxu0
        %v3660 = vadd.f32 %v3403, %v3659
        %3661 = vmatprep.mubr.f32.mxu0 %v2857
        %3662 = vmatmul.mubr.f32.gmra.mrb[0].mxu0 %v2856
        %v3663 = vpop.f32.mrb[0].mxu0
        %v3664 = vadd.f32 %v3407, %v3663
        %v3665 = vpop.f32.mrb[0].mxu0
        %v3666 = vadd.f32 %v3409, %v3665
        %3667 = vmatprep.mubr.f32.mxu0 %v2865
        %3668 = vmatmul.mubr.f32.gmra.mrb[0].mxu0 %v2864
        %v3669 = vpop.f32.mrb[0].mxu0
        %v3670 = vadd.f32 %v3413, %v3669
        %v3671 = vpop.f32.mrb[0].mxu0
        %v3672 = vadd.f32 %v3415, %v3671
        %3673 = vmatprep.mubr.f32.mxu0 %v2873
        %3674 = vmatmul.mubr.f32.gmra.mrb[0].mxu0 %v2872
        %v3675 = vpop.f32.mrb[0].mxu0
        %v3676 = vadd.f32 %v3419, %v3675
        %v3677 = vpop.f32.mrb[0].mxu0
        %v3678 = vadd.f32 %v3421, %v3677
        %3679 = vmatprep.mubr.f32.mxu0 %v2881
        %3680 = vmatmul.mubr.f32.gmra.mrb[0].mxu0 %v2880
        %v3681 = vpop.f32.mrb[0].mxu0
        %v3682 = vadd.f32 %v3425, %v3681
        %v3683 = vpop.f32.mrb[0].mxu0
        %v3684 = vadd.f32 %v3427, %v3683
        %3685 = vmatprep.mubr.f32.mxu0 %v2889
        %3686 = vmatmul.mubr.f32.gmra.mrb[0].mxu0 %v2888
        %v3687 = vpop.f32.mrb[0].mxu0
        %v3688 = vadd.f32 %v3431, %v3687
        %v3689 = vpop.f32.mrb[0].mxu0
        %v3690 = vadd.f32 %v3433, %v3689
        %3691 = vmatprep.mubr.f32.mxu0 %v2897
        %3692 = vmatmul.mubr.f32.gmra.mrb[0].mxu0 %v2896
        %v3693 = vpop.f32.mrb[0].mxu0
        %v3694 = vadd.f32 %v3437, %v3693
        %v3695 = vpop.f32.mrb[0].mxu0
        %v3696 = vadd.f32 %v3439, %v3695
        %3697 = vmatprep.mubr.f32.mxu0 %v2905
        %3698 = vmatmul.mubr.f32.gmra.mrb[0].mxu0 %v2904
        %v3699 = vpop.f32.mrb[0].mxu0
        %v3700 = vadd.f32 %v3443, %v3699
        %v3701 = vpop.f32.mrb[0].mxu0
        %v3702 = vadd.f32 %v3445, %v3701
        %3703 = vmatprep.mubr.f32.mxu0 %v2913
        %3704 = vmatmul.mubr.f32.gmra.mrb[0].mxu0 %v2912
        %v3705 = vpop.f32.mrb[0].mxu0
        %v3706 = vadd.f32 %v3449, %v3705
        %v3707 = vpop.f32.mrb[0].mxu0
        %v3708 = vadd.f32 %v3451, %v3707
        %3709 = vmatprep.mubr.f32.mxu0 %v2921
        %3710 = vmatmul.mubr.f32.gmra.mrb[0].mxu0 %v2920
        %v3711 = vpop.f32.mrb[0].mxu0
        %v3712 = vadd.f32 %v3455, %v3711
        %v3713 = vpop.f32.mrb[0].mxu0
        %v3714 = vadd.f32 %v3457, %v3713
        %3715 = vmatprep.mubr.f32.mxu0 %v2929
        %3716 = vmatmul.mubr.f32.gmra.mrb[0].mxu0 %v2928
        %v3717 = vpop.f32.mrb[0].mxu0
        %v3718 = vadd.f32 %v3461, %v3717
        %v3719 = vpop.f32.mrb[0].mxu0
        %v3720 = vadd.f32 %v3463, %v3719
        %3721 = vmatprep.mubr.f32.mxu0 %v2937
        %3722 = vmatmul.mubr.f32.gmra.mrb[0].mxu0 %v2936
        %v3723 = vpop.f32.mrb[0].mxu0
        %v3724 = vadd.f32 %v3467, %v3723
        %v3725 = vpop.f32.mrb[0].mxu0
        %v3726 = vadd.f32 %v3469, %v3725
        %3727 = vmatprep.mubr.f32.mxu0 %v2945
        %3728 = vmatmul.mubr.f32.gmra.mrb[0].mxu0 %v2944
        %v3729 = vpop.f32.mrb[0].mxu0
        %v3730 = vadd.f32 %v3473, %v3729
        %v3731 = vpop.f32.mrb[0].mxu0
        %v3732 = vadd.f32 %v3475, %v3731
        %3733 = vmatprep.mubr.f32.mxu0 %v2953
        %3734 = vmatmul.mubr.f32.gmra.mrb[0].mxu0 %v2952
        %v3735 = vpop.f32.mrb[0].mxu0
        %v3736 = vadd.f32 %v3479, %v3735
        %v3737 = vpop.f32.mrb[0].mxu0
        %v3738 = vadd.f32 %v3481, %v3737
        %3739 = vdwg.mxu0
        %3740 = vmatprep.subr.mxu0 %v3087
        %3741 = vmatpush1.msra.mxu0 %v3086
        %3742 = vmatprep.subr.mxu0 %v3089
        %3743 = vmatpush1.msra.mxu0 %v3088
        %3744 = vmatprep.subr.mxu0 %v3091
        %3745 = vmatpush1.msra.mxu0 %v3090
        %3746 = vmatprep.subr.mxu0 %v3093
        %3747 = vmatpush1.msra.mxu0 %v3092
        %3748 = vmatprep.subr.mxu0 %v3095
        %3749 = vmatpush1.msra.mxu0 %v3094
        %3750 = vmatprep.subr.mxu0 %v3097
        %3751 = vmatpush1.msra.mxu0 %v3096
        %3752 = vmatprep.subr.mxu0 %v3099
        %3753 = vmatpush1.msra.mxu0 %v3098
        %3754 = vmatprep.subr.mxu0 %v3101
        %3755 = vmatpush1.msra.mxu0 %v3100
        %3756 = vmatprep.subr.mxu0 %v3103
        %3757 = vmatpush1.msra.mxu0 %v3102
        %3758 = vmatprep.subr.mxu0 %v3105
        %3759 = vmatpush1.msra.mxu0 %v3104
        %3760 = vmatprep.subr.mxu0 %v3107
        %3761 = vmatpush1.msra.mxu0 %v3106
        %3762 = vmatprep.subr.mxu0 %v3109
        %3763 = vmatpush1.msra.mxu0 %v3108
        %3764 = vmatprep.subr.mxu0 %v3111
        %3765 = vmatpush1.msra.mxu0 %v3110
        %3766 = vmatprep.subr.mxu0 %v3113
        %3767 = vmatpush1.msra.mxu0 %v3112
        %3768 = vmatprep.subr.mxu0 %v3115
        %3769 = vmatpush1.msra.mxu0 %v3114
        %3770 = vmatprep.subr.mxu0 %v3117
        %3771 = vmatpush1.msra.mxu0 %v3116
        %3772 = vmatprep.subr.mxu0 %v3119
        %3773 = vmatpush1.msra.mxu0 %v3118
        %3774 = vmatprep.subr.mxu0 %v3121
        %3775 = vmatpush1.msra.mxu0 %v3120
        %3776 = vmatprep.subr.mxu0 %v3123
        %3777 = vmatpush1.msra.mxu0 %v3122
        %3778 = vmatprep.subr.mxu0 %v3125
        %3779 = vmatpush1.msra.mxu0 %v3124
        %3780 = vmatprep.subr.mxu0 %v3127
        %3781 = vmatpush1.msra.mxu0 %v3126
        %3782 = vmatprep.subr.mxu0 %v3129
        %3783 = vmatpush1.msra.mxu0 %v3128
        %3784 = vmatprep.subr.mxu0 %v3131
        %3785 = vmatpush1.msra.mxu0 %v3130
        %3786 = vmatprep.subr.mxu0 %v3133
        %3787 = vmatpush1.msra.mxu0 %v3132
        %3788 = vmatprep.subr.mxu0 %v3135
        %3789 = vmatpush1.msra.mxu0 %v3134
        %3790 = vmatprep.subr.mxu0 %v3137
        %3791 = vmatpush1.msra.mxu0 %v3136
        %3792 = vmatprep.subr.mxu0 %v3139
        %3793 = vmatpush1.msra.mxu0 %v3138
        %3794 = vmatprep.subr.mxu0 %v3141
        %3795 = vmatpush1.msra.mxu0 %v3140
        %3796 = vmatprep.subr.mxu0 %v3143
        %3797 = vmatpush1.msra.mxu0 %v3142
        %3798 = vmatprep.subr.mxu0 %v3145
        %3799 = vmatpush1.msra.mxu0 %v3144
        %3800 = vmatprep.subr.mxu0 %v3147
        %3801 = vmatpush1.msra.mxu0 %v3146
        %3802 = vmatprep.subr.mxu0 %v3149
        %3803 = vmatpush1.msra.mxu0 %v3148
        %3804 = vmatprep.mubr.f32.mxu0 %v2707
        %3805 = vmatmul.mubr.f32.gmra.mrb[0].mxu0 %v2706
        %v3806 = vpop.f32.mrb[0].mxu0
        %v3807 = vadd.f32 %v3550, %v3806
        %v3808 = vpop.f32.mrb[0].mxu0
        %v3809 = vadd.f32 %v3552, %v3808
        %3810 = vmatprep.mubr.f32.mxu0 %v2715
        %3811 = vmatmul.mubr.f32.gmra.mrb[0].mxu0 %v2714
        %v3812 = vpop.f32.mrb[0].mxu0
        %v3813 = vadd.f32 %v3556, %v3812
        %v3814 = vpop.f32.mrb[0].mxu0
        %v3815 = vadd.f32 %v3558, %v3814
        %3816 = vmatprep.mubr.f32.mxu0 %v2723
        %3817 = vmatmul.mubr.f32.gmra.mrb[0].mxu0 %v2722
        %v3818 = vpop.f32.mrb[0].mxu0
        %v3819 = vadd.f32 %v3562, %v3818
        %v3820 = vpop.f32.mrb[0].mxu0
        %v3821 = vadd.f32 %v3564, %v3820
        %3822 = vmatprep.mubr.f32.mxu0 %v2731
        %3823 = vmatmul.mubr.f32.gmra.mrb[0].mxu0 %v2730
        %v3824 = vpop.f32.mrb[0].mxu0
        %v3825 = vadd.f32 %v3568, %v3824
        %v3826 = vpop.f32.mrb[0].mxu0
        %v3827 = vadd.f32 %v3570, %v3826
        %3828 = vmatprep.mubr.f32.mxu0 %v2739
        %3829 = vmatmul.mubr.f32.gmra.mrb[0].mxu0 %v2738
        %v3830 = vpop.f32.mrb[0].mxu0
        %v3831 = vadd.f32 %v3574, %v3830
        %v3832 = vpop.f32.mrb[0].mxu0
        %v3833 = vadd.f32 %v3576, %v3832
        %3834 = vmatprep.mubr.f32.mxu0 %v2747
        %3835 = vmatmul.mubr.f32.gmra.mrb[0].mxu0 %v2746
        %v3836 = vpop.f32.mrb[0].mxu0
        %v3837 = vadd.f32 %v3580, %v3836
        %v3838 = vpop.f32.mrb[0].mxu0
        %v3839 = vadd.f32 %v3582, %v3838
        %3840 = vmatprep.mubr.f32.mxu0 %v2755
        %3841 = vmatmul.mubr.f32.gmra.mrb[0].mxu0 %v2754
        %v3842 = vpop.f32.mrb[0].mxu0
        %v3843 = vadd.f32 %v3586, %v3842
        %v3844 = vpop.f32.mrb[0].mxu0
        %v3845 = vadd.f32 %v3588, %v3844
        %3846 = vmatprep.mubr.f32.mxu0 %v2763
        %3847 = vmatmul.mubr.f32.gmra.mrb[0].mxu0 %v2762
        %v3848 = vpop.f32.mrb[0].mxu0
        %v3849 = vadd.f32 %v3592, %v3848
        %v3850 = vpop.f32.mrb[0].mxu0
        %v3851 = vadd.f32 %v3594, %v3850
        %3852 = vmatprep.mubr.f32.mxu0 %v2771
        %3853 = vmatmul.mubr.f32.gmra.mrb[0].mxu0 %v2770
        %v3854 = vpop.f32.mrb[0].mxu0
        %v3855 = vadd.f32 %v3598, %v3854
        %v3856 = vpop.f32.mrb[0].mxu0
        %v3857 = vadd.f32 %v3600, %v3856
        %3858 = vmatprep.mubr.f32.mxu0 %v2779
        %3859 = vmatmul.mubr.f32.gmra.mrb[0].mxu0 %v2778
        %v3860 = vpop.f32.mrb[0].mxu0
        %v3861 = vadd.f32 %v3604, %v3860
        %v3862 = vpop.f32.mrb[0].mxu0
        %v3863 = vadd.f32 %v3606, %v3862
        %3864 = vmatprep.mubr.f32.mxu0 %v2787
        %3865 = vmatmul.mubr.f32.gmra.mrb[0].mxu0 %v2786
        %v3866 = vpop.f32.mrb[0].mxu0
        %v3867 = vadd.f32 %v3610, %v3866
        %v3868 = vpop.f32.mrb[0].mxu0
        %v3869 = vadd.f32 %v3612, %v3868
        %3870 = vmatprep.mubr.f32.mxu0 %v2795
        %3871 = vmatmul.mubr.f32.gmra.mrb[0].mxu0 %v2794
        %v3872 = vpop.f32.mrb[0].mxu0
        %v3873 = vadd.f32 %v3616, %v3872
        %v3874 = vpop.f32.mrb[0].mxu0
        %v3875 = vadd.f32 %v3618, %v3874
        %3876 = vmatprep.mubr.f32.mxu0 %v2803
        %3877 = vmatmul.mubr.f32.gmra.mrb[0].mxu0 %v2802
        %v3878 = vpop.f32.mrb[0].mxu0
        %v3879 = vadd.f32 %v3622, %v3878
        %v3880 = vpop.f32.mrb[0].mxu0
        %v3881 = vadd.f32 %v3624, %v3880
        %3882 = vmatprep.mubr.f32.mxu0 %v2811
        %3883 = vmatmul.mubr.f32.gmra.mrb[0].mxu0 %v2810
        %v3884 = vpop.f32.mrb[0].mxu0
        %v3885 = vadd.f32 %v3628, %v3884
        %v3886 = vpop.f32.mrb[0].mxu0
        %v3887 = vadd.f32 %v3630, %v3886
        %3888 = vmatprep.mubr.f32.mxu0 %v2819
        %3889 = vmatmul.mubr.f32.gmra.mrb[0].mxu0 %v2818
        %v3890 = vpop.f32.mrb[0].mxu0
        %v3891 = vadd.f32 %v3634, %v3890
        %v3892 = vpop.f32.mrb[0].mxu0
        %v3893 = vadd.f32 %v3636, %v3892
        %3894 = vmatprep.mubr.f32.mxu0 %v2827
        %3895 = vmatmul.mubr.f32.gmra.mrb[0].mxu0 %v2826
        %v3896 = vpop.f32.mrb[0].mxu0
        %v3897 = vadd.f32 %v3640, %v3896
        %v3898 = vpop.f32.mrb[0].mxu0
        %v3899 = vadd.f32 %v3642, %v3898
        %3900 = vmatprep.mubr.f32.mxu0 %v2835
        %3901 = vmatmul.mubr.f32.gmra.mrb[0].mxu0 %v2834
        %v3902 = vpop.f32.mrb[0].mxu0
        %v3903 = vadd.f32 %v3646, %v3902
        %v3904 = vpop.f32.mrb[0].mxu0
        %v3905 = vadd.f32 %v3648, %v3904
        %3906 = vmatprep.mubr.f32.mxu0 %v2843
        %3907 = vmatmul.mubr.f32.gmra.mrb[0].mxu0 %v2842
        %v3908 = vpop.f32.mrb[0].mxu0
        %v3909 = vadd.f32 %v3652, %v3908
        %v3910 = vpop.f32.mrb[0].mxu0
        %v3911 = vadd.f32 %v3654, %v3910
        %3912 = vmatprep.mubr.f32.mxu0 %v2851
        %3913 = vmatmul.mubr.f32.gmra.mrb[0].mxu0 %v2850
        %v3914 = vpop.f32.mrb[0].mxu0
        %v3915 = vadd.f32 %v3658, %v3914
        %v3916 = vpop.f32.mrb[0].mxu0
        %v3917 = vadd.f32 %v3660, %v3916
        %3918 = vmatprep.mubr.f32.mxu0 %v2859
        %3919 = vmatmul.mubr.f32.gmra.mrb[0].mxu0 %v2858
        %v3920 = vpop.f32.mrb[0].mxu0
        %v3921 = vadd.f32 %v3664, %v3920
        %v3922 = vpop.f32.mrb[0].mxu0
        %v3923 = vadd.f32 %v3666, %v3922
        %3924 = vmatprep.mubr.f32.mxu0 %v2867
        %3925 = vmatmul.mubr.f32.gmra.mrb[0].mxu0 %v2866
        %v3926 = vpop.f32.mrb[0].mxu0
        %v3927 = vadd.f32 %v3670, %v3926
        %v3928 = vpop.f32.mrb[0].mxu0
        %v3929 = vadd.f32 %v3672, %v3928
        %3930 = vmatprep.mubr.f32.mxu0 %v2875
        %3931 = vmatmul.mubr.f32.gmra.mrb[0].mxu0 %v2874
        %v3932 = vpop.f32.mrb[0].mxu0
        %v3933 = vadd.f32 %v3676, %v3932
        %v3934 = vpop.f32.mrb[0].mxu0
        %v3935 = vadd.f32 %v3678, %v3934
        %3936 = vmatprep.mubr.f32.mxu0 %v2883
        %3937 = vmatmul.mubr.f32.gmra.mrb[0].mxu0 %v2882
        %v3938 = vpop.f32.mrb[0].mxu0
        %v3939 = vadd.f32 %v3682, %v3938
        %v3940 = vpop.f32.mrb[0].mxu0
        %v3941 = vadd.f32 %v3684, %v3940
        %3942 = vmatprep.mubr.f32.mxu0 %v2891
        %3943 = vmatmul.mubr.f32.gmra.mrb[0].mxu0 %v2890
        %v3944 = vpop.f32.mrb[0].mxu0
        %v3945 = vadd.f32 %v3688, %v3944
        %v3946 = vpop.f32.mrb[0].mxu0
        %v3947 = vadd.f32 %v3690, %v3946
        %3948 = vmatprep.mubr.f32.mxu0 %v2899
        %3949 = vmatmul.mubr.f32.gmra.mrb[0].mxu0 %v2898
        %v3950 = vpop.f32.mrb[0].mxu0
        %v3951 = vadd.f32 %v3694, %v3950
        %v3952 = vpop.f32.mrb[0].mxu0
        %v3953 = vadd.f32 %v3696, %v3952
        %3954 = vmatprep.mubr.f32.mxu0 %v2907
        %3955 = vmatmul.mubr.f32.gmra.mrb[0].mxu0 %v2906
        %v3956 = vpop.f32.mrb[0].mxu0
        %v3957 = vadd.f32 %v3700, %v3956
        %v3958 = vpop.f32.mrb[0].mxu0
        %v3959 = vadd.f32 %v3702, %v3958
        %3960 = vmatprep.mubr.f32.mxu0 %v2915
        %3961 = vmatmul.mubr.f32.gmra.mrb[0].mxu0 %v2914
        %v3962 = vpop.f32.mrb[0].mxu0
        %v3963 = vadd.f32 %v3706, %v3962
        %v3964 = vpop.f32.mrb[0].mxu0
        %v3965 = vadd.f32 %v3708, %v3964
        %3966 = vmatprep.mubr.f32.mxu0 %v2923
        %3967 = vmatmul.mubr.f32.gmra.mrb[0].mxu0 %v2922
        %v3968 = vpop.f32.mrb[0].mxu0
        %v3969 = vadd.f32 %v3712, %v3968
        %v3970 = vpop.f32.mrb[0].mxu0
        %v3971 = vadd.f32 %v3714, %v3970
        %3972 = vmatprep.mubr.f32.mxu0 %v2931
        %3973 = vmatmul.mubr.f32.gmra.mrb[0].mxu0 %v2930
        %v3974 = vpop.f32.mrb[0].mxu0
        %v3975 = vadd.f32 %v3718, %v3974
        %v3976 = vpop.f32.mrb[0].mxu0
        %v3977 = vadd.f32 %v3720, %v3976
        %3978 = vmatprep.mubr.f32.mxu0 %v2939
        %3979 = vmatmul.mubr.f32.gmra.mrb[0].mxu0 %v2938
        %v3980 = vpop.f32.mrb[0].mxu0
        %v3981 = vadd.f32 %v3724, %v3980
        %v3982 = vpop.f32.mrb[0].mxu0
        %v3983 = vadd.f32 %v3726, %v3982
        %3984 = vmatprep.mubr.f32.mxu0 %v2947
        %3985 = vmatmul.mubr.f32.gmra.mrb[0].mxu0 %v2946
        %v3986 = vpop.f32.mrb[0].mxu0
        %v3987 = vadd.f32 %v3730, %v3986
        %v3988 = vpop.f32.mrb[0].mxu0
        %v3989 = vadd.f32 %v3732, %v3988
        %3990 = vmatprep.mubr.f32.mxu0 %v2955
        %3991 = vmatmul.mubr.f32.gmra.mrb[0].mxu0 %v2954
        %v3992 = vpop.f32.mrb[0].mxu0
        %v3993 = vadd.f32 %v3736, %v3992
        %v3994 = vpop.f32.mrb[0].mxu0
        %v3995 = vadd.f32 %v3738, %v3994
        %3996 = vdwg.mxu0
        %3997 = vmatprep.subr.mxu0 %v3151
        %3998 = vmatpush1.msra.mxu0 %v3150
        %3999 = vmatprep.subr.mxu0 %v3153
        %4000 = vmatpush1.msra.mxu0 %v3152
        %4001 = vmatprep.subr.mxu0 %v3155
        %4002 = vmatpush1.msra.mxu0 %v3154
        %4003 = vmatprep.subr.mxu0 %v3157
        %4004 = vmatpush1.msra.mxu0 %v3156
        %4005 = vmatprep.subr.mxu0 %v3159
        %4006 = vmatpush1.msra.mxu0 %v3158
        %4007 = vmatprep.subr.mxu0 %v3161
        %4008 = vmatpush1.msra.mxu0 %v3160
        %4009 = vmatprep.subr.mxu0 %v3163
        %4010 = vmatpush1.msra.mxu0 %v3162
        %4011 = vmatprep.subr.mxu0 %v3165
        %4012 = vmatpush1.msra.mxu0 %v3164
        %4013 = vmatprep.subr.mxu0 %v3167
        %4014 = vmatpush1.msra.mxu0 %v3166
        %4015 = vmatprep.subr.mxu0 %v3169
        %4016 = vmatpush1.msra.mxu0 %v3168
        %4017 = vmatprep.subr.mxu0 %v3171
        %4018 = vmatpush1.msra.mxu0 %v3170
        %4019 = vmatprep.subr.mxu0 %v3173
        %4020 = vmatpush1.msra.mxu0 %v3172
        %4021 = vmatprep.subr.mxu0 %v3175
        %4022 = vmatpush1.msra.mxu0 %v3174
        %4023 = vmatprep.subr.mxu0 %v3177
        %4024 = vmatpush1.msra.mxu0 %v3176
        %4025 = vmatprep.subr.mxu0 %v3179
        %4026 = vmatpush1.msra.mxu0 %v3178
        %4027 = vmatprep.subr.mxu0 %v3181
        %4028 = vmatpush1.msra.mxu0 %v3180
        %4029 = vmatprep.subr.mxu0 %v3183
        %4030 = vmatpush1.msra.mxu0 %v3182
        %4031 = vmatprep.subr.mxu0 %v3185
        %4032 = vmatpush1.msra.mxu0 %v3184
        %4033 = vmatprep.subr.mxu0 %v3187
        %4034 = vmatpush1.msra.mxu0 %v3186
        %4035 = vmatprep.subr.mxu0 %v3189
        %4036 = vmatpush1.msra.mxu0 %v3188
        %4037 = vmatprep.subr.mxu0 %v3191
        %4038 = vmatpush1.msra.mxu0 %v3190
        %4039 = vmatprep.subr.mxu0 %v3193
        %4040 = vmatpush1.msra.mxu0 %v3192
        %4041 = vmatprep.subr.mxu0 %v3195
        %4042 = vmatpush1.msra.mxu0 %v3194
        %4043 = vmatprep.subr.mxu0 %v3197
        %4044 = vmatpush1.msra.mxu0 %v3196
        %4045 = vmatprep.subr.mxu0 %v3199
        %4046 = vmatpush1.msra.mxu0 %v3198
        %4047 = vmatprep.subr.mxu0 %v3201
        %4048 = vmatpush1.msra.mxu0 %v3200
        %4049 = vmatprep.subr.mxu0 %v3203
        %4050 = vmatpush1.msra.mxu0 %v3202
        %4051 = vmatprep.subr.mxu0 %v3205
        %4052 = vmatpush1.msra.mxu0 %v3204
        %4053 = vmatprep.subr.mxu0 %v3207
        %4054 = vmatpush1.msra.mxu0 %v3206
        %4055 = vmatprep.subr.mxu0 %v3209
        %4056 = vmatpush1.msra.mxu0 %v3208
        %4057 = vmatprep.subr.mxu0 %v3211
        %4058 = vmatpush1.msra.mxu0 %v3210
        %4059 = vmatprep.subr.mxu0 %v3213
        %4060 = vmatpush1.msra.mxu0 %v3212
        %4061 = vmatprep.mubr.f32.mxu0 %v2709
        %4062 = vmatmul.mubr.f32.gmra.mrb[0].mxu0 %v2708
        %v4063 = vpop.f32.mrb[0].mxu0
        %v4064 = vadd.f32 %v3807, %v4063
        %v4065 = vpop.f32.mrb[0].mxu0
        %v4066 = vadd.f32 %v3809, %v4065
        %4067 = vmatprep.mubr.f32.mxu0 %v2717
        %4068 = vmatmul.mubr.f32.gmra.mrb[0].mxu0 %v2716
        %v4069 = vpop.f32.mrb[0].mxu0
        %v4070 = vadd.f32 %v3813, %v4069
        %v4071 = vpop.f32.mrb[0].mxu0
        %v4072 = vadd.f32 %v3815, %v4071
        %4073 = vmatprep.mubr.f32.mxu0 %v2725
        %4074 = vmatmul.mubr.f32.gmra.mrb[0].mxu0 %v2724
        %v4075 = vpop.f32.mrb[0].mxu0
        %v4076 = vadd.f32 %v3819, %v4075
        %v4077 = vpop.f32.mrb[0].mxu0
        %v4078 = vadd.f32 %v3821, %v4077
        %4079 = vmatprep.mubr.f32.mxu0 %v2733
        %4080 = vmatmul.mubr.f32.gmra.mrb[0].mxu0 %v2732
        %v4081 = vpop.f32.mrb[0].mxu0
        %v4082 = vadd.f32 %v3825, %v4081
        %v4083 = vpop.f32.mrb[0].mxu0
        %v4084 = vadd.f32 %v3827, %v4083
        %4085 = vmatprep.mubr.f32.mxu0 %v2741
        %4086 = vmatmul.mubr.f32.gmra.mrb[0].mxu0 %v2740
        %v4087 = vpop.f32.mrb[0].mxu0
        %v4088 = vadd.f32 %v3831, %v4087
        %v4089 = vpop.f32.mrb[0].mxu0
        %v4090 = vadd.f32 %v3833, %v4089
        %4091 = vmatprep.mubr.f32.mxu0 %v2749
        %4092 = vmatmul.mubr.f32.gmra.mrb[0].mxu0 %v2748
        %v4093 = vpop.f32.mrb[0].mxu0
        %v4094 = vadd.f32 %v3837, %v4093
        %v4095 = vpop.f32.mrb[0].mxu0
        %v4096 = vadd.f32 %v3839, %v4095
        %4097 = vmatprep.mubr.f32.mxu0 %v2757
        %4098 = vmatmul.mubr.f32.gmra.mrb[0].mxu0 %v2756
        %v4099 = vpop.f32.mrb[0].mxu0
        %v4100 = vadd.f32 %v3843, %v4099
        %v4101 = vpop.f32.mrb[0].mxu0
        %v4102 = vadd.f32 %v3845, %v4101
        %4103 = vmatprep.mubr.f32.mxu0 %v2765
        %4104 = vmatmul.mubr.f32.gmra.mrb[0].mxu0 %v2764
        %v4105 = vpop.f32.mrb[0].mxu0
        %v4106 = vadd.f32 %v3849, %v4105
        %v4107 = vpop.f32.mrb[0].mxu0
        %v4108 = vadd.f32 %v3851, %v4107
        %4109 = vmatprep.mubr.f32.mxu0 %v2773
        %4110 = vmatmul.mubr.f32.gmra.mrb[0].mxu0 %v2772
        %v4111 = vpop.f32.mrb[0].mxu0
        %v4112 = vadd.f32 %v3855, %v4111
        %v4113 = vpop.f32.mrb[0].mxu0
        %v4114 = vadd.f32 %v3857, %v4113
        %4115 = vmatprep.mubr.f32.mxu0 %v2781
        %4116 = vmatmul.mubr.f32.gmra.mrb[0].mxu0 %v2780
        %v4117 = vpop.f32.mrb[0].mxu0
        %v4118 = vadd.f32 %v3861, %v4117
        %v4119 = vpop.f32.mrb[0].mxu0
        %v4120 = vadd.f32 %v3863, %v4119
        %4121 = vmatprep.mubr.f32.mxu0 %v2789
        %4122 = vmatmul.mubr.f32.gmra.mrb[0].mxu0 %v2788
        %v4123 = vpop.f32.mrb[0].mxu0
        %v4124 = vadd.f32 %v3867, %v4123
        %v4125 = vpop.f32.mrb[0].mxu0
        %v4126 = vadd.f32 %v3869, %v4125
        %4127 = vmatprep.mubr.f32.mxu0 %v2797
        %4128 = vmatmul.mubr.f32.gmra.mrb[0].mxu0 %v2796
        %v4129 = vpop.f32.mrb[0].mxu0
        %v4130 = vadd.f32 %v3873, %v4129
        %v4131 = vpop.f32.mrb[0].mxu0
        %v4132 = vadd.f32 %v3875, %v4131
        %4133 = vmatprep.mubr.f32.mxu0 %v2805
        %4134 = vmatmul.mubr.f32.gmra.mrb[0].mxu0 %v2804
        %v4135 = vpop.f32.mrb[0].mxu0
        %v4136 = vadd.f32 %v3879, %v4135
        %v4137 = vpop.f32.mrb[0].mxu0
        %v4138 = vadd.f32 %v3881, %v4137
        %4139 = vmatprep.mubr.f32.mxu0 %v2813
        %4140 = vmatmul.mubr.f32.gmra.mrb[0].mxu0 %v2812
        %v4141 = vpop.f32.mrb[0].mxu0
        %v4142 = vadd.f32 %v3885, %v4141
        %v4143 = vpop.f32.mrb[0].mxu0
        %v4144 = vadd.f32 %v3887, %v4143
        %4145 = vmatprep.mubr.f32.mxu0 %v2821
        %4146 = vmatmul.mubr.f32.gmra.mrb[0].mxu0 %v2820
        %v4147 = vpop.f32.mrb[0].mxu0
        %v4148 = vadd.f32 %v3891, %v4147
        %v4149 = vpop.f32.mrb[0].mxu0
        %v4150 = vadd.f32 %v3893, %v4149
        %4151 = vmatprep.mubr.f32.mxu0 %v2829
        %4152 = vmatmul.mubr.f32.gmra.mrb[0].mxu0 %v2828
        %v4153 = vpop.f32.mrb[0].mxu0
        %v4154 = vadd.f32 %v3897, %v4153
        %v4155 = vpop.f32.mrb[0].mxu0
        %v4156 = vadd.f32 %v3899, %v4155
        %4157 = vmatprep.mubr.f32.mxu0 %v2837
        %4158 = vmatmul.mubr.f32.gmra.mrb[0].mxu0 %v2836
        %v4159 = vpop.f32.mrb[0].mxu0
        %v4160 = vadd.f32 %v3903, %v4159
        %v4161 = vpop.f32.mrb[0].mxu0
        %v4162 = vadd.f32 %v3905, %v4161
        %4163 = vmatprep.mubr.f32.mxu0 %v2845
        %4164 = vmatmul.mubr.f32.gmra.mrb[0].mxu0 %v2844
        %v4165 = vpop.f32.mrb[0].mxu0
        %v4166 = vadd.f32 %v3909, %v4165
        %v4167 = vpop.f32.mrb[0].mxu0
        %v4168 = vadd.f32 %v3911, %v4167
        %4169 = vmatprep.mubr.f32.mxu0 %v2853
        %4170 = vmatmul.mubr.f32.gmra.mrb[0].mxu0 %v2852
        %v4171 = vpop.f32.mrb[0].mxu0
        %v4172 = vadd.f32 %v3915, %v4171
        %v4173 = vpop.f32.mrb[0].mxu0
        %v4174 = vadd.f32 %v3917, %v4173
        %4175 = vmatprep.mubr.f32.mxu0 %v2861
        %4176 = vmatmul.mubr.f32.gmra.mrb[0].mxu0 %v2860
        %v4177 = vpop.f32.mrb[0].mxu0
        %v4178 = vadd.f32 %v3921, %v4177
        %v4179 = vpop.f32.mrb[0].mxu0
        %v4180 = vadd.f32 %v3923, %v4179
        %4181 = vmatprep.mubr.f32.mxu0 %v2869
        %4182 = vmatmul.mubr.f32.gmra.mrb[0].mxu0 %v2868
        %v4183 = vpop.f32.mrb[0].mxu0
        %v4184 = vadd.f32 %v3927, %v4183
        %v4185 = vpop.f32.mrb[0].mxu0
        %v4186 = vadd.f32 %v3929, %v4185
        %4187 = vmatprep.mubr.f32.mxu0 %v2877
        %4188 = vmatmul.mubr.f32.gmra.mrb[0].mxu0 %v2876
        %v4189 = vpop.f32.mrb[0].mxu0
        %v4190 = vadd.f32 %v3933, %v4189
        %v4191 = vpop.f32.mrb[0].mxu0
        %v4192 = vadd.f32 %v3935, %v4191
        %4193 = vmatprep.mubr.f32.mxu0 %v2885
        %4194 = vmatmul.mubr.f32.gmra.mrb[0].mxu0 %v2884
        %v4195 = vpop.f32.mrb[0].mxu0
        %v4196 = vadd.f32 %v3939, %v4195
        %v4197 = vpop.f32.mrb[0].mxu0
        %v4198 = vadd.f32 %v3941, %v4197
        %4199 = vmatprep.mubr.f32.mxu0 %v2893
        %4200 = vmatmul.mubr.f32.gmra.mrb[0].mxu0 %v2892
        %v4201 = vpop.f32.mrb[0].mxu0
        %v4202 = vadd.f32 %v3945, %v4201
        %v4203 = vpop.f32.mrb[0].mxu0
        %v4204 = vadd.f32 %v3947, %v4203
        %4205 = vmatprep.mubr.f32.mxu0 %v2901
        %4206 = vmatmul.mubr.f32.gmra.mrb[0].mxu0 %v2900
        %v4207 = vpop.f32.mrb[0].mxu0
        %v4208 = vadd.f32 %v3951, %v4207
        %v4209 = vpop.f32.mrb[0].mxu0
        %v4210 = vadd.f32 %v3953, %v4209
        %4211 = vmatprep.mubr.f32.mxu0 %v2909
        %4212 = vmatmul.mubr.f32.gmra.mrb[0].mxu0 %v2908
        %v4213 = vpop.f32.mrb[0].mxu0
        %v4214 = vadd.f32 %v3957, %v4213
        %v4215 = vpop.f32.mrb[0].mxu0
        %v4216 = vadd.f32 %v3959, %v4215
        %4217 = vmatprep.mubr.f32.mxu0 %v2917
        %4218 = vmatmul.mubr.f32.gmra.mrb[0].mxu0 %v2916
        %v4219 = vpop.f32.mrb[0].mxu0
        %v4220 = vadd.f32 %v3963, %v4219
        %v4221 = vpop.f32.mrb[0].mxu0
        %v4222 = vadd.f32 %v3965, %v4221
        %4223 = vmatprep.mubr.f32.mxu0 %v2925
        %4224 = vmatmul.mubr.f32.gmra.mrb[0].mxu0 %v2924
        %v4225 = vpop.f32.mrb[0].mxu0
        %v4226 = vadd.f32 %v3969, %v4225
        %v4227 = vpop.f32.mrb[0].mxu0
        %v4228 = vadd.f32 %v3971, %v4227
        %4229 = vmatprep.mubr.f32.mxu0 %v2933
        %4230 = vmatmul.mubr.f32.gmra.mrb[0].mxu0 %v2932
        %v4231 = vpop.f32.mrb[0].mxu0
        %v4232 = vadd.f32 %v3975, %v4231
        %v4233 = vpop.f32.mrb[0].mxu0
        %v4234 = vadd.f32 %v3977, %v4233
        %4235 = vmatprep.mubr.f32.mxu0 %v2941
        %4236 = vmatmul.mubr.f32.gmra.mrb[0].mxu0 %v2940
        %v4237 = vpop.f32.mrb[0].mxu0
        %v4238 = vadd.f32 %v3981, %v4237
        %v4239 = vpop.f32.mrb[0].mxu0
        %v4240 = vadd.f32 %v3983, %v4239
        %4241 = vmatprep.mubr.f32.mxu0 %v2949
        %4242 = vmatmul.mubr.f32.gmra.mrb[0].mxu0 %v2948
        %v4243 = vpop.f32.mrb[0].mxu0
        %v4244 = vadd.f32 %v3987, %v4243
        %v4245 = vpop.f32.mrb[0].mxu0
        %v4246 = vadd.f32 %v3989, %v4245
        %4247 = vmatprep.mubr.f32.mxu0 %v2957
        %4248 = vmatmul.mubr.f32.gmra.mrb[0].mxu0 %v2956
        %v4249 = vpop.f32.mrb[0].mxu0
        %v4250 = vadd.f32 %v3993, %v4249
        %v4251 = vpop.f32.mrb[0].mxu0
        %v4252 = vadd.f32 %v3995, %v4251
        %4253 = vdwg.mxu0
        %4254 = vst [vmem:[%s285] sm:$0xff] %v4064
        %4255 = vst [vmem:[%s285 + $0x8] sm:$0xff] %v4066
        %4256 = vst [vmem:[%s285 + $0x10] sm:$0xff] %v4070
        %4257 = vst [vmem:[%s285 + $0x18] sm:$0xff] %v4072
        %4258 = vst [vmem:[%s285 + $0x20] sm:$0xff] %v4076
        %4259 = vst [vmem:[%s285 + $0x28] sm:$0xff] %v4078
        %4260 = vst [vmem:[%s285 + $0x30] sm:$0xff] %v4082
        %4261 = vst [vmem:[%s285 + $0x38] sm:$0xff] %v4084
        %4262 = vst [vmem:[%s285 + $0x40] sm:$0xff] %v4088
        %4263 = vst [vmem:[%s285 + $0x48] sm:$0xff] %v4090
        %4264 = vst [vmem:[%s285 + $0x50] sm:$0xff] %v4094
        %4265 = vst [vmem:[%s285 + $0x58] sm:$0xff] %v4096
        %4266 = vst [vmem:[%s285 + $0x60] sm:$0xff] %v4100
        %4267 = vst [vmem:[%s285 + $0x68] sm:$0xff] %v4102
        %4268 = vst [vmem:[%s285 + $0x70] sm:$0xff] %v4106
        %4269 = vst [vmem:[%s285 + $0x78] sm:$0xff] %v4108
        %4270 = vst [vmem:[%s285 + $0x80] sm:$0xff] %v4112
        %4271 = vst [vmem:[%s285 + $0x88] sm:$0xff] %v4114
        %4272 = vst [vmem:[%s285 + $0x90] sm:$0xff] %v4118
        %4273 = vst [vmem:[%s285 + $0x98] sm:$0xff] %v4120
        %4274 = vst [vmem:[%s285 + $0xa0] sm:$0xff] %v4124
        %4275 = vst [vmem:[%s285 + $0xa8] sm:$0xff] %v4126
        %4276 = vst [vmem:[%s285 + $0xb0] sm:$0xff] %v4130
        %4277 = vst [vmem:[%s285 + $0xb8] sm:$0xff] %v4132
        %4278 = vst [vmem:[%s285 + $0xc0] sm:$0xff] %v4136
        %4279 = vst [vmem:[%s285 + $0xc8] sm:$0xff] %v4138
        %4280 = vst [vmem:[%s285 + $0xd0] sm:$0xff] %v4142
        %4281 = vst [vmem:[%s285 + $0xd8] sm:$0xff] %v4144
        %4282 = vst [vmem:[%s285 + $0xe0] sm:$0xff] %v4148
        %4283 = vst [vmem:[%s285 + $0xe8] sm:$0xff] %v4150
        %4284 = vst [vmem:[%s285 + $0xf0] sm:$0xff] %v4154
        %4285 = vst [vmem:[%s285 + $0xf8] sm:$0xff] %v4156
        %4286 = vst [vmem:[%s285 + $0x100] sm:$0xff] %v4160
        %4287 = vst [vmem:[%s285 + $0x108] sm:$0xff] %v4162
        %4288 = vst [vmem:[%s285 + $0x110] sm:$0xff] %v4166
        %4289 = vst [vmem:[%s285 + $0x118] sm:$0xff] %v4168
        %4290 = vst [vmem:[%s285 + $0x120] sm:$0xff] %v4172
        %4291 = vst [vmem:[%s285 + $0x128] sm:$0xff] %v4174
        %4292 = vst [vmem:[%s285 + $0x130] sm:$0xff] %v4178
        %4293 = vst [vmem:[%s285 + $0x138] sm:$0xff] %v4180
        %4294 = vst [vmem:[%s285 + $0x140] sm:$0xff] %v4184
        %4295 = vst [vmem:[%s285 + $0x148] sm:$0xff] %v4186
        %4296 = vst [vmem:[%s285 + $0x150] sm:$0xff] %v4190
        %4297 = vst [vmem:[%s285 + $0x158] sm:$0xff] %v4192
        %4298 = vst [vmem:[%s285 + $0x160] sm:$0xff] %v4196
        %4299 = vst [vmem:[%s285 + $0x168] sm:$0xff] %v4198
        %4300 = vst [vmem:[%s285 + $0x170] sm:$0xff] %v4202
        %4301 = vst [vmem:[%s285 + $0x178] sm:$0xff] %v4204
        %4302 = vst [vmem:[%s285 + $0x180] sm:$0xff] %v4208
        %4303 = vst [vmem:[%s285 + $0x188] sm:$0xff] %v4210
        %4304 = vst [vmem:[%s285 + $0x190] sm:$0xff] %v4214
        %4305 = vst [vmem:[%s285 + $0x198] sm:$0xff] %v4216
        %4306 = vst [vmem:[%s285 + $0x1a0] sm:$0xff] %v4220
        %4307 = vst [vmem:[%s285 + $0x1a8] sm:$0xff] %v4222
        %4308 = vst [vmem:[%s285 + $0x1b0] sm:$0xff] %v4226
        %4309 = vst [vmem:[%s285 + $0x1b8] sm:$0xff] %v4228
        %4310 = vst [vmem:[%s285 + $0x1c0] sm:$0xff] %v4232
        %4311 = vst [vmem:[%s285 + $0x1c8] sm:$0xff] %v4234
        %4312 = vst [vmem:[%s285 + $0x1d0] sm:$0xff] %v4238
        %4313 = vst [vmem:[%s285 + $0x1d8] sm:$0xff] %v4240
        %4314 = vst [vmem:[%s285 + $0x1e0] sm:$0xff] %v4244
        %4315 = vst [vmem:[%s285 + $0x1e8] sm:$0xff] %v4246
        %4316 = vst [vmem:[%s285 + $0x1f0] sm:$0xff] %v4250
        %4317 = vst [vmem:[%s285 + $0x1f8] sm:$0xff] %v4252
        %s4318 = sand.u32 %s142, 1
        %s4319 = scalar_lea.sflag [#allocation4], %s4318
        %s4320 = sand.u32 %s142, 1
        %s4321 = smul.addr %s4320, 512
        %s4322 = scalar_lea.vmem [#allocation10], %s4321
        // Predicated region
        $region57: #{tpu_custom_call.1} parent=39 // pred_check
          %p4323 = pneg %p152
        $region58: #{tpu_custom_call.1} parent=39 // pred_check_branch
          %4325 = sbr.rel (%p4323) target = $region60
        $region59: #{tpu_custom_call.1} parent=39 // pred_region
          %s4326 = smul.u32 32, %s24
          %s4328 = ssub.s32 8192, 8192
          %4329 = vsyncadd %s4319, %s4328
          %s4330 = smul.addr %s4326, 2
          %s4331 = smul.addr %s4330, 128
          %s4332 = scalar_lea.hbm %s5, %s4331
          %s4333 = sshll.u32 %s4322, 4
          %s4334 = int_to_ptr.vmem [resolvable:$true] %s4333
          %4339 = dma.vmem_to_hbm [thread:$0]  %s4334, 8192, %s4332, %s4319, 256, 256, 16
        $region60: #{tpu_custom_call.1} parent=39 // pred_fallthru
          _
      $region40: #{tpu_custom_call.1} parent=5 // pred_fallthru
        _
      %p4340 = scmp.le.s32.totalorder 2, %s19
      // Predicated region
      $region61: #{tpu_custom_call.1} parent=5 // pred_check
        %p4341 = pneg %p4340
      $region62: #{tpu_custom_call.1} parent=5 // pred_check_branch
        %4343 = sbr.rel (%p4341) target = $region64
      $region63: #{tpu_custom_call.1} parent=5 // pred_region
        %s4344 = ssub.s32 %s19, 2
        // Predicated region
        $region65: #{tpu_custom_call.1} parent=63 // pred_check
          %p4345 = pneg %p158
        $region66: #{tpu_custom_call.1} parent=63 // pred_check_branch
          %4347 = sbr.rel (%p4345) target = $region68
        $region67: #{tpu_custom_call.1} parent=63 // pred_region
          %s4348 = sand.u32 %s143, 1
          %s4349 = scalar_lea.sflag [#allocation4], %s4348
          %s4350 = sand.u32 %s143, 1
          %s4351 = smul.addr %s4350, 512
          %s4352 = scalar_lea.vmem [#allocation10], %s4351
          %4353 = dma.done %s4349, 8192
        $region68: #{tpu_custom_call.1} parent=63 // pred_fallthru
          _
      $region64: #{tpu_custom_call.1} parent=5 // pred_fallthru
        _
    $region6: #{tpu_custom_call.1} parent=1 // loop_footer
      %s23 = sadd.s32 1, %s19
    $region7: #{tpu_custom_call.1} parent=1 // loop_footer_branch
      %18 = sbr.rel target = $region3
    $region8: #{tpu_custom_call.1} parent=1 // loop_exit
      _
    %4354 = vsyncpa [#allocation3], 1
    %s4355 = scalar_lea.sflag [#allocation3], 1
    %4356 = vsyncpa %s4355, 1
    %4357 = vsyncpa [#allocation6], 1
    %4358 = vsyncpa [#allocation9], 1
    %4359 = vsyncpa [#allocation4], 1
    %s4360 = scalar_lea.sflag [#allocation4], 1
    %4361 = vsyncpa %s4360, 1

</llo_original>
